<compile_context>
chip_gen: v6e
topology: v6e:2x2x1
jax: 0.10.0
libtpu: 0.0.40
codegen_flags: <defaults>
</compile_context>

<pallas_src>
import jax
import jax.numpy as jnp
from jax.experimental import pallas as pl
from jax.experimental.pallas import tpu as pltpu

DIM = 8
EPS = 1e-5
_INV_SQRT2 = 0.7071067811865476


# ----------------------------------------------------------------------------
# in-kernel helpers (channels-first: activations are (C, N) tiles)
# ----------------------------------------------------------------------------
def _erf_poly(x):
    # Abramowitz & Stegun 7.1.26, |abs err| < 1.5e-7 (effectively exact in f32).
    # TODO(synk): switch to jax.lax.erf if a Mosaic erf lowering is guaranteed.
    a1, a2, a3, a4, a5 = 0.254829592, -0.284496736, 1.421413741, -1.453152027, 1.061405429
    p = 0.3275911
    ax = jnp.abs(x)
    t = 1.0 / (1.0 + p * ax)
    poly = ((((a5 * t + a4) * t + a3) * t + a2) * t + a1) * t
    y = 1.0 - poly * jnp.exp(-ax * ax)
    return jnp.where(x >= 0.0, y, -y)


def _ln_cf(v, g, b):
    # LayerNorm over the channel axis (axis 0) of a channels-first (C, N) tile.
    mu = jnp.mean(v, axis=0, keepdims=True)
    d = v - mu
    var = jnp.mean(d * d, axis=0, keepdims=True)
    return d * jax.lax.rsqrt(var + EPS) * g + b


def _conv3x3_cf(xn, w_all, cb, mask, W):
    # 3x3 same-padding conv in token space, channels-first (C, N), n = h*W + w.
    # Token shifts are pltpu.roll lane rotations (XLU); boundary validity is a
    # precomputed grid-invariant (9C, N) mask; the 9 taps stack on sublane
    # groups and contract with ONE (C, 9C) x (9C, N) matmul.
    C, N = xn.shape
    taps = []
    for dy in range(3):
        for dx in range(3):
            off = (dy - 1) * W + (dx - 1)
            taps.append(xn if off == 0 else pltpu.roll(xn, shift=(-off) % N, axis=1))
    stacked = jnp.concatenate(taps, axis=0) * mask                    # (9C, N)
    return jnp.dot(w_all, stacked, preferred_element_type=jnp.float32) + cb


def _branch_cf(xn, ffr, ffi, fir, fii, wr, wi,
               g2, be2, g3, be3,
               w1t, bb1, w2t, bb2,
               w_all, cb, mask, W):
    # xn: norm1(x) channels-first (C, N).
    # Spectral filter: factored real DFT -> per-channel complex scale -> IDFT.
    sr = jnp.dot(xn, ffr, preferred_element_type=jnp.float32)         # (C, K)
    si = jnp.dot(xn, ffi, preferred_element_type=jnp.float32)         # (C, K)
    rr = sr * wr - si * wi                                            # complex scale
    ii = sr * wi + si * wr
    xf = (jnp.dot(rr, fir, preferred_element_type=jnp.float32)
          + jnp.dot(ii, fii, preferred_element_type=jnp.float32))     # (C, N)

    xf = _ln_cf(xf, g2, be2)                                          # norm2

    # MLP: Linear -> exact GELU -> Linear (channels-first, lane-dense).
    h = jnp.dot(w1t, xf, preferred_element_type=jnp.float32) + bb1    # (hid, N)
    h = 0.5 * h * (1.0 + _erf_poly(h * _INV_SQRT2))
    xm = jnp.dot(w2t, h, preferred_element_type=jnp.float32) + bb2    # (C, N)

    # conv3x3(norm1(x)) + mlp path, then norm + relu.
    res = _conv3x3_cf(xn, w_all, cb, mask, W) + xm
    return jnp.maximum(_ln_cf(res, g3, be3), 0.0)


# ----------------------------------------------------------------------------
# Pallas kernel: both SGBlock branches for one batch element, channels-first
# ----------------------------------------------------------------------------
def _sg_block_kernel(xz_ref,
                     ffr_x_ref, ffi_x_ref, fir_x_ref, fii_x_ref, wr_x_ref, wi_x_ref,
                     ffr_z_ref, ffi_z_ref, fir_z_ref, fii_z_ref, wr_z_ref, wi_z_ref,
                     g1_ref, be1_ref, g2_ref, be2_ref,
                     g3_ref, be3_ref, g4_ref, be4_ref,
                     w1x_ref, b1x_ref, w2x_ref, b2x_ref,
                     w1z_ref, b1z_ref, w2z_ref, b2z_ref,
                     wax_ref, cbx_ref, waz_ref, cbz_ref,
                     mx_ref, mz_ref,
                     o_ref):
    xz = xz_ref[0]                                                     # (C, 320)
    g2, be2 = g2_ref[...], be2_ref[...]

    # norm1 is shared by both branches and is per-token -> do all 320 at once.
    xn_all = _ln_cf(xz, g1_ref[...], be1_ref[...])
    z_n = xn_all[:, 0:64]                                              # 8x8 template
    x_n = xn_all[:, 64:320]                                            # 16x16 search

    x_out = _branch_cf(
        x_n, ffr_x_ref[...], ffi_x_ref[...], fir_x_ref[...], fii_x_ref[...],
        wr_x_ref[...], wi_x_ref[...], g2, be2, g3_ref[...], be3_ref[...],
        w1x_ref[...], b1x_ref[...], w2x_ref[...], b2x_ref[...],
        wax_ref[...], cbx_ref[...], mx_ref[...], 16)
    z_out = _branch_cf(
        z_n, ffr_z_ref[...], ffi_z_ref[...], fir_z_ref[...], fii_z_ref[...],
        wr_z_ref[...], wi_z_ref[...], g2, be2, g4_ref[...], be4_ref[...],
        w1z_ref[...], b1z_ref[...], w2z_ref[...], b2z_ref[...],
        waz_ref[...], cbz_ref[...], mz_ref[...], 8)

    # final token order of the module output: z first, then x.
    o_ref[0] = jnp.concatenate([z_out, x_out], axis=1)                 # (C, 320)


def _sg_block_pallas(x_cf, P):
    B, C, NT = x_cf.shape

    params = (P['ffr_x'], P['ffi_x'], P['fir_x'], P['fii_x'], P['wr_x'], P['wi_x'],
              P['ffr_z'], P['ffi_z'], P['fir_z'], P['fii_z'], P['wr_z'], P['wi_z'],
              P['g1c'], P['be1c'], P['g2c'], P['be2c'],
              P['g3c'], P['be3c'], P['g4c'], P['be4c'],
              P['w1x_t'], P['b1x_c'], P['w2x_t'], P['b2x_c'],
              P['w1z_t'], P['b1z_c'], P['w2z_t'], P['b2z_c'],
              P['wall_x'], P['cbx_c'], P['wall_z'], P['cbz_c'],
              P['mask_x'], P['mask_z'])

    def fullspec(a):
        # Grid-invariant operand: constant index map -> fetched once and kept
        # VMEM-resident across the batch grid (~0.8 MiB total).
        return pl.BlockSpec(a.shape, lambda b, n=a.ndim: (0,) * n)

    in_specs = ([pl.BlockSpec((1, C, NT), lambda b: (b, 0, 0))]
                + [fullspec(a) for a in params])
    out_specs = pl.BlockSpec((1, C, NT), lambda b: (b, 0, 0))
    out_shape = jax.ShapeDtypeStruct((B, C, NT), jnp.float32)

    return pl.pallas_call(
        _sg_block_kernel,
        out_shape=out_shape,
        grid_spec=pltpu.PrefetchScalarGridSpec(
            num_scalar_prefetch=0,
            grid=(B,),
            in_specs=in_specs,
            out_specs=out_specs,
        ),
        compiler_params=pltpu.CompilerParams(
            dimension_semantics=("parallel",)),   # v7x: shard batch over 2 TCs
    )(x_cf, *params)


def sg_block_forward(x, P):
    # x: (B, 320, C) tokens channel-last; tokens 0:64 = z (8x8), 64:320 = x (16x16).
    # Exactly one layout HLO on each side of the fused kernel.
    x_cf = jnp.transpose(x, (0, 2, 1))                 # (B, C, 320)
    out_cf = _sg_block_pallas(x_cf, P)                 # (B, C, 320), z-first tokens
    return jnp.transpose(out_cf, (0, 2, 1))            # (B, 320, C)


# ----------------------------------------------------------------------------
# build-time (parameter-only) operator folding -- no data dependence
# ----------------------------------------------------------------------------
def build_dft_factors(H, W):
    """Factored real operators for irfft2(rfft2(.) * Wc):
       Ffwd_r/Ffwd_i: (N, K) token -> Re/Im of rfft2 (after the permute layout),
       Finv_r/Finv_i: (K, N) Re/Im of the half spectrum -> output tokens.
       K = W * (H//2 + 1); all channel-independent (the per-channel complex
       weight is applied as an elementwise scale between the two matmuls)."""
    N = H * W
    Hf = H // 2 + 1
    K = W * Hf
    eye = jnp.eye(N, dtype=jnp.float32).reshape(N, H, W)      # token basis (h, w)
    g = jnp.transpose(eye, (0, 2, 1))                         # (N, W, H) permute
    gf = jnp.fft.rfft2(g, axes=(1, 2), norm='ortho').reshape(N, K)
    ffwd_r = jnp.real(gf).astype(jnp.float32)
    ffwd_i = jnp.imag(gf).astype(jnp.float32)
    eyek = jnp.eye(K, dtype=jnp.float32).reshape(K, W, Hf)
    yr = jnp.fft.irfft2(eyek.astype(jnp.complex64), s=(W, H), axes=(1, 2), norm='ortho')
    yi = jnp.fft.irfft2((1j * eyek).astype(jnp.complex64), s=(W, H), axes=(1, 2), norm='ortho')
    finv_r = jnp.transpose(yr, (0, 2, 1)).reshape(K, N).astype(jnp.float32)
    finv_i = jnp.transpose(yi, (0, 2, 1)).reshape(K, N).astype(jnp.float32)
    return ffwd_r, ffwd_i, finv_r, finv_i


def complex_weight_cf(cw):
    """(W, Hf, C, 2) -> per-channel (C, K) real / imag scale, K index = w*Hf + hf."""
    C = cw.shape[2]
    wr = jnp.transpose(cw[..., 0], (2, 0, 1)).reshape(C, -1).astype(jnp.float32)
    wi = jnp.transpose(cw[..., 1], (2, 0, 1)).reshape(C, -1).astype(jnp.float32)
    return wr, wi


def conv_weight_cat(conv_w):
    """(C_out, C_in, 3, 3) -> (C_out, 9*C_in); column order (dy*3+dx)*C_in + c_in."""
    C = conv_w.shape[0]
    return jnp.transpose(conv_w, (0, 2, 3, 1)).reshape(C, 9 * C)


def build_conv_masks(H, W, C):
    """(9*C, N) f32 validity mask, row order (dy*3+dx)*C + c, for same-padding 3x3."""
    N = H * W
    n = jnp.arange(N)
    hh = n // W
    ww = n - hh * W
    rows = []
    for dy in range(3):
        for dx in range(3):
            sh = hh + (dy - 1)
            sw = ww + (dx - 1)
            valid = ((sh >= 0) & (sh < H) & (sw >= 0) & (sw < W)).astype(jnp.float32)
            rows.append(jnp.tile(valid[None, :], (C, 1)))
    return jnp.concatenate(rows, axis=0)


# ----------------------------------------------------------------------------
# pure-JAX reference (channels-last, real FFT + lax.conv)
# ----------------------------------------------------------------------------
def _layernorm_last(v, g, b):
    mu = jnp.mean(v, axis=-1, keepdims=True)
    d = v - mu
    var = jnp.mean(d * d, axis=-1, keepdims=True)
    return d * jax.lax.rsqrt(var + EPS) * g + b


def _token2patch(t, H, W):
    B, N, C = t.shape
    return jnp.transpose(t, (0, 2, 1)).reshape(B, C, H, W)


def _patch2token(p):
    B, C, H, W = p.shape
    return jnp.transpose(p.reshape(B, C, H * W), (0, 2, 1))


def _branch_reference(x_tok, H, W, cw, ln1, ln2, ln3, mlp_w, conv_w, conv_b):
    g1, be1 = ln1
    g2, be2 = ln2
    g3, be3 = ln3
    w1, bb1, w2, bb2 = mlp_w
    xn = _layernorm_last(x_tok, g1, be1)
    xp = _token2patch(xn, H, W)
    xperm = jnp.transpose(xp, (0, 3, 2, 1))                  # (B, W, H, C)
    wfc = cw[..., 0] + 1j * cw[..., 1]
    xfft = jnp.fft.rfft2(xperm, axes=(1, 2), norm='ortho') * wfc
    xi = jnp.fft.irfft2(xfft, s=(W, H), axes=(1, 2), norm='ortho')
    xt = _patch2token(jnp.transpose(xi, (0, 3, 2, 1)))
    xt = _layernorm_last(xt, g2, be2)
    h = jax.nn.gelu(xt @ w1 + bb1, approximate=False)
    xm = h @ w2 + bb2
    conv = jax.lax.conv_general_dilated(
        _token2patch(xn, H, W), conv_w, window_strides=(1, 1), padding='SAME',
        dimension_numbers=('NCHW', 'OIHW', 'NCHW')) + conv_b[None, :, None, None]
    res = _patch2token(conv + _token2patch(xm, H, W))
    res = _layernorm_last(res, g3, be3)
    return jnp.maximum(res, 0.0)


def sg_block_reference(x, P):
    z_tok = x[:, 0:64, :]
    x_tok = x[:, 64:, :]
    x1 = _branch_reference(x_tok, 16, 16, P['cw_x'],
                           (P['g1'], P['be1']), (P['g2'], P['be2']), (P['g3'], P['be3']),
                           (P['w1x'], P['b1x'], P['w2x'], P['b2x']),
                           P['convw_x'], P['convb_x'])
    z1 = _branch_reference(z_tok, 8, 8, P['cw_z'],
                           (P['g1'], P['be1']), (P['g2'], P['be2']), (P['g4'], P['be4']),
                           (P['w1z'], P['b1z'], P['w2z'], P['b2z']),
                           P['convw_z'], P['convb_z'])
    return jnp.concatenate([z1, x1], axis=1)


# ----------------------------------------------------------------------------
if __name__ == "__main__":
    B, dim, hidden = 2, DIM, 4 * DIM
    key = jax.random.PRNGKey(0)
    ks = jax.random.split(key, 24)

    def rn(k, shape, scale=1.0):
        return scale * jax.random.normal(k, shape, dtype=jnp.float32)

    P = {
        # layernorm affine params (norm1..norm4)
        'g1': 1.0 + 0.1 * rn(ks[0], (1, dim)), 'be1': 0.1 * rn(ks[1], (1, dim)),
        'g2': 1.0 + 0.1 * rn(ks[2], (1, dim)), 'be2': 0.1 * rn(ks[3], (1, dim)),
        'g3': 1.0 + 0.1 * rn(ks[4], (1, dim)), 'be3': 0.1 * rn(ks[5], (1, dim)),
        'g4': 1.0 + 0.1 * rn(ks[6], (1, dim)), 'be4': 0.1 * rn(ks[7], (1, dim)),
        # conv3x3 / conv3x3_2
        'convw_x': rn(ks[8], (dim, dim, 3, 3), 0.1), 'convb_x': rn(ks[9], (dim,), 0.1),
        'convw_z': rn(ks[10], (dim, dim, 3, 3), 0.1), 'convb_z': rn(ks[11], (dim,), 0.1),
        # mlp / mlp2
        'w1x': rn(ks[12], (dim, hidden), 0.2), 'b1x': rn(ks[13], (1, hidden), 0.1),
        'w2x': rn(ks[14], (hidden, dim), 0.2), 'b2x': rn(ks[15], (1, dim), 0.1),
        'w1z': rn(ks[16], (dim, hidden), 0.2), 'b1z': rn(ks[17], (1, hidden), 0.1),
        'w2z': rn(ks[18], (hidden, dim), 0.2), 'b2z': rn(ks[19], (1, dim), 0.1),
        # complex spectral weights (as in __init__: randn * 0.02, last dim = re/im)
        'cw_x': 0.02 * rn(ks[20], (16, 16 // 2 + 1, dim, 2)),
        'cw_z': 0.02 * rn(ks[21], (8, 8 // 2 + 1, dim, 2)),
    }

    # derived operators / channels-first parameter views consumed by the kernel
    P['ffr_x'], P['ffi_x'], P['fir_x'], P['fii_x'] = build_dft_factors(16, 16)
    P['ffr_z'], P['ffi_z'], P['fir_z'], P['fii_z'] = build_dft_factors(8, 8)
    P['wr_x'], P['wi_x'] = complex_weight_cf(P['cw_x'])     # (8, 144)
    P['wr_z'], P['wi_z'] = complex_weight_cf(P['cw_z'])     # (8, 40)
    P['wall_x'] = conv_weight_cat(P['convw_x'])             # (8, 72)
    P['wall_z'] = conv_weight_cat(P['convw_z'])
    P['mask_x'] = build_conv_masks(16, 16, dim)             # (72, 256)
    P['mask_z'] = build_conv_masks(8, 8, dim)                # (72, 64)
    P['cbx_c'] = P['convb_x'].reshape(dim, 1)
    P['cbz_c'] = P['convb_z'].reshape(dim, 1)
    for nm in ('g1', 'be1', 'g2', 'be2', 'g3', 'be3', 'g4', 'be4'):
        P[nm + 'c'] = P[nm].reshape(dim, 1)
    P['w1x_t'] = P['w1x'].T
    P['b1x_c'] = P['b1x'].reshape(hidden, 1)
    P['w2x_t'] = P['w2x'].T
    P['b2x_c'] = P['b2x'].reshape(dim, 1)
    P['w1z_t'] = P['w1z'].T
    P['b1z_c'] = P['b1z'].reshape(hidden, 1)
    P['w2z_t'] = P['w2z'].T
    P['b2z_c'] = P['b2z'].reshape(dim, 1)

    # input tokens: 64 template tokens + 256 search tokens, channel dim = 8
    x = rn(ks[22], (B, 320, dim))

    out = jax.block_until_ready(sg_block_forward(x, P))
    ref = jax.block_until_ready(sg_block_reference(x, P))

    assert out.shape == (B, 320, dim), out.shape
    max_err = float(jnp.max(jnp.abs(out - ref)))
    assert max_err < 2e-3, f"mismatch vs reference: max_err={max_err}"
    print("KERNEL_OK")
</pallas_src>

<mosaic_0001>
module attributes {stable_mosaic.version = 11 : i64} {
  func.func @_sg_block_kernel(%arg0: i32, %arg1: memref<1x8x320xf32, #tpu.memory_space<vmem>>, %arg2: memref<256x144xf32, #tpu.memory_space<vmem>>, %arg3: memref<256x144xf32, #tpu.memory_space<vmem>>, %arg4: memref<144x256xf32, #tpu.memory_space<vmem>>, %arg5: memref<144x256xf32, #tpu.memory_space<vmem>>, %arg6: memref<8x144xf32, #tpu.memory_space<vmem>>, %arg7: memref<8x144xf32, #tpu.memory_space<vmem>>, %arg8: memref<64x40xf32, #tpu.memory_space<vmem>>, %arg9: memref<64x40xf32, #tpu.memory_space<vmem>>, %arg10: memref<40x64xf32, #tpu.memory_space<vmem>>, %arg11: memref<40x64xf32, #tpu.memory_space<vmem>>, %arg12: memref<8x40xf32, #tpu.memory_space<vmem>>, %arg13: memref<8x40xf32, #tpu.memory_space<vmem>>, %arg14: memref<8x1xf32, #tpu.memory_space<vmem>>, %arg15: memref<8x1xf32, #tpu.memory_space<vmem>>, %arg16: memref<8x1xf32, #tpu.memory_space<vmem>>, %arg17: memref<8x1xf32, #tpu.memory_space<vmem>>, %arg18: memref<8x1xf32, #tpu.memory_space<vmem>>, %arg19: memref<8x1xf32, #tpu.memory_space<vmem>>, %arg20: memref<8x1xf32, #tpu.memory_space<vmem>>, %arg21: memref<8x1xf32, #tpu.memory_space<vmem>>, %arg22: memref<32x8xf32, #tpu.memory_space<vmem>>, %arg23: memref<32x1xf32, #tpu.memory_space<vmem>>, %arg24: memref<8x32xf32, #tpu.memory_space<vmem>>, %arg25: memref<8x1xf32, #tpu.memory_space<vmem>>, %arg26: memref<32x8xf32, #tpu.memory_space<vmem>>, %arg27: memref<32x1xf32, #tpu.memory_space<vmem>>, %arg28: memref<8x32xf32, #tpu.memory_space<vmem>>, %arg29: memref<8x1xf32, #tpu.memory_space<vmem>>, %arg30: memref<8x72xf32, #tpu.memory_space<vmem>>, %arg31: memref<8x1xf32, #tpu.memory_space<vmem>>, %arg32: memref<8x72xf32, #tpu.memory_space<vmem>>, %arg33: memref<8x1xf32, #tpu.memory_space<vmem>>, %arg34: memref<72x256xf32, #tpu.memory_space<vmem>>, %arg35: memref<72x64xf32, #tpu.memory_space<vmem>>, %arg36: memref<1x8x320xf32, #tpu.memory_space<vmem>>) attributes {dimension_semantics = [#tpu.dimension_semantics<parallel>], iteration_bounds = array<i64: 2>, scalar_prefetch = 0 : i64, scratch_operands = 0 : i64, tpu.core_type = #tpu.core_type<tc>, window_params = [{transform_indices = @transform_0, window_bounds = array<i64: 1, 8, 320>}, {pipeline_mode = #tpu.pipeline_mode<synchronous>, transform_indices = @transform_1, window_bounds = array<i64: 256, 144>}, {pipeline_mode = #tpu.pipeline_mode<synchronous>, transform_indices = @transform_2, window_bounds = array<i64: 256, 144>}, {pipeline_mode = #tpu.pipeline_mode<synchronous>, transform_indices = @transform_3, window_bounds = array<i64: 144, 256>}, {pipeline_mode = #tpu.pipeline_mode<synchronous>, transform_indices = @transform_4, window_bounds = array<i64: 144, 256>}, {pipeline_mode = #tpu.pipeline_mode<synchronous>, transform_indices = @transform_5, window_bounds = array<i64: 8, 144>}, {pipeline_mode = #tpu.pipeline_mode<synchronous>, transform_indices = @transform_6, window_bounds = array<i64: 8, 144>}, {pipeline_mode = #tpu.pipeline_mode<synchronous>, transform_indices = @transform_7, window_bounds = array<i64: 64, 40>}, {pipeline_mode = #tpu.pipeline_mode<synchronous>, transform_indices = @transform_8, window_bounds = array<i64: 64, 40>}, {pipeline_mode = #tpu.pipeline_mode<synchronous>, transform_indices = @transform_9, window_bounds = array<i64: 40, 64>}, {pipeline_mode = #tpu.pipeline_mode<synchronous>, transform_indices = @transform_10, window_bounds = array<i64: 40, 64>}, {pipeline_mode = #tpu.pipeline_mode<synchronous>, transform_indices = @transform_11, window_bounds = array<i64: 8, 40>}, {pipeline_mode = #tpu.pipeline_mode<synchronous>, transform_indices = @transform_12, window_bounds = array<i64: 8, 40>}, {pipeline_mode = #tpu.pipeline_mode<synchronous>, transform_indices = @transform_13, window_bounds = array<i64: 8, 1>}, {pipeline_mode = #tpu.pipeline_mode<synchronous>, transform_indices = @transform_14, window_bounds = array<i64: 8, 1>}, {pipeline_mode = #tpu.pipeline_mode<synchronous>, transform_indices = @transform_15, window_bounds = array<i64: 8, 1>}, {pipeline_mode = #tpu.pipeline_mode<synchronous>, transform_indices = @transform_16, window_bounds = array<i64: 8, 1>}, {pipeline_mode = #tpu.pipeline_mode<synchronous>, transform_indices = @transform_17, window_bounds = array<i64: 8, 1>}, {pipeline_mode = #tpu.pipeline_mode<synchronous>, transform_indices = @transform_18, window_bounds = array<i64: 8, 1>}, {pipeline_mode = #tpu.pipeline_mode<synchronous>, transform_indices = @transform_19, window_bounds = array<i64: 8, 1>}, {pipeline_mode = #tpu.pipeline_mode<synchronous>, transform_indices = @transform_20, window_bounds = array<i64: 8, 1>}, {pipeline_mode = #tpu.pipeline_mode<synchronous>, transform_indices = @transform_21, window_bounds = array<i64: 32, 8>}, {pipeline_mode = #tpu.pipeline_mode<synchronous>, transform_indices = @transform_22, window_bounds = array<i64: 32, 1>}, {pipeline_mode = #tpu.pipeline_mode<synchronous>, transform_indices = @transform_23, window_bounds = array<i64: 8, 32>}, {pipeline_mode = #tpu.pipeline_mode<synchronous>, transform_indices = @transform_24, window_bounds = array<i64: 8, 1>}, {pipeline_mode = #tpu.pipeline_mode<synchronous>, transform_indices = @transform_25, window_bounds = array<i64: 32, 8>}, {pipeline_mode = #tpu.pipeline_mode<synchronous>, transform_indices = @transform_26, window_bounds = array<i64: 32, 1>}, {pipeline_mode = #tpu.pipeline_mode<synchronous>, transform_indices = @transform_27, window_bounds = array<i64: 8, 32>}, {pipeline_mode = #tpu.pipeline_mode<synchronous>, transform_indices = @transform_28, window_bounds = array<i64: 8, 1>}, {pipeline_mode = #tpu.pipeline_mode<synchronous>, transform_indices = @transform_29, window_bounds = array<i64: 8, 72>}, {pipeline_mode = #tpu.pipeline_mode<synchronous>, transform_indices = @transform_30, window_bounds = array<i64: 8, 1>}, {pipeline_mode = #tpu.pipeline_mode<synchronous>, transform_indices = @transform_31, window_bounds = array<i64: 8, 72>}, {pipeline_mode = #tpu.pipeline_mode<synchronous>, transform_indices = @transform_32, window_bounds = array<i64: 8, 1>}, {pipeline_mode = #tpu.pipeline_mode<synchronous>, transform_indices = @transform_33, window_bounds = array<i64: 72, 256>}, {pipeline_mode = #tpu.pipeline_mode<synchronous>, transform_indices = @transform_34, window_bounds = array<i64: 72, 64>}, {transform_indices = @transform_35, window_bounds = array<i64: 1, 8, 320>}]} {
    %c0 = arith.constant 0 : index
    %c0_0 = arith.constant 0 : index
    %c0_1 = arith.constant 0 : index
    %0 = vector.load %arg1[%c0, %c0_0, %c0_1] : memref<1x8x320xf32, #tpu.memory_space<vmem>>, vector<1x8x320xf32>
    %1 = vector.shape_cast %0 : vector<1x8x320xf32> to vector<8x320xf32>
    %c0_2 = arith.constant 0 : index
    %c0_3 = arith.constant 0 : index
    %2 = vector.load %arg16[%c0_2, %c0_3] : memref<8x1xf32, #tpu.memory_space<vmem>>, vector<8x1xf32>
    %c0_4 = arith.constant 0 : index
    %c0_5 = arith.constant 0 : index
    %3 = vector.load %arg17[%c0_4, %c0_5] : memref<8x1xf32, #tpu.memory_space<vmem>>, vector<8x1xf32>
    %c0_6 = arith.constant 0 : index
    %c0_7 = arith.constant 0 : index
    %4 = vector.load %arg14[%c0_6, %c0_7] : memref<8x1xf32, #tpu.memory_space<vmem>>, vector<8x1xf32>
    %c0_8 = arith.constant 0 : index
    %c0_9 = arith.constant 0 : index
    %5 = vector.load %arg15[%c0_8, %c0_9] : memref<8x1xf32, #tpu.memory_space<vmem>>, vector<8x1xf32>
    %cst = arith.constant dense<0.000000e+00> : vector<320xf32>
    %6 = vector.multi_reduction <add>, %1, %cst [0] : vector<8x320xf32> to vector<320xf32>
    %7 = vector.shape_cast %6 : vector<320xf32> to vector<1x320xf32>
    %cst_10 = arith.constant 8.000000e+00 : f32
    %8 = vector.broadcast %cst_10 : f32 to vector<1x320xf32>
    %9 = arith.divf %7, %8 : vector<1x320xf32>
    %10 = vector.broadcast %9 : vector<1x320xf32> to vector<8x320xf32>
    %11 = arith.subf %1, %10 : vector<8x320xf32>
    %12 = arith.mulf %11, %11 : vector<8x320xf32>
    %cst_11 = arith.constant dense<0.000000e+00> : vector<320xf32>
    %13 = vector.multi_reduction <add>, %12, %cst_11 [0] : vector<8x320xf32> to vector<320xf32>
    %14 = vector.shape_cast %13 : vector<320xf32> to vector<1x320xf32>
    %cst_12 = arith.constant 8.000000e+00 : f32
    %15 = vector.broadcast %cst_12 : f32 to vector<1x320xf32>
    %16 = arith.divf %14, %15 : vector<1x320xf32>
    %cst_13 = arith.constant 9.99999974E-6 : f32
    %17 = vector.broadcast %cst_13 : f32 to vector<1x320xf32>
    %18 = arith.addf %16, %17 : vector<1x320xf32>
    %19 = math.rsqrt %18 : vector<1x320xf32>
    %20 = vector.broadcast %19 : vector<1x320xf32> to vector<8x320xf32>
    %21 = arith.mulf %11, %20 : vector<8x320xf32>
    %22 = vector.broadcast %4 : vector<8x1xf32> to vector<8x320xf32>
    %23 = arith.mulf %21, %22 : vector<8x320xf32>
    %24 = vector.broadcast %5 : vector<8x1xf32> to vector<8x320xf32>
    %25 = arith.addf %23, %24 : vector<8x320xf32>
    %26 = vector.extract_strided_slice %25 {offsets = [0, 0], sizes = [8, 64], strides = [1, 1]} : vector<8x320xf32> to vector<8x64xf32>
    %27 = vector.extract_strided_slice %25 {offsets = [0, 64], sizes = [8, 256], strides = [1, 1]} : vector<8x320xf32> to vector<8x256xf32>
    %c0_14 = arith.constant 0 : index
    %c0_15 = arith.constant 0 : index
    %28 = vector.load %arg2[%c0_14, %c0_15] : memref<256x144xf32, #tpu.memory_space<vmem>>, vector<256x144xf32>
    %c0_16 = arith.constant 0 : index
    %c0_17 = arith.constant 0 : index
    %29 = vector.load %arg3[%c0_16, %c0_17] : memref<256x144xf32, #tpu.memory_space<vmem>>, vector<256x144xf32>
    %c0_18 = arith.constant 0 : index
    %c0_19 = arith.constant 0 : index
    %30 = vector.load %arg4[%c0_18, %c0_19] : memref<144x256xf32, #tpu.memory_space<vmem>>, vector<144x256xf32>
    %c0_20 = arith.constant 0 : index
    %c0_21 = arith.constant 0 : index
    %31 = vector.load %arg5[%c0_20, %c0_21] : memref<144x256xf32, #tpu.memory_space<vmem>>, vector<144x256xf32>
    %c0_22 = arith.constant 0 : index
    %c0_23 = arith.constant 0 : index
    %32 = vector.load %arg6[%c0_22, %c0_23] : memref<8x144xf32, #tpu.memory_space<vmem>>, vector<8x144xf32>
    %c0_24 = arith.constant 0 : index
    %c0_25 = arith.constant 0 : index
    %33 = vector.load %arg7[%c0_24, %c0_25] : memref<8x144xf32, #tpu.memory_space<vmem>>, vector<8x144xf32>
    %c0_26 = arith.constant 0 : index
    %c0_27 = arith.constant 0 : index
    %34 = vector.load %arg18[%c0_26, %c0_27] : memref<8x1xf32, #tpu.memory_space<vmem>>, vector<8x1xf32>
    %c0_28 = arith.constant 0 : index
    %c0_29 = arith.constant 0 : index
    %35 = vector.load %arg19[%c0_28, %c0_29] : memref<8x1xf32, #tpu.memory_space<vmem>>, vector<8x1xf32>
    %c0_30 = arith.constant 0 : index
    %c0_31 = arith.constant 0 : index
    %36 = vector.load %arg22[%c0_30, %c0_31] : memref<32x8xf32, #tpu.memory_space<vmem>>, vector<32x8xf32>
    %c0_32 = arith.constant 0 : index
    %c0_33 = arith.constant 0 : index
    %37 = vector.load %arg23[%c0_32, %c0_33] : memref<32x1xf32, #tpu.memory_space<vmem>>, vector<32x1xf32>
    %c0_34 = arith.constant 0 : index
    %c0_35 = arith.constant 0 : index
    %38 = vector.load %arg24[%c0_34, %c0_35] : memref<8x32xf32, #tpu.memory_space<vmem>>, vector<8x32xf32>
    %c0_36 = arith.constant 0 : index
    %c0_37 = arith.constant 0 : index
    %39 = vector.load %arg25[%c0_36, %c0_37] : memref<8x1xf32, #tpu.memory_space<vmem>>, vector<8x1xf32>
    %c0_38 = arith.constant 0 : index
    %c0_39 = arith.constant 0 : index
    %40 = vector.load %arg30[%c0_38, %c0_39] : memref<8x72xf32, #tpu.memory_space<vmem>>, vector<8x72xf32>
    %c0_40 = arith.constant 0 : index
    %c0_41 = arith.constant 0 : index
    %41 = vector.load %arg31[%c0_40, %c0_41] : memref<8x1xf32, #tpu.memory_space<vmem>>, vector<8x1xf32>
    %c0_42 = arith.constant 0 : index
    %c0_43 = arith.constant 0 : index
    %42 = vector.load %arg34[%c0_42, %c0_43] : memref<72x256xf32, #tpu.memory_space<vmem>>, vector<72x256xf32>
    %cst_44 = arith.constant dense<0.000000e+00> : vector<8x144xf32>
    %43 = tpu.matmul %27, %28, %cst_44 {dimension_numbers = #tpu.dot_dimension_numbers<[1], [0], [0], [1], [0, 0, 1, 1], [], []>} : vector<8x256xf32>, vector<256x144xf32>, vector<8x144xf32> -> vector<8x144xf32>
    %cst_45 = arith.constant dense<0.000000e+00> : vector<8x144xf32>
    %44 = tpu.matmul %27, %29, %cst_45 {dimension_numbers = #tpu.dot_dimension_numbers<[1], [0], [0], [1], [0, 0, 1, 1], [], []>} : vector<8x256xf32>, vector<256x144xf32>, vector<8x144xf32> -> vector<8x144xf32>
    %45 = arith.mulf %43, %32 : vector<8x144xf32>
    %46 = arith.mulf %44, %33 : vector<8x144xf32>
    %47 = arith.subf %45, %46 : vector<8x144xf32>
    %48 = arith.mulf %43, %33 : vector<8x144xf32>
    %49 = arith.mulf %44, %32 : vector<8x144xf32>
    %50 = arith.addf %48, %49 : vector<8x144xf32>
    %cst_46 = arith.constant dense<0.000000e+00> : vector<8x256xf32>
    %51 = tpu.matmul %47, %30, %cst_46 {dimension_numbers = #tpu.dot_dimension_numbers<[1], [0], [0], [1], [0, 0, 1, 1], [], []>} : vector<8x144xf32>, vector<144x256xf32>, vector<8x256xf32> -> vector<8x256xf32>
    %cst_47 = arith.constant dense<0.000000e+00> : vector<8x256xf32>
    %52 = tpu.matmul %50, %31, %cst_47 {dimension_numbers = #tpu.dot_dimension_numbers<[1], [0], [0], [1], [0, 0, 1, 1], [], []>} : vector<8x144xf32>, vector<144x256xf32>, vector<8x256xf32> -> vector<8x256xf32>
    %53 = arith.addf %51, %52 : vector<8x256xf32>
    %cst_48 = arith.constant dense<0.000000e+00> : vector<256xf32>
    %54 = vector.multi_reduction <add>, %53, %cst_48 [0] : vector<8x256xf32> to vector<256xf32>
    %55 = vector.shape_cast %54 : vector<256xf32> to vector<1x256xf32>
    %cst_49 = arith.constant 8.000000e+00 : f32
    %56 = vector.broadcast %cst_49 : f32 to vector<1x256xf32>
    %57 = arith.divf %55, %56 : vector<1x256xf32>
    %58 = vector.broadcast %57 : vector<1x256xf32> to vector<8x256xf32>
    %59 = arith.subf %53, %58 : vector<8x256xf32>
    %60 = arith.mulf %59, %59 : vector<8x256xf32>
    %cst_50 = arith.constant dense<0.000000e+00> : vector<256xf32>
    %61 = vector.multi_reduction <add>, %60, %cst_50 [0] : vector<8x256xf32> to vector<256xf32>
    %62 = vector.shape_cast %61 : vector<256xf32> to vector<1x256xf32>
    %cst_51 = arith.constant 8.000000e+00 : f32
    %63 = vector.broadcast %cst_51 : f32 to vector<1x256xf32>
    %64 = arith.divf %62, %63 : vector<1x256xf32>
    %cst_52 = arith.constant 9.99999974E-6 : f32
    %65 = vector.broadcast %cst_52 : f32 to vector<1x256xf32>
    %66 = arith.addf %64, %65 : vector<1x256xf32>
    %67 = math.rsqrt %66 : vector<1x256xf32>
    %68 = vector.broadcast %67 : vector<1x256xf32> to vector<8x256xf32>
    %69 = arith.mulf %59, %68 : vector<8x256xf32>
    %70 = vector.broadcast %2 : vector<8x1xf32> to vector<8x256xf32>
    %71 = arith.mulf %69, %70 : vector<8x256xf32>
    %72 = vector.broadcast %3 : vector<8x1xf32> to vector<8x256xf32>
    %73 = arith.addf %71, %72 : vector<8x256xf32>
    %cst_53 = arith.constant dense<0.000000e+00> : vector<32x256xf32>
    %74 = tpu.matmul %36, %73, %cst_53 {dimension_numbers = #tpu.dot_dimension_numbers<[1], [0], [0], [1], [0, 0, 1, 1], [], []>} : vector<32x8xf32>, vector<8x256xf32>, vector<32x256xf32> -> vector<32x256xf32>
    %75 = vector.broadcast %37 : vector<32x1xf32> to vector<32x256xf32>
    %76 = arith.addf %74, %75 : vector<32x256xf32>
    %cst_54 = arith.constant 5.000000e-01 : f32
    %77 = vector.broadcast %cst_54 : f32 to vector<32x256xf32>
    %78 = arith.mulf %77, %76 : vector<32x256xf32>
    %cst_55 = arith.constant 0.707106769 : f32
    %79 = vector.broadcast %cst_55 : f32 to vector<32x256xf32>
    %80 = arith.mulf %76, %79 : vector<32x256xf32>
    %81 = math.absf %80 : vector<32x256xf32>
    %cst_56 = arith.constant 0.327591091 : f32
    %82 = vector.broadcast %cst_56 : f32 to vector<32x256xf32>
    %83 = arith.mulf %82, %81 : vector<32x256xf32>
    %cst_57 = arith.constant 1.000000e+00 : f32
    %84 = vector.broadcast %cst_57 : f32 to vector<32x256xf32>
    %85 = arith.addf %84, %83 : vector<32x256xf32>
    %cst_58 = arith.constant 1.000000e+00 : f32
    %86 = vector.broadcast %cst_58 : f32 to vector<32x256xf32>
    %87 = arith.divf %86, %85 : vector<32x256xf32>
    %cst_59 = arith.constant 1.06140542 : f32
    %88 = vector.broadcast %cst_59 : f32 to vector<32x256xf32>
    %89 = arith.mulf %88, %87 : vector<32x256xf32>
    %cst_60 = arith.constant -1.45315206 : f32
    %90 = vector.broadcast %cst_60 : f32 to vector<32x256xf32>
    %91 = arith.addf %89, %90 : vector<32x256xf32>
    %92 = arith.mulf %91, %87 : vector<32x256xf32>
    %cst_61 = arith.constant 1.42141378 : f32
    %93 = vector.broadcast %cst_61 : f32 to vector<32x256xf32>
    %94 = arith.addf %92, %93 : vector<32x256xf32>
    %95 = arith.mulf %94, %87 : vector<32x256xf32>
    %cst_62 = arith.constant -0.284496725 : f32
    %96 = vector.broadcast %cst_62 : f32 to vector<32x256xf32>
    %97 = arith.addf %95, %96 : vector<32x256xf32>
    %98 = arith.mulf %97, %87 : vector<32x256xf32>
    %cst_63 = arith.constant 0.254829586 : f32
    %99 = vector.broadcast %cst_63 : f32 to vector<32x256xf32>
    %100 = arith.addf %98, %99 : vector<32x256xf32>
    %101 = arith.mulf %100, %87 : vector<32x256xf32>
    %cst_64 = arith.constant 0.000000e+00 : f32
    %102 = vector.broadcast %cst_64 : f32 to vector<32x256xf32>
    %103 = arith.subf %102, %81 : vector<32x256xf32>
    %104 = arith.mulf %103, %81 : vector<32x256xf32>
    %105 = math.exp %104 : vector<32x256xf32>
    %106 = arith.mulf %101, %105 : vector<32x256xf32>
    %cst_65 = arith.constant 1.000000e+00 : f32
    %107 = vector.broadcast %cst_65 : f32 to vector<32x256xf32>
    %108 = arith.subf %107, %106 : vector<32x256xf32>
    %cst_66 = arith.constant 0.000000e+00 : f32
    %109 = vector.broadcast %cst_66 : f32 to vector<32x256xf32>
    %110 = arith.cmpf oge, %80, %109 : vector<32x256xf32>
    %cst_67 = arith.constant 0.000000e+00 : f32
    %111 = vector.broadcast %cst_67 : f32 to vector<32x256xf32>
    %112 = arith.subf %111, %108 : vector<32x256xf32>
    %113 = arith.select %110, %108, %112 : vector<32x256xi1>, vector<32x256xf32>
    %cst_68 = arith.constant 1.000000e+00 : f32
    %114 = vector.broadcast %cst_68 : f32 to vector<32x256xf32>
    %115 = arith.addf %114, %113 : vector<32x256xf32>
    %116 = arith.mulf %78, %115 : vector<32x256xf32>
    %cst_69 = arith.constant dense<0.000000e+00> : vector<8x256xf32>
    %117 = tpu.matmul %38, %116, %cst_69 {dimension_numbers = #tpu.dot_dimension_numbers<[1], [0], [0], [1], [0, 0, 1, 1], [], []>} : vector<8x32xf32>, vector<32x256xf32>, vector<8x256xf32> -> vector<8x256xf32>
    %118 = vector.broadcast %39 : vector<8x1xf32> to vector<8x256xf32>
    %119 = arith.addf %117, %118 : vector<8x256xf32>
    %c17_i32 = arith.constant 17 : i32
    %120 = tpu.dynamic_rotate %27 by %c17_i32 dim 1 : vector<8x256xf32>, i32 -> vector<8x256xf32>
    %c16_i32 = arith.constant 16 : i32
    %121 = tpu.dynamic_rotate %27 by %c16_i32 dim 1 : vector<8x256xf32>, i32 -> vector<8x256xf32>
    %c15_i32 = arith.constant 15 : i32
    %122 = tpu.dynamic_rotate %27 by %c15_i32 dim 1 : vector<8x256xf32>, i32 -> vector<8x256xf32>
    %c1_i32 = arith.constant 1 : i32
    %123 = tpu.dynamic_rotate %27 by %c1_i32 dim 1 : vector<8x256xf32>, i32 -> vector<8x256xf32>
    %c255_i32 = arith.constant 255 : i32
    %124 = tpu.dynamic_rotate %27 by %c255_i32 dim 1 : vector<8x256xf32>, i32 -> vector<8x256xf32>
    %c241_i32 = arith.constant 241 : i32
    %125 = tpu.dynamic_rotate %27 by %c241_i32 dim 1 : vector<8x256xf32>, i32 -> vector<8x256xf32>
    %c240_i32 = arith.constant 240 : i32
    %126 = tpu.dynamic_rotate %27 by %c240_i32 dim 1 : vector<8x256xf32>, i32 -> vector<8x256xf32>
    %c239_i32 = arith.constant 239 : i32
    %127 = tpu.dynamic_rotate %27 by %c239_i32 dim 1 : vector<8x256xf32>, i32 -> vector<8x256xf32>
    %128 = tpu.concatenate %120, %121, %122, %123, %27, %124, %125, %126, %127 in 0 : vector<8x256xf32>, vector<8x256xf32>, vector<8x256xf32>, vector<8x256xf32>, vector<8x256xf32>, vector<8x256xf32>, vector<8x256xf32>, vector<8x256xf32>, vector<8x256xf32> -> vector<72x256xf32>
    %129 = arith.mulf %128, %42 : vector<72x256xf32>
    %cst_70 = arith.constant dense<0.000000e+00> : vector<8x256xf32>
    %130 = tpu.matmul %40, %129, %cst_70 {dimension_numbers = #tpu.dot_dimension_numbers<[1], [0], [0], [1], [0, 0, 1, 1], [], []>} : vector<8x72xf32>, vector<72x256xf32>, vector<8x256xf32> -> vector<8x256xf32>
    %131 = vector.broadcast %41 : vector<8x1xf32> to vector<8x256xf32>
    %132 = arith.addf %130, %131 : vector<8x256xf32>
    %133 = arith.addf %132, %119 : vector<8x256xf32>
    %cst_71 = arith.constant dense<0.000000e+00> : vector<256xf32>
    %134 = vector.multi_reduction <add>, %133, %cst_71 [0] : vector<8x256xf32> to vector<256xf32>
    %135 = vector.shape_cast %134 : vector<256xf32> to vector<1x256xf32>
    %cst_72 = arith.constant 8.000000e+00 : f32
    %136 = vector.broadcast %cst_72 : f32 to vector<1x256xf32>
    %137 = arith.divf %135, %136 : vector<1x256xf32>
    %138 = vector.broadcast %137 : vector<1x256xf32> to vector<8x256xf32>
    %139 = arith.subf %133, %138 : vector<8x256xf32>
    %140 = arith.mulf %139, %139 : vector<8x256xf32>
    %cst_73 = arith.constant dense<0.000000e+00> : vector<256xf32>
    %141 = vector.multi_reduction <add>, %140, %cst_73 [0] : vector<8x256xf32> to vector<256xf32>
    %142 = vector.shape_cast %141 : vector<256xf32> to vector<1x256xf32>
    %cst_74 = arith.constant 8.000000e+00 : f32
    %143 = vector.broadcast %cst_74 : f32 to vector<1x256xf32>
    %144 = arith.divf %142, %143 : vector<1x256xf32>
    %cst_75 = arith.constant 9.99999974E-6 : f32
    %145 = vector.broadcast %cst_75 : f32 to vector<1x256xf32>
    %146 = arith.addf %144, %145 : vector<1x256xf32>
    %147 = math.rsqrt %146 : vector<1x256xf32>
    %148 = vector.broadcast %147 : vector<1x256xf32> to vector<8x256xf32>
    %149 = arith.mulf %139, %148 : vector<8x256xf32>
    %150 = vector.broadcast %34 : vector<8x1xf32> to vector<8x256xf32>
    %151 = arith.mulf %149, %150 : vector<8x256xf32>
    %152 = vector.broadcast %35 : vector<8x1xf32> to vector<8x256xf32>
    %153 = arith.addf %151, %152 : vector<8x256xf32>
    %cst_76 = arith.constant 0.000000e+00 : f32
    %154 = vector.broadcast %cst_76 : f32 to vector<8x256xf32>
    %155 = arith.maximumf %153, %154 : vector<8x256xf32>
    %c0_77 = arith.constant 0 : index
    %c0_78 = arith.constant 0 : index
    %156 = vector.load %arg8[%c0_77, %c0_78] : memref<64x40xf32, #tpu.memory_space<vmem>>, vector<64x40xf32>
    %c0_79 = arith.constant 0 : index
    %c0_80 = arith.constant 0 : index
    %157 = vector.load %arg9[%c0_79, %c0_80] : memref<64x40xf32, #tpu.memory_space<vmem>>, vector<64x40xf32>
    %c0_81 = arith.constant 0 : index
    %c0_82 = arith.constant 0 : index
    %158 = vector.load %arg10[%c0_81, %c0_82] : memref<40x64xf32, #tpu.memory_space<vmem>>, vector<40x64xf32>
    %c0_83 = arith.constant 0 : index
    %c0_84 = arith.constant 0 : index
    %159 = vector.load %arg11[%c0_83, %c0_84] : memref<40x64xf32, #tpu.memory_space<vmem>>, vector<40x64xf32>
    %c0_85 = arith.constant 0 : index
    %c0_86 = arith.constant 0 : index
    %160 = vector.load %arg12[%c0_85, %c0_86] : memref<8x40xf32, #tpu.memory_space<vmem>>, vector<8x40xf32>
    %c0_87 = arith.constant 0 : index
    %c0_88 = arith.constant 0 : index
    %161 = vector.load %arg13[%c0_87, %c0_88] : memref<8x40xf32, #tpu.memory_space<vmem>>, vector<8x40xf32>
    %c0_89 = arith.constant 0 : index
    %c0_90 = arith.constant 0 : index
    %162 = vector.load %arg20[%c0_89, %c0_90] : memref<8x1xf32, #tpu.memory_space<vmem>>, vector<8x1xf32>
    %c0_91 = arith.constant 0 : index
    %c0_92 = arith.constant 0 : index
    %163 = vector.load %arg21[%c0_91, %c0_92] : memref<8x1xf32, #tpu.memory_space<vmem>>, vector<8x1xf32>
    %c0_93 = arith.constant 0 : index
    %c0_94 = arith.constant 0 : index
    %164 = vector.load %arg26[%c0_93, %c0_94] : memref<32x8xf32, #tpu.memory_space<vmem>>, vector<32x8xf32>
    %c0_95 = arith.constant 0 : index
    %c0_96 = arith.constant 0 : index
    %165 = vector.load %arg27[%c0_95, %c0_96] : memref<32x1xf32, #tpu.memory_space<vmem>>, vector<32x1xf32>
    %c0_97 = arith.constant 0 : index
    %c0_98 = arith.constant 0 : index
    %166 = vector.load %arg28[%c0_97, %c0_98] : memref<8x32xf32, #tpu.memory_space<vmem>>, vector<8x32xf32>
    %c0_99 = arith.constant 0 : index
    %c0_100 = arith.constant 0 : index
    %167 = vector.load %arg29[%c0_99, %c0_100] : memref<8x1xf32, #tpu.memory_space<vmem>>, vector<8x1xf32>
    %c0_101 = arith.constant 0 : index
    %c0_102 = arith.constant 0 : index
    %168 = vector.load %arg32[%c0_101, %c0_102] : memref<8x72xf32, #tpu.memory_space<vmem>>, vector<8x72xf32>
    %c0_103 = arith.constant 0 : index
    %c0_104 = arith.constant 0 : index
    %169 = vector.load %arg33[%c0_103, %c0_104] : memref<8x1xf32, #tpu.memory_space<vmem>>, vector<8x1xf32>
    %c0_105 = arith.constant 0 : index
    %c0_106 = arith.constant 0 : index
    %170 = vector.load %arg35[%c0_105, %c0_106] : memref<72x64xf32, #tpu.memory_space<vmem>>, vector<72x64xf32>
    %cst_107 = arith.constant dense<0.000000e+00> : vector<8x40xf32>
    %171 = tpu.matmul %26, %156, %cst_107 {dimension_numbers = #tpu.dot_dimension_numbers<[1], [0], [0], [1], [0, 0, 1, 1], [], []>} : vector<8x64xf32>, vector<64x40xf32>, vector<8x40xf32> -> vector<8x40xf32>
    %cst_108 = arith.constant dense<0.000000e+00> : vector<8x40xf32>
    %172 = tpu.matmul %26, %157, %cst_108 {dimension_numbers = #tpu.dot_dimension_numbers<[1], [0], [0], [1], [0, 0, 1, 1], [], []>} : vector<8x64xf32>, vector<64x40xf32>, vector<8x40xf32> -> vector<8x40xf32>
    %173 = arith.mulf %171, %160 : vector<8x40xf32>
    %174 = arith.mulf %172, %161 : vector<8x40xf32>
    %175 = arith.subf %173, %174 : vector<8x40xf32>
    %176 = arith.mulf %171, %161 : vector<8x40xf32>
    %177 = arith.mulf %172, %160 : vector<8x40xf32>
    %178 = arith.addf %176, %177 : vector<8x40xf32>
    %cst_109 = arith.constant dense<0.000000e+00> : vector<8x64xf32>
    %179 = tpu.matmul %175, %158, %cst_109 {dimension_numbers = #tpu.dot_dimension_numbers<[1], [0], [0], [1], [0, 0, 1, 1], [], []>} : vector<8x40xf32>, vector<40x64xf32>, vector<8x64xf32> -> vector<8x64xf32>
    %cst_110 = arith.constant dense<0.000000e+00> : vector<8x64xf32>
    %180 = tpu.matmul %178, %159, %cst_110 {dimension_numbers = #tpu.dot_dimension_numbers<[1], [0], [0], [1], [0, 0, 1, 1], [], []>} : vector<8x40xf32>, vector<40x64xf32>, vector<8x64xf32> -> vector<8x64xf32>
    %181 = arith.addf %179, %180 : vector<8x64xf32>
    %cst_111 = arith.constant dense<0.000000e+00> : vector<64xf32>
    %182 = vector.multi_reduction <add>, %181, %cst_111 [0] : vector<8x64xf32> to vector<64xf32>
    %183 = vector.shape_cast %182 : vector<64xf32> to vector<1x64xf32>
    %cst_112 = arith.constant 8.000000e+00 : f32
    %184 = vector.broadcast %cst_112 : f32 to vector<1x64xf32>
    %185 = arith.divf %183, %184 : vector<1x64xf32>
    %186 = vector.broadcast %185 : vector<1x64xf32> to vector<8x64xf32>
    %187 = arith.subf %181, %186 : vector<8x64xf32>
    %188 = arith.mulf %187, %187 : vector<8x64xf32>
    %cst_113 = arith.constant dense<0.000000e+00> : vector<64xf32>
    %189 = vector.multi_reduction <add>, %188, %cst_113 [0] : vector<8x64xf32> to vector<64xf32>
    %190 = vector.shape_cast %189 : vector<64xf32> to vector<1x64xf32>
    %cst_114 = arith.constant 8.000000e+00 : f32
    %191 = vector.broadcast %cst_114 : f32 to vector<1x64xf32>
    %192 = arith.divf %190, %191 : vector<1x64xf32>
    %cst_115 = arith.constant 9.99999974E-6 : f32
    %193 = vector.broadcast %cst_115 : f32 to vector<1x64xf32>
    %194 = arith.addf %192, %193 : vector<1x64xf32>
    %195 = math.rsqrt %194 : vector<1x64xf32>
    %196 = vector.broadcast %195 : vector<1x64xf32> to vector<8x64xf32>
    %197 = arith.mulf %187, %196 : vector<8x64xf32>
    %198 = vector.broadcast %2 : vector<8x1xf32> to vector<8x64xf32>
    %199 = arith.mulf %197, %198 : vector<8x64xf32>
    %200 = vector.broadcast %3 : vector<8x1xf32> to vector<8x64xf32>
    %201 = arith.addf %199, %200 : vector<8x64xf32>
    %cst_116 = arith.constant dense<0.000000e+00> : vector<32x64xf32>
    %202 = tpu.matmul %164, %201, %cst_116 {dimension_numbers = #tpu.dot_dimension_numbers<[1], [0], [0], [1], [0, 0, 1, 1], [], []>} : vector<32x8xf32>, vector<8x64xf32>, vector<32x64xf32> -> vector<32x64xf32>
    %203 = vector.broadcast %165 : vector<32x1xf32> to vector<32x64xf32>
    %204 = arith.addf %202, %203 : vector<32x64xf32>
    %cst_117 = arith.constant 5.000000e-01 : f32
    %205 = vector.broadcast %cst_117 : f32 to vector<32x64xf32>
    %206 = arith.mulf %205, %204 : vector<32x64xf32>
    %cst_118 = arith.constant 0.707106769 : f32
    %207 = vector.broadcast %cst_118 : f32 to vector<32x64xf32>
    %208 = arith.mulf %204, %207 : vector<32x64xf32>
    %209 = math.absf %208 : vector<32x64xf32>
    %cst_119 = arith.constant 0.327591091 : f32
    %210 = vector.broadcast %cst_119 : f32 to vector<32x64xf32>
    %211 = arith.mulf %210, %209 : vector<32x64xf32>
    %cst_120 = arith.constant 1.000000e+00 : f32
    %212 = vector.broadcast %cst_120 : f32 to vector<32x64xf32>
    %213 = arith.addf %212, %211 : vector<32x64xf32>
    %cst_121 = arith.constant 1.000000e+00 : f32
    %214 = vector.broadcast %cst_121 : f32 to vector<32x64xf32>
    %215 = arith.divf %214, %213 : vector<32x64xf32>
    %cst_122 = arith.constant 1.06140542 : f32
    %216 = vector.broadcast %cst_122 : f32 to vector<32x64xf32>
    %217 = arith.mulf %216, %215 : vector<32x64xf32>
    %cst_123 = arith.constant -1.45315206 : f32
    %218 = vector.broadcast %cst_123 : f32 to vector<32x64xf32>
    %219 = arith.addf %217, %218 : vector<32x64xf32>
    %220 = arith.mulf %219, %215 : vector<32x64xf32>
    %cst_124 = arith.constant 1.42141378 : f32
    %221 = vector.broadcast %cst_124 : f32 to vector<32x64xf32>
    %222 = arith.addf %220, %221 : vector<32x64xf32>
    %223 = arith.mulf %222, %215 : vector<32x64xf32>
    %cst_125 = arith.constant -0.284496725 : f32
    %224 = vector.broadcast %cst_125 : f32 to vector<32x64xf32>
    %225 = arith.addf %223, %224 : vector<32x64xf32>
    %226 = arith.mulf %225, %215 : vector<32x64xf32>
    %cst_126 = arith.constant 0.254829586 : f32
    %227 = vector.broadcast %cst_126 : f32 to vector<32x64xf32>
    %228 = arith.addf %226, %227 : vector<32x64xf32>
    %229 = arith.mulf %228, %215 : vector<32x64xf32>
    %cst_127 = arith.constant 0.000000e+00 : f32
    %230 = vector.broadcast %cst_127 : f32 to vector<32x64xf32>
    %231 = arith.subf %230, %209 : vector<32x64xf32>
    %232 = arith.mulf %231, %209 : vector<32x64xf32>
    %233 = math.exp %232 : vector<32x64xf32>
    %234 = arith.mulf %229, %233 : vector<32x64xf32>
    %cst_128 = arith.constant 1.000000e+00 : f32
    %235 = vector.broadcast %cst_128 : f32 to vector<32x64xf32>
    %236 = arith.subf %235, %234 : vector<32x64xf32>
    %cst_129 = arith.constant 0.000000e+00 : f32
    %237 = vector.broadcast %cst_129 : f32 to vector<32x64xf32>
    %238 = arith.cmpf oge, %208, %237 : vector<32x64xf32>
    %cst_130 = arith.constant 0.000000e+00 : f32
    %239 = vector.broadcast %cst_130 : f32 to vector<32x64xf32>
    %240 = arith.subf %239, %236 : vector<32x64xf32>
    %241 = arith.select %238, %236, %240 : vector<32x64xi1>, vector<32x64xf32>
    %cst_131 = arith.constant 1.000000e+00 : f32
    %242 = vector.broadcast %cst_131 : f32 to vector<32x64xf32>
    %243 = arith.addf %242, %241 : vector<32x64xf32>
    %244 = arith.mulf %206, %243 : vector<32x64xf32>
    %cst_132 = arith.constant dense<0.000000e+00> : vector<8x64xf32>
    %245 = tpu.matmul %166, %244, %cst_132 {dimension_numbers = #tpu.dot_dimension_numbers<[1], [0], [0], [1], [0, 0, 1, 1], [], []>} : vector<8x32xf32>, vector<32x64xf32>, vector<8x64xf32> -> vector<8x64xf32>
    %246 = vector.broadcast %167 : vector<8x1xf32> to vector<8x64xf32>
    %247 = arith.addf %245, %246 : vector<8x64xf32>
    %c9_i32 = arith.constant 9 : i32
    %248 = tpu.dynamic_rotate %26 by %c9_i32 dim 1 : vector<8x64xf32>, i32 -> vector<8x64xf32>
    %c8_i32 = arith.constant 8 : i32
    %249 = tpu.dynamic_rotate %26 by %c8_i32 dim 1 : vector<8x64xf32>, i32 -> vector<8x64xf32>
    %c7_i32 = arith.constant 7 : i32
    %250 = tpu.dynamic_rotate %26 by %c7_i32 dim 1 : vector<8x64xf32>, i32 -> vector<8x64xf32>
    %c1_i32_133 = arith.constant 1 : i32
    %251 = tpu.dynamic_rotate %26 by %c1_i32_133 dim 1 : vector<8x64xf32>, i32 -> vector<8x64xf32>
    %c63_i32 = arith.constant 63 : i32
    %252 = tpu.dynamic_rotate %26 by %c63_i32 dim 1 : vector<8x64xf32>, i32 -> vector<8x64xf32>
    %c57_i32 = arith.constant 57 : i32
    %253 = tpu.dynamic_rotate %26 by %c57_i32 dim 1 : vector<8x64xf32>, i32 -> vector<8x64xf32>
    %c56_i32 = arith.constant 56 : i32
    %254 = tpu.dynamic_rotate %26 by %c56_i32 dim 1 : vector<8x64xf32>, i32 -> vector<8x64xf32>
    %c55_i32 = arith.constant 55 : i32
    %255 = tpu.dynamic_rotate %26 by %c55_i32 dim 1 : vector<8x64xf32>, i32 -> vector<8x64xf32>
    %256 = tpu.concatenate %248, %249, %250, %251, %26, %252, %253, %254, %255 in 0 : vector<8x64xf32>, vector<8x64xf32>, vector<8x64xf32>, vector<8x64xf32>, vector<8x64xf32>, vector<8x64xf32>, vector<8x64xf32>, vector<8x64xf32>, vector<8x64xf32> -> vector<72x64xf32>
    %257 = arith.mulf %256, %170 : vector<72x64xf32>
    %cst_134 = arith.constant dense<0.000000e+00> : vector<8x64xf32>
    %258 = tpu.matmul %168, %257, %cst_134 {dimension_numbers = #tpu.dot_dimension_numbers<[1], [0], [0], [1], [0, 0, 1, 1], [], []>} : vector<8x72xf32>, vector<72x64xf32>, vector<8x64xf32> -> vector<8x64xf32>
    %259 = vector.broadcast %169 : vector<8x1xf32> to vector<8x64xf32>
    %260 = arith.addf %258, %259 : vector<8x64xf32>
    %261 = arith.addf %260, %247 : vector<8x64xf32>
    %cst_135 = arith.constant dense<0.000000e+00> : vector<64xf32>
    %262 = vector.multi_reduction <add>, %261, %cst_135 [0] : vector<8x64xf32> to vector<64xf32>
    %263 = vector.shape_cast %262 : vector<64xf32> to vector<1x64xf32>
    %cst_136 = arith.constant 8.000000e+00 : f32
    %264 = vector.broadcast %cst_136 : f32 to vector<1x64xf32>
    %265 = arith.divf %263, %264 : vector<1x64xf32>
    %266 = vector.broadcast %265 : vector<1x64xf32> to vector<8x64xf32>
    %267 = arith.subf %261, %266 : vector<8x64xf32>
    %268 = arith.mulf %267, %267 : vector<8x64xf32>
    %cst_137 = arith.constant dense<0.000000e+00> : vector<64xf32>
    %269 = vector.multi_reduction <add>, %268, %cst_137 [0] : vector<8x64xf32> to vector<64xf32>
    %270 = vector.shape_cast %269 : vector<64xf32> to vector<1x64xf32>
    %cst_138 = arith.constant 8.000000e+00 : f32
    %271 = vector.broadcast %cst_138 : f32 to vector<1x64xf32>
    %272 = arith.divf %270, %271 : vector<1x64xf32>
    %cst_139 = arith.constant 9.99999974E-6 : f32
    %273 = vector.broadcast %cst_139 : f32 to vector<1x64xf32>
    %274 = arith.addf %272, %273 : vector<1x64xf32>
    %275 = math.rsqrt %274 : vector<1x64xf32>
    %276 = vector.broadcast %275 : vector<1x64xf32> to vector<8x64xf32>
    %277 = arith.mulf %267, %276 : vector<8x64xf32>
    %278 = vector.broadcast %162 : vector<8x1xf32> to vector<8x64xf32>
    %279 = arith.mulf %277, %278 : vector<8x64xf32>
    %280 = vector.broadcast %163 : vector<8x1xf32> to vector<8x64xf32>
    %281 = arith.addf %279, %280 : vector<8x64xf32>
    %cst_140 = arith.constant 0.000000e+00 : f32
    %282 = vector.broadcast %cst_140 : f32 to vector<8x64xf32>
    %283 = arith.maximumf %281, %282 : vector<8x64xf32>
    %284 = tpu.concatenate %283, %155 in 1 : vector<8x64xf32>, vector<8x256xf32> -> vector<8x320xf32>
    %c0_141 = arith.constant 0 : index
    %c0_142 = arith.constant 0 : index
    %c0_143 = arith.constant 0 : index
    %285 = vector.load %arg36[%c0_141, %c0_142, %c0_143] : memref<1x8x320xf32, #tpu.memory_space<vmem>>, vector<1x8x320xf32>
    %286 = vector.shape_cast %285 : vector<1x8x320xf32> to vector<8x320xf32>
    %287 = vector.shape_cast %284 : vector<8x320xf32> to vector<1x8x320xf32>
    tpu.vector_store %arg36[%c0_141, %c0_142, %c0_143], %287 {strides = array<i32>} : memref<1x8x320xf32, #tpu.memory_space<vmem>>, vector<1x8x320xf32>,
    return
  }
  func.func @transform_0(%arg0: i32) -> (i32, i32, i32) {
    %c0_i32 = arith.constant 0 : i32
    %c0_i32_0 = arith.constant 0 : i32
    %c0_i32_1 = arith.constant 0 : i32
    return %arg0, %c0_i32, %c0_i32_0 : i32, i32, i32
  }
  func.func @transform_1(%arg0: i32) -> (i32, i32) {
    %c0_i32 = arith.constant 0 : i32
    %c0_i32_0 = arith.constant 0 : i32
    %c0_i32_1 = arith.constant 0 : i32
    return %c0_i32, %c0_i32_0 : i32, i32
  }
  func.func @transform_2(%arg0: i32) -> (i32, i32) {
    %c0_i32 = arith.constant 0 : i32
    %c0_i32_0 = arith.constant 0 : i32
    %c0_i32_1 = arith.constant 0 : i32
    return %c0_i32, %c0_i32_0 : i32, i32
  }
  func.func @transform_3(%arg0: i32) -> (i32, i32) {
    %c0_i32 = arith.constant 0 : i32
    %c0_i32_0 = arith.constant 0 : i32
    %c0_i32_1 = arith.constant 0 : i32
    return %c0_i32, %c0_i32_0 : i32, i32
  }
  func.func @transform_4(%arg0: i32) -> (i32, i32) {
    %c0_i32 = arith.constant 0 : i32
    %c0_i32_0 = arith.constant 0 : i32
    %c0_i32_1 = arith.constant 0 : i32
    return %c0_i32, %c0_i32_0 : i32, i32
  }
  func.func @transform_5(%arg0: i32) -> (i32, i32) {
    %c0_i32 = arith.constant 0 : i32
    %c0_i32_0 = arith.constant 0 : i32
    %c0_i32_1 = arith.constant 0 : i32
    return %c0_i32, %c0_i32_0 : i32, i32
  }
  func.func @transform_6(%arg0: i32) -> (i32, i32) {
    %c0_i32 = arith.constant 0 : i32
    %c0_i32_0 = arith.constant 0 : i32
    %c0_i32_1 = arith.constant 0 : i32
    return %c0_i32, %c0_i32_0 : i32, i32
  }
  func.func @transform_7(%arg0: i32) -> (i32, i32) {
    %c0_i32 = arith.constant 0 : i32
    %c0_i32_0 = arith.constant 0 : i32
    %c0_i32_1 = arith.constant 0 : i32
    return %c0_i32, %c0_i32_0 : i32, i32
  }
  func.func @transform_8(%arg0: i32) -> (i32, i32) {
    %c0_i32 = arith.constant 0 : i32
    %c0_i32_0 = arith.constant 0 : i32
    %c0_i32_1 = arith.constant 0 : i32
    return %c0_i32, %c0_i32_0 : i32, i32
  }
  func.func @transform_9(%arg0: i32) -> (i32, i32) {
    %c0_i32 = arith.constant 0 : i32
    %c0_i32_0 = arith.constant 0 : i32
    %c0_i32_1 = arith.constant 0 : i32
    return %c0_i32, %c0_i32_0 : i32, i32
  }
  func.func @transform_10(%arg0: i32) -> (i32, i32) {
    %c0_i32 = arith.constant 0 : i32
    %c0_i32_0 = arith.constant 0 : i32
    %c0_i32_1 = arith.constant 0 : i32
    return %c0_i32, %c0_i32_0 : i32, i32
  }
  func.func @transform_11(%arg0: i32) -> (i32, i32) {
    %c0_i32 = arith.constant 0 : i32
    %c0_i32_0 = arith.constant 0 : i32
    %c0_i32_1 = arith.constant 0 : i32
    return %c0_i32, %c0_i32_0 : i32, i32
  }
  func.func @transform_12(%arg0: i32) -> (i32, i32) {
    %c0_i32 = arith.constant 0 : i32
    %c0_i32_0 = arith.constant 0 : i32
    %c0_i32_1 = arith.constant 0 : i32
    return %c0_i32, %c0_i32_0 : i32, i32
  }
  func.func @transform_13(%arg0: i32) -> (i32, i32) {
    %c0_i32 = arith.constant 0 : i32
    %c0_i32_0 = arith.constant 0 : i32
    %c0_i32_1 = arith.constant 0 : i32
    return %c0_i32, %c0_i32_0 : i32, i32
  }
  func.func @transform_14(%arg0: i32) -> (i32, i32) {
    %c0_i32 = arith.constant 0 : i32
    %c0_i32_0 = arith.constant 0 : i32
    %c0_i32_1 = arith.constant 0 : i32
    return %c0_i32, %c0_i32_0 : i32, i32
  }
  func.func @transform_15(%arg0: i32) -> (i32, i32) {
    %c0_i32 = arith.constant 0 : i32
    %c0_i32_0 = arith.constant 0 : i32
    %c0_i32_1 = arith.constant 0 : i32
    return %c0_i32, %c0_i32_0 : i32, i32
  }
  func.func @transform_16(%arg0: i32) -> (i32, i32) {
    %c0_i32 = arith.constant 0 : i32
    %c0_i32_0 = arith.constant 0 : i32
    %c0_i32_1 = arith.constant 0 : i32
    return %c0_i32, %c0_i32_0 : i32, i32
  }
  func.func @transform_17(%arg0: i32) -> (i32, i32) {
    %c0_i32 = arith.constant 0 : i32
    %c0_i32_0 = arith.constant 0 : i32
    %c0_i32_1 = arith.constant 0 : i32
    return %c0_i32, %c0_i32_0 : i32, i32
  }
  func.func @transform_18(%arg0: i32) -> (i32, i32) {
    %c0_i32 = arith.constant 0 : i32
    %c0_i32_0 = arith.constant 0 : i32
    %c0_i32_1 = arith.constant 0 : i32
    return %c0_i32, %c0_i32_0 : i32, i32
  }
  func.func @transform_19(%arg0: i32) -> (i32, i32) {
    %c0_i32 = arith.constant 0 : i32
    %c0_i32_0 = arith.constant 0 : i32
    %c0_i32_1 = arith.constant 0 : i32
    return %c0_i32, %c0_i32_0 : i32, i32
  }
  func.func @transform_20(%arg0: i32) -> (i32, i32) {
    %c0_i32 = arith.constant 0 : i32
    %c0_i32_0 = arith.constant 0 : i32
    %c0_i32_1 = arith.constant 0 : i32
    return %c0_i32, %c0_i32_0 : i32, i32
  }
  func.func @transform_21(%arg0: i32) -> (i32, i32) {
    %c0_i32 = arith.constant 0 : i32
    %c0_i32_0 = arith.constant 0 : i32
    %c0_i32_1 = arith.constant 0 : i32
    return %c0_i32, %c0_i32_0 : i32, i32
  }
  func.func @transform_22(%arg0: i32) -> (i32, i32) {
    %c0_i32 = arith.constant 0 : i32
    %c0_i32_0 = arith.constant 0 : i32
    %c0_i32_1 = arith.constant 0 : i32
    return %c0_i32, %c0_i32_0 : i32, i32
  }
  func.func @transform_23(%arg0: i32) -> (i32, i32) {
    %c0_i32 = arith.constant 0 : i32
    %c0_i32_0 = arith.constant 0 : i32
    %c0_i32_1 = arith.constant 0 : i32
    return %c0_i32, %c0_i32_0 : i32, i32
  }
  func.func @transform_24(%arg0: i32) -> (i32, i32) {
    %c0_i32 = arith.constant 0 : i32
    %c0_i32_0 = arith.constant 0 : i32
    %c0_i32_1 = arith.constant 0 : i32
    return %c0_i32, %c0_i32_0 : i32, i32
  }
  func.func @transform_25(%arg0: i32) -> (i32, i32) {
    %c0_i32 = arith.constant 0 : i32
    %c0_i32_0 = arith.constant 0 : i32
    %c0_i32_1 = arith.constant 0 : i32
    return %c0_i32, %c0_i32_0 : i32, i32
  }
  func.func @transform_26(%arg0: i32) -> (i32, i32) {
    %c0_i32 = arith.constant 0 : i32
    %c0_i32_0 = arith.constant 0 : i32
    %c0_i32_1 = arith.constant 0 : i32
    return %c0_i32, %c0_i32_0 : i32, i32
  }
  func.func @transform_27(%arg0: i32) -> (i32, i32) {
    %c0_i32 = arith.constant 0 : i32
    %c0_i32_0 = arith.constant 0 : i32
    %c0_i32_1 = arith.constant 0 : i32
    return %c0_i32, %c0_i32_0 : i32, i32
  }
  func.func @transform_28(%arg0: i32) -> (i32, i32) {
    %c0_i32 = arith.constant 0 : i32
    %c0_i32_0 = arith.constant 0 : i32
    %c0_i32_1 = arith.constant 0 : i32
    return %c0_i32, %c0_i32_0 : i32, i32
  }
  func.func @transform_29(%arg0: i32) -> (i32, i32) {
    %c0_i32 = arith.constant 0 : i32
    %c0_i32_0 = arith.constant 0 : i32
    %c0_i32_1 = arith.constant 0 : i32
    return %c0_i32, %c0_i32_0 : i32, i32
  }
  func.func @transform_30(%arg0: i32) -> (i32, i32) {
    %c0_i32 = arith.constant 0 : i32
    %c0_i32_0 = arith.constant 0 : i32
    %c0_i32_1 = arith.constant 0 : i32
    return %c0_i32, %c0_i32_0 : i32, i32
  }
  func.func @transform_31(%arg0: i32) -> (i32, i32) {
    %c0_i32 = arith.constant 0 : i32
    %c0_i32_0 = arith.constant 0 : i32
    %c0_i32_1 = arith.constant 0 : i32
    return %c0_i32, %c0_i32_0 : i32, i32
  }
  func.func @transform_32(%arg0: i32) -> (i32, i32) {
    %c0_i32 = arith.constant 0 : i32
    %c0_i32_0 = arith.constant 0 : i32
    %c0_i32_1 = arith.constant 0 : i32
    return %c0_i32, %c0_i32_0 : i32, i32
  }
  func.func @transform_33(%arg0: i32) -> (i32, i32) {
    %c0_i32 = arith.constant 0 : i32
    %c0_i32_0 = arith.constant 0 : i32
    %c0_i32_1 = arith.constant 0 : i32
    return %c0_i32, %c0_i32_0 : i32, i32
  }
  func.func @transform_34(%arg0: i32) -> (i32, i32) {
    %c0_i32 = arith.constant 0 : i32
    %c0_i32_0 = arith.constant 0 : i32
    %c0_i32_1 = arith.constant 0 : i32
    return %c0_i32, %c0_i32_0 : i32, i32
  }
  func.func @transform_35(%arg0: i32) -> (i32, i32, i32) {
    %c0_i32 = arith.constant 0 : i32
    %c0_i32_0 = arith.constant 0 : i32
    %c0_i32_1 = arith.constant 0 : i32
    return %arg0, %c0_i32, %c0_i32_0 : i32, i32, i32
  }
}

</mosaic_0001>

<llo_original>
// kernel: tpu_custom_call.1
$region0: #{tpu_custom_call.1}
  #allocation0 [shape = 'u32[]', space=smem, size = 0x4, offset = 0x4, fixed_abs, tag = 'smem constant byte address 0x4 - core index']
  #allocation1 [shape = 'u32[144,128]{1,0:T(1,128)}', space=vmem, size = 0x12000, scoped, tag = 'internal scratch']
  %s0 = inlined_call_operand.smem [shape: u32[36], index: -1, kind: input, shape index: {}]
  %s1 = sld [smem:[%s0]]
  %s2 = scalar_lea.smem %s0, 1
  %s3 = sld [smem:[%s2]]
  %s4 = scalar_lea.smem %s0, 2
  %s5 = sld [smem:[%s4]]
  %s6 = scalar_lea.smem %s0, 3
  %s7 = sld [smem:[%s6]]
  %s8 = scalar_lea.smem %s0, 4
  %s9 = sld [smem:[%s8]]
  %s10 = scalar_lea.smem %s0, 5
  %s11 = sld [smem:[%s10]]
  %s12 = scalar_lea.smem %s0, 6
  %s13 = sld [smem:[%s12]]
  %s14 = scalar_lea.smem %s0, 7
  %s15 = sld [smem:[%s14]]
  %s16 = scalar_lea.smem %s0, 8
  %s17 = sld [smem:[%s16]]
  %s18 = scalar_lea.smem %s0, 9
  %s19 = sld [smem:[%s18]]
  %s20 = scalar_lea.smem %s0, 10
  %s21 = sld [smem:[%s20]]
  %s22 = scalar_lea.smem %s0, 11
  %s23 = sld [smem:[%s22]]
  %s24 = scalar_lea.smem %s0, 12
  %s25 = sld [smem:[%s24]]
  %s26 = scalar_lea.smem %s0, 13
  %s27 = sld [smem:[%s26]]
  %s28 = scalar_lea.smem %s0, 14
  %s29 = sld [smem:[%s28]]
  %s30 = scalar_lea.smem %s0, 15
  %s31 = sld [smem:[%s30]]
  %s32 = scalar_lea.smem %s0, 16
  %s33 = sld [smem:[%s32]]
  %s34 = scalar_lea.smem %s0, 17
  %s35 = sld [smem:[%s34]]
  %s36 = scalar_lea.smem %s0, 18
  %s37 = sld [smem:[%s36]]
  %s38 = scalar_lea.smem %s0, 19
  %s39 = sld [smem:[%s38]]
  %s40 = scalar_lea.smem %s0, 20
  %s41 = sld [smem:[%s40]]
  %s42 = scalar_lea.smem %s0, 21
  %s43 = sld [smem:[%s42]]
  %s44 = scalar_lea.smem %s0, 22
  %s45 = sld [smem:[%s44]]
  %s46 = scalar_lea.smem %s0, 23
  %s47 = sld [smem:[%s46]]
  %s48 = scalar_lea.smem %s0, 24
  %s49 = sld [smem:[%s48]]
  %s50 = scalar_lea.smem %s0, 25
  %s51 = sld [smem:[%s50]]
  %s52 = scalar_lea.smem %s0, 26
  %s53 = sld [smem:[%s52]]
  %s54 = scalar_lea.smem %s0, 27
  %s55 = sld [smem:[%s54]]
  %s56 = scalar_lea.smem %s0, 28
  %s57 = sld [smem:[%s56]]
  %s58 = scalar_lea.smem %s0, 29
  %s59 = sld [smem:[%s58]]
  %s60 = scalar_lea.smem %s0, 30
  %s61 = sld [smem:[%s60]]
  %s62 = scalar_lea.smem %s0, 31
  %s63 = sld [smem:[%s62]]
  %s64 = scalar_lea.smem %s0, 32
  %s65 = sld [smem:[%s64]]
  %s66 = scalar_lea.smem %s0, 33
  %s67 = sld [smem:[%s66]]
  %s68 = scalar_lea.smem %s0, 34
  %s69 = sld [smem:[%s68]]
  %s70 = scalar_lea.smem %s0, 35
  %s71 = sld [smem:[%s70]]
  %s72 = sld [smem:[#allocation0]]
  $region173: #{tpu_custom_call.1} parent=0
    _
  %s74 = ssub.s32 1, %s72
  %s75 = scalar_select 0, %s74, %s72
  $region1: #{tpu_custom_call.1} parent=0
    #allocation2 [shape = 'u8[24576]{0}', space=vmem, size = 0x6000, scoped, tag = 'output window, operand 0']
    #allocation3 [shape = 's32[2]{0}', space=sflag, size = 0x8, scoped, tag = 'scoped memory for tpu_custom_call.1']
    %76 = vsyncpa [#allocation3], 0
    %s77 = scalar_lea.sflag [#allocation3], 1
    %78 = vsyncpa %s77, 0
    loop: start=0, step=1, limit=4
    $region2: #{tpu_custom_call.1} parent=1 // loop_pre_header
      _
    $region3: #{tpu_custom_call.1} parent=1 // loop_header
      %s80 = sphi 0, %s84
      %p81 = scmp.ge.s32.totalorder %s80, 4
      %s90 = sphi 0, %s92
      %s93 = sphi 0, %s90
      %s94 = sphi 0, %s93
      %s110 = sphi 0, %s94
      %s114 = sphi 0, %s114
      %s116 = sphi 0, %s114
      %s117 = sphi 0, %s116
      %s131 = sphi 0, %s117
      %s135 = sphi 0, %s135
      %s137 = sphi 0, %s135
      %s138 = sphi 0, %s137
      %s152 = sphi 0, %s138
      %s156 = sphi 0, %s156
      %s158 = sphi 0, %s156
      %s159 = sphi 0, %s158
      %s173 = sphi 0, %s159
      %s177 = sphi 0, %s177
      %s179 = sphi 0, %s177
      %s180 = sphi 0, %s179
      %s194 = sphi 0, %s180
      %s198 = sphi 0, %s198
      %s200 = sphi 0, %s198
      %s201 = sphi 0, %s200
      %s215 = sphi 0, %s201
      %s219 = sphi 0, %s219
      %s221 = sphi 0, %s219
      %s222 = sphi 0, %s221
      %s236 = sphi 0, %s222
      %s240 = sphi 0, %s240
      %s242 = sphi 0, %s240
      %s243 = sphi 0, %s242
      %s257 = sphi 0, %s243
      %s261 = sphi 0, %s261
      %s263 = sphi 0, %s261
      %s264 = sphi 0, %s263
      %s278 = sphi 0, %s264
      %s282 = sphi 0, %s282
      %s284 = sphi 0, %s282
      %s285 = sphi 0, %s284
      %s299 = sphi 0, %s285
      %s303 = sphi 0, %s303
      %s305 = sphi 0, %s303
      %s306 = sphi 0, %s305
      %s320 = sphi 0, %s306
      %s324 = sphi 0, %s324
      %s326 = sphi 0, %s324
      %s327 = sphi 0, %s326
      %s341 = sphi 0, %s327
      %s345 = sphi 0, %s345
      %s347 = sphi 0, %s345
      %s348 = sphi 0, %s347
      %s362 = sphi 0, %s348
      %s366 = sphi 0, %s366
      %s368 = sphi 0, %s366
      %s369 = sphi 0, %s368
      %s383 = sphi 0, %s369
      %s387 = sphi 0, %s387
      %s389 = sphi 0, %s387
      %s390 = sphi 0, %s389
      %s404 = sphi 0, %s390
      %s408 = sphi 0, %s408
      %s410 = sphi 0, %s408
      %s411 = sphi 0, %s410
      %s425 = sphi 0, %s411
      %s429 = sphi 0, %s429
      %s431 = sphi 0, %s429
      %s432 = sphi 0, %s431
      %s446 = sphi 0, %s432
      %s450 = sphi 0, %s450
      %s452 = sphi 0, %s450
      %s453 = sphi 0, %s452
      %s467 = sphi 0, %s453
      %s471 = sphi 0, %s471
      %s473 = sphi 0, %s471
      %s474 = sphi 0, %s473
      %s488 = sphi 0, %s474
      %s492 = sphi 0, %s492
      %s494 = sphi 0, %s492
      %s495 = sphi 0, %s494
      %s509 = sphi 0, %s495
      %s513 = sphi 0, %s513
      %s515 = sphi 0, %s513
      %s516 = sphi 0, %s515
      %s530 = sphi 0, %s516
      %s534 = sphi 0, %s534
      %s536 = sphi 0, %s534
      %s537 = sphi 0, %s536
      %s551 = sphi 0, %s537
      %s555 = sphi 0, %s555
      %s557 = sphi 0, %s555
      %s558 = sphi 0, %s557
      %s572 = sphi 0, %s558
      %s576 = sphi 0, %s576
      %s578 = sphi 0, %s576
      %s579 = sphi 0, %s578
      %s593 = sphi 0, %s579
      %s597 = sphi 0, %s597
      %s599 = sphi 0, %s597
      %s600 = sphi 0, %s599
      %s614 = sphi 0, %s600
      %s618 = sphi 0, %s618
      %s620 = sphi 0, %s618
      %s621 = sphi 0, %s620
      %s635 = sphi 0, %s621
      %s639 = sphi 0, %s639
      %s641 = sphi 0, %s639
      %s642 = sphi 0, %s641
      %s656 = sphi 0, %s642
      %s660 = sphi 0, %s660
      %s662 = sphi 0, %s660
      %s663 = sphi 0, %s662
      %s677 = sphi 0, %s663
      %s681 = sphi 0, %s681
      %s683 = sphi 0, %s681
      %s684 = sphi 0, %s683
      %s698 = sphi 0, %s684
      %s702 = sphi 0, %s702
      %s704 = sphi 0, %s702
      %s705 = sphi 0, %s704
      %s719 = sphi 0, %s705
      %s723 = sphi 0, %s723
      %s725 = sphi 0, %s723
      %s726 = sphi 0, %s725
      %s740 = sphi 0, %s726
      %s744 = sphi 0, %s744
      %s746 = sphi 0, %s744
      %s747 = sphi 0, %s746
      %s761 = sphi 0, %s747
      %s765 = sphi 0, %s765
      %s767 = sphi 0, %s765
      %s768 = sphi 0, %s767
      %s782 = sphi 0, %s768
      %s786 = sphi 0, %s786
      %s788 = sphi 0, %s786
      %s789 = sphi 0, %s788
      %s803 = sphi 0, %s789
      %s807 = sphi 0, %s807
      %s809 = sphi 0, %s807
      %s810 = sphi 0, %s809
      %s824 = sphi 0, %s810
      %s830 = sphi 0, %s832
      %s833 = sphi 0, %s830
      %s834 = sphi 0, %s833
      %s850 = sphi 0, %s834
    $region4: #{tpu_custom_call.1} parent=1 // loop_header_branch
      %83 = sbr.rel (%p81) target = $region8
    $region5: #{tpu_custom_call.1} parent=1 // loop_body
      %s85 = ssub.s32 %s80, 1
      %s86 = ssub.s32 %s80, 2
      %s87 = sadd.s32 %s80, 1
      %s88 = ssub.s32 %s80, %s87
      %p89 = scmp.eq.s32.totalorder %s88, 0
      %s91 = sadd.s32 %s90, 1
      %s92 = scalar_select %p89, %s90, %s91
      %p95 = pneg %p89
      %p96 = scmp.eq.s32.totalorder %s80, 1
      %p97 = por %p95, %p96
      %p98 = scmp.ne.s32.totalorder %s90, %s93
      %p99 = scmp.eq.s32.totalorder %s80, 0
      %p100 = por %p98, %p99
      %p101 = scmp.ne.s32.totalorder %s90, %s93
      %p102 = scmp.eq.s32.totalorder %s85, 1
      %p103 = por %p101, %p102
      %p104 = scmp.ne.s32.totalorder %s93, %s94
      %p105 = scmp.eq.s32.totalorder %s85, 0
      %p106 = por %p104, %p105
      %p107 = scmp.ne.s32.totalorder %s93, %s94
      %p108 = scmp.eq.s32.totalorder %s86, 1
      %p109 = por %p107, %p108
      %p111 = scmp.ne.s32.totalorder %s94, %s110
      %p112 = scmp.eq.s32.totalorder %s86, 0
      %p113 = por %p111, %p112
      %s115 = sadd.s32 %s114, 1
      %p118 = scmp.eq.s32.totalorder %s80, 1
      %p119 = scmp.ne.s32.totalorder %s114, %s116
      %p120 = scmp.eq.s32.totalorder %s80, 0
      %p121 = por %p119, %p120
      %p122 = scmp.ne.s32.totalorder %s114, %s116
      %p123 = scmp.eq.s32.totalorder %s85, 1
      %p124 = por %p122, %p123
      %p125 = scmp.ne.s32.totalorder %s116, %s117
      %p126 = scmp.eq.s32.totalorder %s85, 0
      %p127 = por %p125, %p126
      %p128 = scmp.ne.s32.totalorder %s116, %s117
      %p129 = scmp.eq.s32.totalorder %s86, 1
      %p130 = por %p128, %p129
      %p132 = scmp.ne.s32.totalorder %s117, %s131
      %p133 = scmp.eq.s32.totalorder %s86, 0
      %p134 = por %p132, %p133
      %s136 = sadd.s32 %s135, 1
      %p139 = scmp.eq.s32.totalorder %s80, 1
      %p140 = scmp.ne.s32.totalorder %s135, %s137
      %p141 = scmp.eq.s32.totalorder %s80, 0
      %p142 = por %p140, %p141
      %p143 = scmp.ne.s32.totalorder %s135, %s137
      %p144 = scmp.eq.s32.totalorder %s85, 1
      %p145 = por %p143, %p144
      %p146 = scmp.ne.s32.totalorder %s137, %s138
      %p147 = scmp.eq.s32.totalorder %s85, 0
      %p148 = por %p146, %p147
      %p149 = scmp.ne.s32.totalorder %s137, %s138
      %p150 = scmp.eq.s32.totalorder %s86, 1
      %p151 = por %p149, %p150
      %p153 = scmp.ne.s32.totalorder %s138, %s152
      %p154 = scmp.eq.s32.totalorder %s86, 0
      %p155 = por %p153, %p154
      %s157 = sadd.s32 %s156, 1
      %p160 = scmp.eq.s32.totalorder %s80, 1
      %p161 = scmp.ne.s32.totalorder %s156, %s158
      %p162 = scmp.eq.s32.totalorder %s80, 0
      %p163 = por %p161, %p162
      %p164 = scmp.ne.s32.totalorder %s156, %s158
      %p165 = scmp.eq.s32.totalorder %s85, 1
      %p166 = por %p164, %p165
      %p167 = scmp.ne.s32.totalorder %s158, %s159
      %p168 = scmp.eq.s32.totalorder %s85, 0
      %p169 = por %p167, %p168
      %p170 = scmp.ne.s32.totalorder %s158, %s159
      %p171 = scmp.eq.s32.totalorder %s86, 1
      %p172 = por %p170, %p171
      %p174 = scmp.ne.s32.totalorder %s159, %s173
      %p175 = scmp.eq.s32.totalorder %s86, 0
      %p176 = por %p174, %p175
      %s178 = sadd.s32 %s177, 1
      %p181 = scmp.eq.s32.totalorder %s80, 1
      %p182 = scmp.ne.s32.totalorder %s177, %s179
      %p183 = scmp.eq.s32.totalorder %s80, 0
      %p184 = por %p182, %p183
      %p185 = scmp.ne.s32.totalorder %s177, %s179
      %p186 = scmp.eq.s32.totalorder %s85, 1
      %p187 = por %p185, %p186
      %p188 = scmp.ne.s32.totalorder %s179, %s180
      %p189 = scmp.eq.s32.totalorder %s85, 0
      %p190 = por %p188, %p189
      %p191 = scmp.ne.s32.totalorder %s179, %s180
      %p192 = scmp.eq.s32.totalorder %s86, 1
      %p193 = por %p191, %p192
      %p195 = scmp.ne.s32.totalorder %s180, %s194
      %p196 = scmp.eq.s32.totalorder %s86, 0
      %p197 = por %p195, %p196
      %s199 = sadd.s32 %s198, 1
      %p202 = scmp.eq.s32.totalorder %s80, 1
      %p203 = scmp.ne.s32.totalorder %s198, %s200
      %p204 = scmp.eq.s32.totalorder %s80, 0
      %p205 = por %p203, %p204
      %p206 = scmp.ne.s32.totalorder %s198, %s200
      %p207 = scmp.eq.s32.totalorder %s85, 1
      %p208 = por %p206, %p207
      %p209 = scmp.ne.s32.totalorder %s200, %s201
      %p210 = scmp.eq.s32.totalorder %s85, 0
      %p211 = por %p209, %p210
      %p212 = scmp.ne.s32.totalorder %s200, %s201
      %p213 = scmp.eq.s32.totalorder %s86, 1
      %p214 = por %p212, %p213
      %p216 = scmp.ne.s32.totalorder %s201, %s215
      %p217 = scmp.eq.s32.totalorder %s86, 0
      %p218 = por %p216, %p217
      %s220 = sadd.s32 %s219, 1
      %p223 = scmp.eq.s32.totalorder %s80, 1
      %p224 = scmp.ne.s32.totalorder %s219, %s221
      %p225 = scmp.eq.s32.totalorder %s80, 0
      %p226 = por %p224, %p225
      %p227 = scmp.ne.s32.totalorder %s219, %s221
      %p228 = scmp.eq.s32.totalorder %s85, 1
      %p229 = por %p227, %p228
      %p230 = scmp.ne.s32.totalorder %s221, %s222
      %p231 = scmp.eq.s32.totalorder %s85, 0
      %p232 = por %p230, %p231
      %p233 = scmp.ne.s32.totalorder %s221, %s222
      %p234 = scmp.eq.s32.totalorder %s86, 1
      %p235 = por %p233, %p234
      %p237 = scmp.ne.s32.totalorder %s222, %s236
      %p238 = scmp.eq.s32.totalorder %s86, 0
      %p239 = por %p237, %p238
      %s241 = sadd.s32 %s240, 1
      %p244 = scmp.eq.s32.totalorder %s80, 1
      %p245 = scmp.ne.s32.totalorder %s240, %s242
      %p246 = scmp.eq.s32.totalorder %s80, 0
      %p247 = por %p245, %p246
      %p248 = scmp.ne.s32.totalorder %s240, %s242
      %p249 = scmp.eq.s32.totalorder %s85, 1
      %p250 = por %p248, %p249
      %p251 = scmp.ne.s32.totalorder %s242, %s243
      %p252 = scmp.eq.s32.totalorder %s85, 0
      %p253 = por %p251, %p252
      %p254 = scmp.ne.s32.totalorder %s242, %s243
      %p255 = scmp.eq.s32.totalorder %s86, 1
      %p256 = por %p254, %p255
      %p258 = scmp.ne.s32.totalorder %s243, %s257
      %p259 = scmp.eq.s32.totalorder %s86, 0
      %p260 = por %p258, %p259
      %s262 = sadd.s32 %s261, 1
      %p265 = scmp.eq.s32.totalorder %s80, 1
      %p266 = scmp.ne.s32.totalorder %s261, %s263
      %p267 = scmp.eq.s32.totalorder %s80, 0
      %p268 = por %p266, %p267
      %p269 = scmp.ne.s32.totalorder %s261, %s263
      %p270 = scmp.eq.s32.totalorder %s85, 1
      %p271 = por %p269, %p270
      %p272 = scmp.ne.s32.totalorder %s263, %s264
      %p273 = scmp.eq.s32.totalorder %s85, 0
      %p274 = por %p272, %p273
      %p275 = scmp.ne.s32.totalorder %s263, %s264
      %p276 = scmp.eq.s32.totalorder %s86, 1
      %p277 = por %p275, %p276
      %p279 = scmp.ne.s32.totalorder %s264, %s278
      %p280 = scmp.eq.s32.totalorder %s86, 0
      %p281 = por %p279, %p280
      %s283 = sadd.s32 %s282, 1
      %p286 = scmp.eq.s32.totalorder %s80, 1
      %p287 = scmp.ne.s32.totalorder %s282, %s284
      %p288 = scmp.eq.s32.totalorder %s80, 0
      %p289 = por %p287, %p288
      %p290 = scmp.ne.s32.totalorder %s282, %s284
      %p291 = scmp.eq.s32.totalorder %s85, 1
      %p292 = por %p290, %p291
      %p293 = scmp.ne.s32.totalorder %s284, %s285
      %p294 = scmp.eq.s32.totalorder %s85, 0
      %p295 = por %p293, %p294
      %p296 = scmp.ne.s32.totalorder %s284, %s285
      %p297 = scmp.eq.s32.totalorder %s86, 1
      %p298 = por %p296, %p297
      %p300 = scmp.ne.s32.totalorder %s285, %s299
      %p301 = scmp.eq.s32.totalorder %s86, 0
      %p302 = por %p300, %p301
      %s304 = sadd.s32 %s303, 1
      %p307 = scmp.eq.s32.totalorder %s80, 1
      %p308 = scmp.ne.s32.totalorder %s303, %s305
      %p309 = scmp.eq.s32.totalorder %s80, 0
      %p310 = por %p308, %p309
      %p311 = scmp.ne.s32.totalorder %s303, %s305
      %p312 = scmp.eq.s32.totalorder %s85, 1
      %p313 = por %p311, %p312
      %p314 = scmp.ne.s32.totalorder %s305, %s306
      %p315 = scmp.eq.s32.totalorder %s85, 0
      %p316 = por %p314, %p315
      %p317 = scmp.ne.s32.totalorder %s305, %s306
      %p318 = scmp.eq.s32.totalorder %s86, 1
      %p319 = por %p317, %p318
      %p321 = scmp.ne.s32.totalorder %s306, %s320
      %p322 = scmp.eq.s32.totalorder %s86, 0
      %p323 = por %p321, %p322
      %s325 = sadd.s32 %s324, 1
      %p328 = scmp.eq.s32.totalorder %s80, 1
      %p329 = scmp.ne.s32.totalorder %s324, %s326
      %p330 = scmp.eq.s32.totalorder %s80, 0
      %p331 = por %p329, %p330
      %p332 = scmp.ne.s32.totalorder %s324, %s326
      %p333 = scmp.eq.s32.totalorder %s85, 1
      %p334 = por %p332, %p333
      %p335 = scmp.ne.s32.totalorder %s326, %s327
      %p336 = scmp.eq.s32.totalorder %s85, 0
      %p337 = por %p335, %p336
      %p338 = scmp.ne.s32.totalorder %s326, %s327
      %p339 = scmp.eq.s32.totalorder %s86, 1
      %p340 = por %p338, %p339
      %p342 = scmp.ne.s32.totalorder %s327, %s341
      %p343 = scmp.eq.s32.totalorder %s86, 0
      %p344 = por %p342, %p343
      %s346 = sadd.s32 %s345, 1
      %p349 = scmp.eq.s32.totalorder %s80, 1
      %p350 = scmp.ne.s32.totalorder %s345, %s347
      %p351 = scmp.eq.s32.totalorder %s80, 0
      %p352 = por %p350, %p351
      %p353 = scmp.ne.s32.totalorder %s345, %s347
      %p354 = scmp.eq.s32.totalorder %s85, 1
      %p355 = por %p353, %p354
      %p356 = scmp.ne.s32.totalorder %s347, %s348
      %p357 = scmp.eq.s32.totalorder %s85, 0
      %p358 = por %p356, %p357
      %p359 = scmp.ne.s32.totalorder %s347, %s348
      %p360 = scmp.eq.s32.totalorder %s86, 1
      %p361 = por %p359, %p360
      %p363 = scmp.ne.s32.totalorder %s348, %s362
      %p364 = scmp.eq.s32.totalorder %s86, 0
      %p365 = por %p363, %p364
      %s367 = sadd.s32 %s366, 1
      %p370 = scmp.eq.s32.totalorder %s80, 1
      %p371 = scmp.ne.s32.totalorder %s366, %s368
      %p372 = scmp.eq.s32.totalorder %s80, 0
      %p373 = por %p371, %p372
      %p374 = scmp.ne.s32.totalorder %s366, %s368
      %p375 = scmp.eq.s32.totalorder %s85, 1
      %p376 = por %p374, %p375
      %p377 = scmp.ne.s32.totalorder %s368, %s369
      %p378 = scmp.eq.s32.totalorder %s85, 0
      %p379 = por %p377, %p378
      %p380 = scmp.ne.s32.totalorder %s368, %s369
      %p381 = scmp.eq.s32.totalorder %s86, 1
      %p382 = por %p380, %p381
      %p384 = scmp.ne.s32.totalorder %s369, %s383
      %p385 = scmp.eq.s32.totalorder %s86, 0
      %p386 = por %p384, %p385
      %s388 = sadd.s32 %s387, 1
      %p391 = scmp.eq.s32.totalorder %s80, 1
      %p392 = scmp.ne.s32.totalorder %s387, %s389
      %p393 = scmp.eq.s32.totalorder %s80, 0
      %p394 = por %p392, %p393
      %p395 = scmp.ne.s32.totalorder %s387, %s389
      %p396 = scmp.eq.s32.totalorder %s85, 1
      %p397 = por %p395, %p396
      %p398 = scmp.ne.s32.totalorder %s389, %s390
      %p399 = scmp.eq.s32.totalorder %s85, 0
      %p400 = por %p398, %p399
      %p401 = scmp.ne.s32.totalorder %s389, %s390
      %p402 = scmp.eq.s32.totalorder %s86, 1
      %p403 = por %p401, %p402
      %p405 = scmp.ne.s32.totalorder %s390, %s404
      %p406 = scmp.eq.s32.totalorder %s86, 0
      %p407 = por %p405, %p406
      %s409 = sadd.s32 %s408, 1
      %p412 = scmp.eq.s32.totalorder %s80, 1
      %p413 = scmp.ne.s32.totalorder %s408, %s410
      %p414 = scmp.eq.s32.totalorder %s80, 0
      %p415 = por %p413, %p414
      %p416 = scmp.ne.s32.totalorder %s408, %s410
      %p417 = scmp.eq.s32.totalorder %s85, 1
      %p418 = por %p416, %p417
      %p419 = scmp.ne.s32.totalorder %s410, %s411
      %p420 = scmp.eq.s32.totalorder %s85, 0
      %p421 = por %p419, %p420
      %p422 = scmp.ne.s32.totalorder %s410, %s411
      %p423 = scmp.eq.s32.totalorder %s86, 1
      %p424 = por %p422, %p423
      %p426 = scmp.ne.s32.totalorder %s411, %s425
      %p427 = scmp.eq.s32.totalorder %s86, 0
      %p428 = por %p426, %p427
      %s430 = sadd.s32 %s429, 1
      %p433 = scmp.eq.s32.totalorder %s80, 1
      %p434 = scmp.ne.s32.totalorder %s429, %s431
      %p435 = scmp.eq.s32.totalorder %s80, 0
      %p436 = por %p434, %p435
      %p437 = scmp.ne.s32.totalorder %s429, %s431
      %p438 = scmp.eq.s32.totalorder %s85, 1
      %p439 = por %p437, %p438
      %p440 = scmp.ne.s32.totalorder %s431, %s432
      %p441 = scmp.eq.s32.totalorder %s85, 0
      %p442 = por %p440, %p441
      %p443 = scmp.ne.s32.totalorder %s431, %s432
      %p444 = scmp.eq.s32.totalorder %s86, 1
      %p445 = por %p443, %p444
      %p447 = scmp.ne.s32.totalorder %s432, %s446
      %p448 = scmp.eq.s32.totalorder %s86, 0
      %p449 = por %p447, %p448
      %s451 = sadd.s32 %s450, 1
      %p454 = scmp.eq.s32.totalorder %s80, 1
      %p455 = scmp.ne.s32.totalorder %s450, %s452
      %p456 = scmp.eq.s32.totalorder %s80, 0
      %p457 = por %p455, %p456
      %p458 = scmp.ne.s32.totalorder %s450, %s452
      %p459 = scmp.eq.s32.totalorder %s85, 1
      %p460 = por %p458, %p459
      %p461 = scmp.ne.s32.totalorder %s452, %s453
      %p462 = scmp.eq.s32.totalorder %s85, 0
      %p463 = por %p461, %p462
      %p464 = scmp.ne.s32.totalorder %s452, %s453
      %p465 = scmp.eq.s32.totalorder %s86, 1
      %p466 = por %p464, %p465
      %p468 = scmp.ne.s32.totalorder %s453, %s467
      %p469 = scmp.eq.s32.totalorder %s86, 0
      %p470 = por %p468, %p469
      %s472 = sadd.s32 %s471, 1
      %p475 = scmp.eq.s32.totalorder %s80, 1
      %p476 = scmp.ne.s32.totalorder %s471, %s473
      %p477 = scmp.eq.s32.totalorder %s80, 0
      %p478 = por %p476, %p477
      %p479 = scmp.ne.s32.totalorder %s471, %s473
      %p480 = scmp.eq.s32.totalorder %s85, 1
      %p481 = por %p479, %p480
      %p482 = scmp.ne.s32.totalorder %s473, %s474
      %p483 = scmp.eq.s32.totalorder %s85, 0
      %p484 = por %p482, %p483
      %p485 = scmp.ne.s32.totalorder %s473, %s474
      %p486 = scmp.eq.s32.totalorder %s86, 1
      %p487 = por %p485, %p486
      %p489 = scmp.ne.s32.totalorder %s474, %s488
      %p490 = scmp.eq.s32.totalorder %s86, 0
      %p491 = por %p489, %p490
      %s493 = sadd.s32 %s492, 1
      %p496 = scmp.eq.s32.totalorder %s80, 1
      %p497 = scmp.ne.s32.totalorder %s492, %s494
      %p498 = scmp.eq.s32.totalorder %s80, 0
      %p499 = por %p497, %p498
      %p500 = scmp.ne.s32.totalorder %s492, %s494
      %p501 = scmp.eq.s32.totalorder %s85, 1
      %p502 = por %p500, %p501
      %p503 = scmp.ne.s32.totalorder %s494, %s495
      %p504 = scmp.eq.s32.totalorder %s85, 0
      %p505 = por %p503, %p504
      %p506 = scmp.ne.s32.totalorder %s494, %s495
      %p507 = scmp.eq.s32.totalorder %s86, 1
      %p508 = por %p506, %p507
      %p510 = scmp.ne.s32.totalorder %s495, %s509
      %p511 = scmp.eq.s32.totalorder %s86, 0
      %p512 = por %p510, %p511
      %s514 = sadd.s32 %s513, 1
      %p517 = scmp.eq.s32.totalorder %s80, 1
      %p518 = scmp.ne.s32.totalorder %s513, %s515
      %p519 = scmp.eq.s32.totalorder %s80, 0
      %p520 = por %p518, %p519
      %p521 = scmp.ne.s32.totalorder %s513, %s515
      %p522 = scmp.eq.s32.totalorder %s85, 1
      %p523 = por %p521, %p522
      %p524 = scmp.ne.s32.totalorder %s515, %s516
      %p525 = scmp.eq.s32.totalorder %s85, 0
      %p526 = por %p524, %p525
      %p527 = scmp.ne.s32.totalorder %s515, %s516
      %p528 = scmp.eq.s32.totalorder %s86, 1
      %p529 = por %p527, %p528
      %p531 = scmp.ne.s32.totalorder %s516, %s530
      %p532 = scmp.eq.s32.totalorder %s86, 0
      %p533 = por %p531, %p532
      %s535 = sadd.s32 %s534, 1
      %p538 = scmp.eq.s32.totalorder %s80, 1
      %p539 = scmp.ne.s32.totalorder %s534, %s536
      %p540 = scmp.eq.s32.totalorder %s80, 0
      %p541 = por %p539, %p540
      %p542 = scmp.ne.s32.totalorder %s534, %s536
      %p543 = scmp.eq.s32.totalorder %s85, 1
      %p544 = por %p542, %p543
      %p545 = scmp.ne.s32.totalorder %s536, %s537
      %p546 = scmp.eq.s32.totalorder %s85, 0
      %p547 = por %p545, %p546
      %p548 = scmp.ne.s32.totalorder %s536, %s537
      %p549 = scmp.eq.s32.totalorder %s86, 1
      %p550 = por %p548, %p549
      %p552 = scmp.ne.s32.totalorder %s537, %s551
      %p553 = scmp.eq.s32.totalorder %s86, 0
      %p554 = por %p552, %p553
      %s556 = sadd.s32 %s555, 1
      %p559 = scmp.eq.s32.totalorder %s80, 1
      %p560 = scmp.ne.s32.totalorder %s555, %s557
      %p561 = scmp.eq.s32.totalorder %s80, 0
      %p562 = por %p560, %p561
      %p563 = scmp.ne.s32.totalorder %s555, %s557
      %p564 = scmp.eq.s32.totalorder %s85, 1
      %p565 = por %p563, %p564
      %p566 = scmp.ne.s32.totalorder %s557, %s558
      %p567 = scmp.eq.s32.totalorder %s85, 0
      %p568 = por %p566, %p567
      %p569 = scmp.ne.s32.totalorder %s557, %s558
      %p570 = scmp.eq.s32.totalorder %s86, 1
      %p571 = por %p569, %p570
      %p573 = scmp.ne.s32.totalorder %s558, %s572
      %p574 = scmp.eq.s32.totalorder %s86, 0
      %p575 = por %p573, %p574
      %s577 = sadd.s32 %s576, 1
      %p580 = scmp.eq.s32.totalorder %s80, 1
      %p581 = scmp.ne.s32.totalorder %s576, %s578
      %p582 = scmp.eq.s32.totalorder %s80, 0
      %p583 = por %p581, %p582
      %p584 = scmp.ne.s32.totalorder %s576, %s578
      %p585 = scmp.eq.s32.totalorder %s85, 1
      %p586 = por %p584, %p585
      %p587 = scmp.ne.s32.totalorder %s578, %s579
      %p588 = scmp.eq.s32.totalorder %s85, 0
      %p589 = por %p587, %p588
      %p590 = scmp.ne.s32.totalorder %s578, %s579
      %p591 = scmp.eq.s32.totalorder %s86, 1
      %p592 = por %p590, %p591
      %p594 = scmp.ne.s32.totalorder %s579, %s593
      %p595 = scmp.eq.s32.totalorder %s86, 0
      %p596 = por %p594, %p595
      %s598 = sadd.s32 %s597, 1
      %p601 = scmp.eq.s32.totalorder %s80, 1
      %p602 = scmp.ne.s32.totalorder %s597, %s599
      %p603 = scmp.eq.s32.totalorder %s80, 0
      %p604 = por %p602, %p603
      %p605 = scmp.ne.s32.totalorder %s597, %s599
      %p606 = scmp.eq.s32.totalorder %s85, 1
      %p607 = por %p605, %p606
      %p608 = scmp.ne.s32.totalorder %s599, %s600
      %p609 = scmp.eq.s32.totalorder %s85, 0
      %p610 = por %p608, %p609
      %p611 = scmp.ne.s32.totalorder %s599, %s600
      %p612 = scmp.eq.s32.totalorder %s86, 1
      %p613 = por %p611, %p612
      %p615 = scmp.ne.s32.totalorder %s600, %s614
      %p616 = scmp.eq.s32.totalorder %s86, 0
      %p617 = por %p615, %p616
      %s619 = sadd.s32 %s618, 1
      %p622 = scmp.eq.s32.totalorder %s80, 1
      %p623 = scmp.ne.s32.totalorder %s618, %s620
      %p624 = scmp.eq.s32.totalorder %s80, 0
      %p625 = por %p623, %p624
      %p626 = scmp.ne.s32.totalorder %s618, %s620
      %p627 = scmp.eq.s32.totalorder %s85, 1
      %p628 = por %p626, %p627
      %p629 = scmp.ne.s32.totalorder %s620, %s621
      %p630 = scmp.eq.s32.totalorder %s85, 0
      %p631 = por %p629, %p630
      %p632 = scmp.ne.s32.totalorder %s620, %s621
      %p633 = scmp.eq.s32.totalorder %s86, 1
      %p634 = por %p632, %p633
      %p636 = scmp.ne.s32.totalorder %s621, %s635
      %p637 = scmp.eq.s32.totalorder %s86, 0
      %p638 = por %p636, %p637
      %s640 = sadd.s32 %s639, 1
      %p643 = scmp.eq.s32.totalorder %s80, 1
      %p644 = scmp.ne.s32.totalorder %s639, %s641
      %p645 = scmp.eq.s32.totalorder %s80, 0
      %p646 = por %p644, %p645
      %p647 = scmp.ne.s32.totalorder %s639, %s641
      %p648 = scmp.eq.s32.totalorder %s85, 1
      %p649 = por %p647, %p648
      %p650 = scmp.ne.s32.totalorder %s641, %s642
      %p651 = scmp.eq.s32.totalorder %s85, 0
      %p652 = por %p650, %p651
      %p653 = scmp.ne.s32.totalorder %s641, %s642
      %p654 = scmp.eq.s32.totalorder %s86, 1
      %p655 = por %p653, %p654
      %p657 = scmp.ne.s32.totalorder %s642, %s656
      %p658 = scmp.eq.s32.totalorder %s86, 0
      %p659 = por %p657, %p658
      %s661 = sadd.s32 %s660, 1
      %p664 = scmp.eq.s32.totalorder %s80, 1
      %p665 = scmp.ne.s32.totalorder %s660, %s662
      %p666 = scmp.eq.s32.totalorder %s80, 0
      %p667 = por %p665, %p666
      %p668 = scmp.ne.s32.totalorder %s660, %s662
      %p669 = scmp.eq.s32.totalorder %s85, 1
      %p670 = por %p668, %p669
      %p671 = scmp.ne.s32.totalorder %s662, %s663
      %p672 = scmp.eq.s32.totalorder %s85, 0
      %p673 = por %p671, %p672
      %p674 = scmp.ne.s32.totalorder %s662, %s663
      %p675 = scmp.eq.s32.totalorder %s86, 1
      %p676 = por %p674, %p675
      %p678 = scmp.ne.s32.totalorder %s663, %s677
      %p679 = scmp.eq.s32.totalorder %s86, 0
      %p680 = por %p678, %p679
      %s682 = sadd.s32 %s681, 1
      %p685 = scmp.eq.s32.totalorder %s80, 1
      %p686 = scmp.ne.s32.totalorder %s681, %s683
      %p687 = scmp.eq.s32.totalorder %s80, 0
      %p688 = por %p686, %p687
      %p689 = scmp.ne.s32.totalorder %s681, %s683
      %p690 = scmp.eq.s32.totalorder %s85, 1
      %p691 = por %p689, %p690
      %p692 = scmp.ne.s32.totalorder %s683, %s684
      %p693 = scmp.eq.s32.totalorder %s85, 0
      %p694 = por %p692, %p693
      %p695 = scmp.ne.s32.totalorder %s683, %s684
      %p696 = scmp.eq.s32.totalorder %s86, 1
      %p697 = por %p695, %p696
      %p699 = scmp.ne.s32.totalorder %s684, %s698
      %p700 = scmp.eq.s32.totalorder %s86, 0
      %p701 = por %p699, %p700
      %s703 = sadd.s32 %s702, 1
      %p706 = scmp.eq.s32.totalorder %s80, 1
      %p707 = scmp.ne.s32.totalorder %s702, %s704
      %p708 = scmp.eq.s32.totalorder %s80, 0
      %p709 = por %p707, %p708
      %p710 = scmp.ne.s32.totalorder %s702, %s704
      %p711 = scmp.eq.s32.totalorder %s85, 1
      %p712 = por %p710, %p711
      %p713 = scmp.ne.s32.totalorder %s704, %s705
      %p714 = scmp.eq.s32.totalorder %s85, 0
      %p715 = por %p713, %p714
      %p716 = scmp.ne.s32.totalorder %s704, %s705
      %p717 = scmp.eq.s32.totalorder %s86, 1
      %p718 = por %p716, %p717
      %p720 = scmp.ne.s32.totalorder %s705, %s719
      %p721 = scmp.eq.s32.totalorder %s86, 0
      %p722 = por %p720, %p721
      %s724 = sadd.s32 %s723, 1
      %p727 = scmp.eq.s32.totalorder %s80, 1
      %p728 = scmp.ne.s32.totalorder %s723, %s725
      %p729 = scmp.eq.s32.totalorder %s80, 0
      %p730 = por %p728, %p729
      %p731 = scmp.ne.s32.totalorder %s723, %s725
      %p732 = scmp.eq.s32.totalorder %s85, 1
      %p733 = por %p731, %p732
      %p734 = scmp.ne.s32.totalorder %s725, %s726
      %p735 = scmp.eq.s32.totalorder %s85, 0
      %p736 = por %p734, %p735
      %p737 = scmp.ne.s32.totalorder %s725, %s726
      %p738 = scmp.eq.s32.totalorder %s86, 1
      %p739 = por %p737, %p738
      %p741 = scmp.ne.s32.totalorder %s726, %s740
      %p742 = scmp.eq.s32.totalorder %s86, 0
      %p743 = por %p741, %p742
      %s745 = sadd.s32 %s744, 1
      %p748 = scmp.eq.s32.totalorder %s80, 1
      %p749 = scmp.ne.s32.totalorder %s744, %s746
      %p750 = scmp.eq.s32.totalorder %s80, 0
      %p751 = por %p749, %p750
      %p752 = scmp.ne.s32.totalorder %s744, %s746
      %p753 = scmp.eq.s32.totalorder %s85, 1
      %p754 = por %p752, %p753
      %p755 = scmp.ne.s32.totalorder %s746, %s747
      %p756 = scmp.eq.s32.totalorder %s85, 0
      %p757 = por %p755, %p756
      %p758 = scmp.ne.s32.totalorder %s746, %s747
      %p759 = scmp.eq.s32.totalorder %s86, 1
      %p760 = por %p758, %p759
      %p762 = scmp.ne.s32.totalorder %s747, %s761
      %p763 = scmp.eq.s32.totalorder %s86, 0
      %p764 = por %p762, %p763
      %s766 = sadd.s32 %s765, 1
      %p769 = scmp.eq.s32.totalorder %s80, 1
      %p770 = scmp.ne.s32.totalorder %s765, %s767
      %p771 = scmp.eq.s32.totalorder %s80, 0
      %p772 = por %p770, %p771
      %p773 = scmp.ne.s32.totalorder %s765, %s767
      %p774 = scmp.eq.s32.totalorder %s85, 1
      %p775 = por %p773, %p774
      %p776 = scmp.ne.s32.totalorder %s767, %s768
      %p777 = scmp.eq.s32.totalorder %s85, 0
      %p778 = por %p776, %p777
      %p779 = scmp.ne.s32.totalorder %s767, %s768
      %p780 = scmp.eq.s32.totalorder %s86, 1
      %p781 = por %p779, %p780
      %p783 = scmp.ne.s32.totalorder %s768, %s782
      %p784 = scmp.eq.s32.totalorder %s86, 0
      %p785 = por %p783, %p784
      %s787 = sadd.s32 %s786, 1
      %p790 = scmp.eq.s32.totalorder %s80, 1
      %p791 = scmp.ne.s32.totalorder %s786, %s788
      %p792 = scmp.eq.s32.totalorder %s80, 0
      %p793 = por %p791, %p792
      %p794 = scmp.ne.s32.totalorder %s786, %s788
      %p795 = scmp.eq.s32.totalorder %s85, 1
      %p796 = por %p794, %p795
      %p797 = scmp.ne.s32.totalorder %s788, %s789
      %p798 = scmp.eq.s32.totalorder %s85, 0
      %p799 = por %p797, %p798
      %p800 = scmp.ne.s32.totalorder %s788, %s789
      %p801 = scmp.eq.s32.totalorder %s86, 1
      %p802 = por %p800, %p801
      %p804 = scmp.ne.s32.totalorder %s789, %s803
      %p805 = scmp.eq.s32.totalorder %s86, 0
      %p806 = por %p804, %p805
      %s808 = sadd.s32 %s807, 1
      %p811 = scmp.eq.s32.totalorder %s80, 1
      %p812 = scmp.ne.s32.totalorder %s807, %s809
      %p813 = scmp.eq.s32.totalorder %s80, 0
      %p814 = por %p812, %p813
      %p815 = scmp.ne.s32.totalorder %s807, %s809
      %p816 = scmp.eq.s32.totalorder %s85, 1
      %p817 = por %p815, %p816
      %p818 = scmp.ne.s32.totalorder %s809, %s810
      %p819 = scmp.eq.s32.totalorder %s85, 0
      %p820 = por %p818, %p819
      %p821 = scmp.ne.s32.totalorder %s809, %s810
      %p822 = scmp.eq.s32.totalorder %s86, 1
      %p823 = por %p821, %p822
      %p825 = scmp.ne.s32.totalorder %s810, %s824
      %p826 = scmp.eq.s32.totalorder %s86, 0
      %p827 = por %p825, %p826
      %s828 = ssub.s32 %s80, %s87
      %p829 = scmp.eq.s32.totalorder %s828, 0
      %s831 = sadd.s32 %s830, 1
      %s832 = scalar_select %p829, %s830, %s831
      %p835 = pneg %p829
      %p836 = scmp.eq.s32.totalorder %s80, 1
      %p837 = por %p835, %p836
      %p838 = scmp.ne.s32.totalorder %s830, %s833
      %p839 = scmp.eq.s32.totalorder %s80, 0
      %p840 = por %p838, %p839
      %p841 = scmp.ne.s32.totalorder %s830, %s833
      %p842 = scmp.eq.s32.totalorder %s85, 1
      %p843 = por %p841, %p842
      %p844 = scmp.ne.s32.totalorder %s833, %s834
      %p845 = scmp.eq.s32.totalorder %s85, 0
      %p846 = por %p844, %p845
      %p847 = scmp.ne.s32.totalorder %s833, %s834
      %p848 = scmp.eq.s32.totalorder %s86, 1
      %p849 = por %p847, %p848
      %p851 = scmp.ne.s32.totalorder %s834, %s850
      %p852 = scmp.eq.s32.totalorder %s86, 0
      %p853 = por %p851, %p852
      %p854 = scmp.le.s32.totalorder 1, %s80
      %p855 = scmp.lt.s32.totalorder %s80, 3
      %p856 = pnand %p854, %p855
      %p857 = pneg %p856
      // Predicated region
      $region9: #{tpu_custom_call.1} parent=5 // pred_check
        _
      $region10: #{tpu_custom_call.1} parent=5 // pred_check_branch
        %859 = sbr.rel (%p856) target = $region12
      $region11: #{tpu_custom_call.1} parent=5 // pred_region
        %s860 = ssub.s32 %s80, 1
        // Predicated region
        $region13: #{tpu_custom_call.1} parent=11 // pred_check
          %p861 = pneg %p127
        $region14: #{tpu_custom_call.1} parent=11 // pred_check_branch
          %863 = sbr.rel (%p861) target = $region16
        $region15: #{tpu_custom_call.1} parent=11 // pred_region
          _
        $region16: #{tpu_custom_call.1} parent=11 // pred_fallthru
          _
        // Predicated region
        $region17: #{tpu_custom_call.1} parent=11 // pred_check
          %p864 = pneg %p148
        $region18: #{tpu_custom_call.1} parent=11 // pred_check_branch
          %866 = sbr.rel (%p864) target = $region20
        $region19: #{tpu_custom_call.1} parent=11 // pred_region
          _
        $region20: #{tpu_custom_call.1} parent=11 // pred_fallthru
          _
        // Predicated region
        $region21: #{tpu_custom_call.1} parent=11 // pred_check
          %p867 = pneg %p169
        $region22: #{tpu_custom_call.1} parent=11 // pred_check_branch
          %869 = sbr.rel (%p867) target = $region24
        $region23: #{tpu_custom_call.1} parent=11 // pred_region
          _
        $region24: #{tpu_custom_call.1} parent=11 // pred_fallthru
          _
        // Predicated region
        $region25: #{tpu_custom_call.1} parent=11 // pred_check
          %p870 = pneg %p190
        $region26: #{tpu_custom_call.1} parent=11 // pred_check_branch
          %872 = sbr.rel (%p870) target = $region28
        $region27: #{tpu_custom_call.1} parent=11 // pred_region
          _
        $region28: #{tpu_custom_call.1} parent=11 // pred_fallthru
          _
        // Predicated region
        $region29: #{tpu_custom_call.1} parent=11 // pred_check
          %p873 = pneg %p211
        $region30: #{tpu_custom_call.1} parent=11 // pred_check_branch
          %875 = sbr.rel (%p873) target = $region32
        $region31: #{tpu_custom_call.1} parent=11 // pred_region
          _
        $region32: #{tpu_custom_call.1} parent=11 // pred_fallthru
          _
        // Predicated region
        $region33: #{tpu_custom_call.1} parent=11 // pred_check
          %p876 = pneg %p232
        $region34: #{tpu_custom_call.1} parent=11 // pred_check_branch
          %878 = sbr.rel (%p876) target = $region36
        $region35: #{tpu_custom_call.1} parent=11 // pred_region
          _
        $region36: #{tpu_custom_call.1} parent=11 // pred_fallthru
          _
        // Predicated region
        $region37: #{tpu_custom_call.1} parent=11 // pred_check
          %p879 = pneg %p253
        $region38: #{tpu_custom_call.1} parent=11 // pred_check_branch
          %881 = sbr.rel (%p879) target = $region40
        $region39: #{tpu_custom_call.1} parent=11 // pred_region
          _
        $region40: #{tpu_custom_call.1} parent=11 // pred_fallthru
          _
        // Predicated region
        $region41: #{tpu_custom_call.1} parent=11 // pred_check
          %p882 = pneg %p274
        $region42: #{tpu_custom_call.1} parent=11 // pred_check_branch
          %884 = sbr.rel (%p882) target = $region44
        $region43: #{tpu_custom_call.1} parent=11 // pred_region
          _
        $region44: #{tpu_custom_call.1} parent=11 // pred_fallthru
          _
        // Predicated region
        $region45: #{tpu_custom_call.1} parent=11 // pred_check
          %p885 = pneg %p295
        $region46: #{tpu_custom_call.1} parent=11 // pred_check_branch
          %887 = sbr.rel (%p885) target = $region48
        $region47: #{tpu_custom_call.1} parent=11 // pred_region
          _
        $region48: #{tpu_custom_call.1} parent=11 // pred_fallthru
          _
        // Predicated region
        $region49: #{tpu_custom_call.1} parent=11 // pred_check
          %p888 = pneg %p316
        $region50: #{tpu_custom_call.1} parent=11 // pred_check_branch
          %890 = sbr.rel (%p888) target = $region52
        $region51: #{tpu_custom_call.1} parent=11 // pred_region
          _
        $region52: #{tpu_custom_call.1} parent=11 // pred_fallthru
          _
        // Predicated region
        $region53: #{tpu_custom_call.1} parent=11 // pred_check
          %p891 = pneg %p337
        $region54: #{tpu_custom_call.1} parent=11 // pred_check_branch
          %893 = sbr.rel (%p891) target = $region56
        $region55: #{tpu_custom_call.1} parent=11 // pred_region
          _
        $region56: #{tpu_custom_call.1} parent=11 // pred_fallthru
          _
        // Predicated region
        $region57: #{tpu_custom_call.1} parent=11 // pred_check
          %p894 = pneg %p358
        $region58: #{tpu_custom_call.1} parent=11 // pred_check_branch
          %896 = sbr.rel (%p894) target = $region60
        $region59: #{tpu_custom_call.1} parent=11 // pred_region
          _
        $region60: #{tpu_custom_call.1} parent=11 // pred_fallthru
          _
        // Predicated region
        $region61: #{tpu_custom_call.1} parent=11 // pred_check
          %p897 = pneg %p379
        $region62: #{tpu_custom_call.1} parent=11 // pred_check_branch
          %899 = sbr.rel (%p897) target = $region64
        $region63: #{tpu_custom_call.1} parent=11 // pred_region
          _
        $region64: #{tpu_custom_call.1} parent=11 // pred_fallthru
          _
        // Predicated region
        $region65: #{tpu_custom_call.1} parent=11 // pred_check
          %p900 = pneg %p400
        $region66: #{tpu_custom_call.1} parent=11 // pred_check_branch
          %902 = sbr.rel (%p900) target = $region68
        $region67: #{tpu_custom_call.1} parent=11 // pred_region
          _
        $region68: #{tpu_custom_call.1} parent=11 // pred_fallthru
          _
        // Predicated region
        $region69: #{tpu_custom_call.1} parent=11 // pred_check
          %p903 = pneg %p421
        $region70: #{tpu_custom_call.1} parent=11 // pred_check_branch
          %905 = sbr.rel (%p903) target = $region72
        $region71: #{tpu_custom_call.1} parent=11 // pred_region
          _
        $region72: #{tpu_custom_call.1} parent=11 // pred_fallthru
          _
        // Predicated region
        $region73: #{tpu_custom_call.1} parent=11 // pred_check
          %p906 = pneg %p442
        $region74: #{tpu_custom_call.1} parent=11 // pred_check_branch
          %908 = sbr.rel (%p906) target = $region76
        $region75: #{tpu_custom_call.1} parent=11 // pred_region
          _
        $region76: #{tpu_custom_call.1} parent=11 // pred_fallthru
          _
        // Predicated region
        $region77: #{tpu_custom_call.1} parent=11 // pred_check
          %p909 = pneg %p463
        $region78: #{tpu_custom_call.1} parent=11 // pred_check_branch
          %911 = sbr.rel (%p909) target = $region80
        $region79: #{tpu_custom_call.1} parent=11 // pred_region
          _
        $region80: #{tpu_custom_call.1} parent=11 // pred_fallthru
          _
        // Predicated region
        $region81: #{tpu_custom_call.1} parent=11 // pred_check
          %p912 = pneg %p484
        $region82: #{tpu_custom_call.1} parent=11 // pred_check_branch
          %914 = sbr.rel (%p912) target = $region84
        $region83: #{tpu_custom_call.1} parent=11 // pred_region
          _
        $region84: #{tpu_custom_call.1} parent=11 // pred_fallthru
          _
        // Predicated region
        $region85: #{tpu_custom_call.1} parent=11 // pred_check
          %p915 = pneg %p505
        $region86: #{tpu_custom_call.1} parent=11 // pred_check_branch
          %917 = sbr.rel (%p915) target = $region88
        $region87: #{tpu_custom_call.1} parent=11 // pred_region
          _
        $region88: #{tpu_custom_call.1} parent=11 // pred_fallthru
          _
        // Predicated region
        $region89: #{tpu_custom_call.1} parent=11 // pred_check
          %p918 = pneg %p526
        $region90: #{tpu_custom_call.1} parent=11 // pred_check_branch
          %920 = sbr.rel (%p918) target = $region92
        $region91: #{tpu_custom_call.1} parent=11 // pred_region
          _
        $region92: #{tpu_custom_call.1} parent=11 // pred_fallthru
          _
        // Predicated region
        $region93: #{tpu_custom_call.1} parent=11 // pred_check
          %p921 = pneg %p547
        $region94: #{tpu_custom_call.1} parent=11 // pred_check_branch
          %923 = sbr.rel (%p921) target = $region96
        $region95: #{tpu_custom_call.1} parent=11 // pred_region
          _
        $region96: #{tpu_custom_call.1} parent=11 // pred_fallthru
          _
        // Predicated region
        $region97: #{tpu_custom_call.1} parent=11 // pred_check
          %p924 = pneg %p568
        $region98: #{tpu_custom_call.1} parent=11 // pred_check_branch
          %926 = sbr.rel (%p924) target = $region100
        $region99: #{tpu_custom_call.1} parent=11 // pred_region
          _
        $region100: #{tpu_custom_call.1} parent=11 // pred_fallthru
          _
        // Predicated region
        $region101: #{tpu_custom_call.1} parent=11 // pred_check
          %p927 = pneg %p589
        $region102: #{tpu_custom_call.1} parent=11 // pred_check_branch
          %929 = sbr.rel (%p927) target = $region104
        $region103: #{tpu_custom_call.1} parent=11 // pred_region
          _
        $region104: #{tpu_custom_call.1} parent=11 // pred_fallthru
          _
        // Predicated region
        $region105: #{tpu_custom_call.1} parent=11 // pred_check
          %p930 = pneg %p610
        $region106: #{tpu_custom_call.1} parent=11 // pred_check_branch
          %932 = sbr.rel (%p930) target = $region108
        $region107: #{tpu_custom_call.1} parent=11 // pred_region
          _
        $region108: #{tpu_custom_call.1} parent=11 // pred_fallthru
          _
        // Predicated region
        $region109: #{tpu_custom_call.1} parent=11 // pred_check
          %p933 = pneg %p631
        $region110: #{tpu_custom_call.1} parent=11 // pred_check_branch
          %935 = sbr.rel (%p933) target = $region112
        $region111: #{tpu_custom_call.1} parent=11 // pred_region
          _
        $region112: #{tpu_custom_call.1} parent=11 // pred_fallthru
          _
        // Predicated region
        $region113: #{tpu_custom_call.1} parent=11 // pred_check
          %p936 = pneg %p652
        $region114: #{tpu_custom_call.1} parent=11 // pred_check_branch
          %938 = sbr.rel (%p936) target = $region116
        $region115: #{tpu_custom_call.1} parent=11 // pred_region
          _
        $region116: #{tpu_custom_call.1} parent=11 // pred_fallthru
          _
        // Predicated region
        $region117: #{tpu_custom_call.1} parent=11 // pred_check
          %p939 = pneg %p673
        $region118: #{tpu_custom_call.1} parent=11 // pred_check_branch
          %941 = sbr.rel (%p939) target = $region120
        $region119: #{tpu_custom_call.1} parent=11 // pred_region
          _
        $region120: #{tpu_custom_call.1} parent=11 // pred_fallthru
          _
        // Predicated region
        $region121: #{tpu_custom_call.1} parent=11 // pred_check
          %p942 = pneg %p694
        $region122: #{tpu_custom_call.1} parent=11 // pred_check_branch
          %944 = sbr.rel (%p942) target = $region124
        $region123: #{tpu_custom_call.1} parent=11 // pred_region
          _
        $region124: #{tpu_custom_call.1} parent=11 // pred_fallthru
          _
        // Predicated region
        $region125: #{tpu_custom_call.1} parent=11 // pred_check
          %p945 = pneg %p715
        $region126: #{tpu_custom_call.1} parent=11 // pred_check_branch
          %947 = sbr.rel (%p945) target = $region128
        $region127: #{tpu_custom_call.1} parent=11 // pred_region
          _
        $region128: #{tpu_custom_call.1} parent=11 // pred_fallthru
          _
        // Predicated region
        $region129: #{tpu_custom_call.1} parent=11 // pred_check
          %p948 = pneg %p736
        $region130: #{tpu_custom_call.1} parent=11 // pred_check_branch
          %950 = sbr.rel (%p948) target = $region132
        $region131: #{tpu_custom_call.1} parent=11 // pred_region
          _
        $region132: #{tpu_custom_call.1} parent=11 // pred_fallthru
          _
        // Predicated region
        $region133: #{tpu_custom_call.1} parent=11 // pred_check
          %p951 = pneg %p757
        $region134: #{tpu_custom_call.1} parent=11 // pred_check_branch
          %953 = sbr.rel (%p951) target = $region136
        $region135: #{tpu_custom_call.1} parent=11 // pred_region
          _
        $region136: #{tpu_custom_call.1} parent=11 // pred_fallthru
          _
        // Predicated region
        $region137: #{tpu_custom_call.1} parent=11 // pred_check
          %p954 = pneg %p778
        $region138: #{tpu_custom_call.1} parent=11 // pred_check_branch
          %956 = sbr.rel (%p954) target = $region140
        $region139: #{tpu_custom_call.1} parent=11 // pred_region
          _
        $region140: #{tpu_custom_call.1} parent=11 // pred_fallthru
          _
        // Predicated region
        $region141: #{tpu_custom_call.1} parent=11 // pred_check
          %p957 = pneg %p799
        $region142: #{tpu_custom_call.1} parent=11 // pred_check_branch
          %959 = sbr.rel (%p957) target = $region144
        $region143: #{tpu_custom_call.1} parent=11 // pred_region
          _
        $region144: #{tpu_custom_call.1} parent=11 // pred_fallthru
          _
        // Predicated region
        $region145: #{tpu_custom_call.1} parent=11 // pred_check
          %p960 = pneg %p820
        $region146: #{tpu_custom_call.1} parent=11 // pred_check_branch
          %962 = sbr.rel (%p960) target = $region148
        $region147: #{tpu_custom_call.1} parent=11 // pred_region
          _
        $region148: #{tpu_custom_call.1} parent=11 // pred_fallthru
          _
      $region12: #{tpu_custom_call.1} parent=5 // pred_fallthru
        _
      %p963 = scmp.lt.s32.totalorder %s80, 2
      // Predicated region
      $region149: #{tpu_custom_call.1} parent=5 // pred_check
        %p964 = pneg %p963
      $region150: #{tpu_custom_call.1} parent=5 // pred_check_branch
        %966 = sbr.rel (%p964) target = $region152
      $region151: #{tpu_custom_call.1} parent=5 // pred_region
        // Predicated region
        $region153: #{tpu_custom_call.1} parent=151 // pred_check
          %p967 = pneg %p100
        $region154: #{tpu_custom_call.1} parent=151 // pred_check_branch
          %969 = sbr.rel (%p967) target = $region156
        $region155: #{tpu_custom_call.1} parent=151 // pred_region
          %p970 = scmp.lt.s32.totalorder %s80, 1
          %s971 = scalar_select %p970, %s80, 1
          %s972 = smul.addr %s971, 3
          %s973 = smul.addr %s972, 8
          %s974 = scalar_lea.vmem %s1, %s973
        $region156: #{tpu_custom_call.1} parent=151 // pred_fallthru
          _
      $region152: #{tpu_custom_call.1} parent=5 // pred_fallthru
        _
      %p975 = scmp.le.s32.totalorder 1, %s80
      %p976 = scmp.lt.s32.totalorder %s80, 3
      %p977 = pnand %p975, %p976
      %p978 = pneg %p977
      // Predicated region
      $region157: #{tpu_custom_call.1} parent=5 // pred_check
        _
      $region158: #{tpu_custom_call.1} parent=5 // pred_check_branch
        %980 = sbr.rel (%p977) target = $region160
      $region159: #{tpu_custom_call.1} parent=5 // pred_region
        %s981 = ssub.s32 %s80, 1
        %p982 = scmp.lt.s32.totalorder %s85, 1
        %s983 = scalar_select %p982, %s85, 1
        %s984 = smul.addr %s983, 3
        %s985 = smul.addr %s984, 8
        %s986 = scalar_lea.vmem %s1, %s985
        %p987 = pneg %p106
        %p988 = pneg %p103
        %p989 = pneg %p127
        %p990 = pneg %p124
        %p991 = pneg %p148
        %p992 = pneg %p145
        %p993 = pneg %p169
        %p994 = pneg %p166
        %p995 = pneg %p190
        %p996 = pneg %p187
        %p997 = pneg %p211
        %p998 = pneg %p208
        %p999 = pneg %p232
        %p1000 = pneg %p229
        %p1001 = pneg %p253
        %p1002 = pneg %p250
        %p1003 = pneg %p274
        %p1004 = pneg %p271
        %p1005 = pneg %p295
        %p1006 = pneg %p292
        %p1007 = pneg %p316
        %p1008 = pneg %p313
        %p1009 = pneg %p337
        %p1010 = pneg %p334
        %p1011 = pneg %p358
        %p1012 = pneg %p355
        %p1013 = pneg %p379
        %p1014 = pneg %p376
        %p1015 = pneg %p400
        %p1016 = pneg %p397
        %p1017 = pneg %p421
        %p1018 = pneg %p418
        %p1019 = pneg %p442
        %p1020 = pneg %p439
        %p1021 = pneg %p463
        %p1022 = pneg %p460
        %p1023 = pneg %p484
        %p1024 = pneg %p481
        %p1025 = pneg %p505
        %p1026 = pneg %p502
        %p1027 = pneg %p526
        %p1028 = pneg %p523
        %p1029 = pneg %p547
        %p1030 = pneg %p544
        %p1031 = pneg %p568
        %p1032 = pneg %p565
        %p1033 = pneg %p589
        %p1034 = pneg %p586
        %p1035 = pneg %p610
        %p1036 = pneg %p607
        %p1037 = pneg %p631
        %p1038 = pneg %p628
        %p1039 = pneg %p652
        %p1040 = pneg %p649
        %p1041 = pneg %p673
        %p1042 = pneg %p670
        %p1043 = pneg %p694
        %p1044 = pneg %p691
        %p1045 = pneg %p715
        %p1046 = pneg %p712
        %p1047 = pneg %p736
        %p1048 = pneg %p733
        %p1049 = pneg %p757
        %p1050 = pneg %p754
        %p1051 = pneg %p778
        %p1052 = pneg %p775
        %p1053 = pneg %p799
        %p1054 = pneg %p796
        %p1055 = pneg %p820
        %p1056 = pneg %p817
        %p1057 = pneg %p846
        %p1058 = pneg %p843
        %s1059 = sand.u32 %s833, 1
        %s1060 = scalar_lea.sflag [#allocation3], %s1059
        %s1061 = sand.u32 %s833, 1
        %s1062 = smul.addr %s1061, 24
        %s1063 = scalar_lea.vmem [#allocation2], %s1062
        %p1064 = scmp.lt.s32.totalorder %s85, 1
        %s1065 = scalar_select %p1064, %s85, 1
        %s1066 = smul.addr %s1065, 3
        %s1067 = smul.addr %s1066, 8
        %s1068 = scalar_lea.vmem %s1, %s1067
        %v1069 = vld [vmem:[%s1068] sm:$0xff]
        %v1070 = vld [vmem:[%s1068 + $0x8] sm:$0xff]
        %v1071 = vld [vmem:[%s1068 + $0x10] sm:$0xff]
        %v1072 = vld [vmem:[%s31] sm:$0xff]
        %v1073 = vld [vmem:[%s33] sm:$0xff]
        %v1074 = vld [vmem:[%s27] sm:$0xff]
        %v1075 = vld [vmem:[%s29] sm:$0xff]
        %v1076 = vrot.slane %v1069, 4
        %v1077 = vadd.f32 %v1069, %v1076
        %v1078 = vrot.slane %v1077, 2
        %v1079 = vadd.f32 %v1077, %v1078
        %v1080 = vrot.slane %v1079, 1
        %v1081 = vadd.f32 %v1079, %v1080
        %v1082 = vrot.slane %v1070, 4
        %v1083 = vadd.f32 %v1070, %v1082
        %v1084 = vrot.slane %v1083, 2
        %v1085 = vadd.f32 %v1083, %v1084
        %v1086 = vrot.slane %v1085, 1
        %v1087 = vadd.f32 %v1085, %v1086
        %vm1088 = vcmask 523264
        %v1089 = vsel %vm1088, %v1071, 0.0
        %v1090 = vrot.slane %v1089, 4
        %v1091 = vadd.f32 %v1089, %v1090
        %v1092 = vrot.slane %v1091, 2
        %v1093 = vadd.f32 %v1091, %v1092
        %v1094 = vrot.slane %v1093, 1
        %v1095 = vadd.f32 %v1093, %v1094
        %v1096 = vrcp.pop 8.0
        %v1097 = vmul.f32 %v1081, %v1096
        %v1098 = vmul.f32 %v1087, %v1096
        %v1099 = vmul.f32 %v1095, %v1096
        %v1100 = vsub.f32 %v1069, %v1097
        %v1101 = vsub.f32 %v1070, %v1098
        %v1102 = vsub.f32 %v1071, %v1099
        %v1103 = vmul.f32 %v1100, %v1100
        %v1104 = vmul.f32 %v1101, %v1101
        %v1105 = vmul.f32 %v1102, %v1102
        %v1106 = vrot.slane %v1103, 4
        %v1107 = vadd.f32 %v1103, %v1106
        %v1108 = vrot.slane %v1107, 2
        %v1109 = vadd.f32 %v1107, %v1108
        %v1110 = vrot.slane %v1109, 1
        %v1111 = vadd.f32 %v1109, %v1110
        %v1112 = vrot.slane %v1104, 4
        %v1113 = vadd.f32 %v1104, %v1112
        %v1114 = vrot.slane %v1113, 2
        %v1115 = vadd.f32 %v1113, %v1114
        %v1116 = vrot.slane %v1115, 1
        %v1117 = vadd.f32 %v1115, %v1116
        %v1118 = vsel %vm1088, %v1105, 0.0
        %v1119 = vrot.slane %v1118, 4
        %v1120 = vadd.f32 %v1118, %v1119
        %v1121 = vrot.slane %v1120, 2
        %v1122 = vadd.f32 %v1120, %v1121
        %v1123 = vrot.slane %v1122, 1
        %v1124 = vadd.f32 %v1122, %v1123
        %v1125 = vmul.f32 %v1111, %v1096
        %v1126 = vmul.f32 %v1117, %v1096
        %v1127 = vmul.f32 %v1124, %v1096
        %v1128 = vadd.f32 %v1125, 1e-05
        %v1129 = vadd.f32 %v1126, 1e-05
        %v1130 = vadd.f32 %v1127, 1e-05
        %v1131 = vrsqrt.pop %v1128
        %v1132 = vrsqrt.pop %v1129
        %v1133 = vrsqrt.pop %v1130
        %v1134 = vmul.f32 %v1100, %v1131
        %v1135 = vmul.f32 %v1101, %v1132
        %v1136 = vmul.f32 %v1102, %v1133
        %1138 = vset.pattern.permute.xlu0 0
        %1139 = vperm.xlu0 %1138, %v1074
        %v1140 = vpop.permute.xlu0 %1139
        %v1142 = vmul.f32 %v1134, %v1140
        %v1143 = vmul.f32 %v1135, %v1140
        %v1144 = vmul.f32 %v1136, %v1140
        %1146 = vset.pattern.permute.xlu0 0
        %1147 = vperm.xlu0 %1146, %v1075
        %v1148 = vpop.permute.xlu0 %1147
        %v1150 = vadd.f32 %v1142, %v1148
        %v1151 = vadd.f32 %v1143, %v1148
        %v1152 = vadd.f32 %v1144, %v1148
        %v1153 = vld [vmem:[%s3] sm:$0xff]
        %v1154 = vld [vmem:[%s3 + $0x8] sm:$0xff]
        %v1155 = vld [vmem:[%s3 + $0x10] sm:$0xff]
        %v1156 = vld [vmem:[%s3 + $0x18] sm:$0xff]
        %v1157 = vld [vmem:[%s3 + $0x20] sm:$0xff]
        %v1158 = vld [vmem:[%s3 + $0x28] sm:$0xff]
        %v1159 = vld [vmem:[%s3 + $0x30] sm:$0xff]
        %v1160 = vld [vmem:[%s3 + $0x38] sm:$0xff]
        %v1161 = vld [vmem:[%s3 + $0x40] sm:$0xff]
        %v1162 = vld [vmem:[%s3 + $0x48] sm:$0xff]
        %v1163 = vld [vmem:[%s3 + $0x50] sm:$0xff]
        %v1164 = vld [vmem:[%s3 + $0x58] sm:$0xff]
        %v1165 = vld [vmem:[%s3 + $0x60] sm:$0xff]
        %v1166 = vld [vmem:[%s3 + $0x68] sm:$0xff]
        %v1167 = vld [vmem:[%s3 + $0x70] sm:$0xff]
        %v1168 = vld [vmem:[%s3 + $0x78] sm:$0xff]
        %v1169 = vld [vmem:[%s3 + $0x80] sm:$0xff]
        %v1170 = vld [vmem:[%s3 + $0x88] sm:$0xff]
        %v1171 = vld [vmem:[%s3 + $0x90] sm:$0xff]
        %v1172 = vld [vmem:[%s3 + $0x98] sm:$0xff]
        %v1173 = vld [vmem:[%s3 + $0xa0] sm:$0xff]
        %v1174 = vld [vmem:[%s3 + $0xa8] sm:$0xff]
        %v1175 = vld [vmem:[%s3 + $0xb0] sm:$0xff]
        %v1176 = vld [vmem:[%s3 + $0xb8] sm:$0xff]
        %v1177 = vld [vmem:[%s3 + $0xc0] sm:$0xff]
        %v1178 = vld [vmem:[%s3 + $0xc8] sm:$0xff]
        %v1179 = vld [vmem:[%s3 + $0xd0] sm:$0xff]
        %v1180 = vld [vmem:[%s3 + $0xd8] sm:$0xff]
        %v1181 = vld [vmem:[%s3 + $0xe0] sm:$0xff]
        %v1182 = vld [vmem:[%s3 + $0xe8] sm:$0xff]
        %v1183 = vld [vmem:[%s3 + $0xf0] sm:$0xff]
        %v1184 = vld [vmem:[%s3 + $0xf8] sm:$0xff]
        %v1185 = vld [vmem:[%s3 + $0x100] sm:$0xff]
        %v1186 = vld [vmem:[%s3 + $0x108] sm:$0xff]
        %v1187 = vld [vmem:[%s3 + $0x110] sm:$0xff]
        %v1188 = vld [vmem:[%s3 + $0x118] sm:$0xff]
        %v1189 = vld [vmem:[%s3 + $0x120] sm:$0xff]
        %v1190 = vld [vmem:[%s3 + $0x128] sm:$0xff]
        %v1191 = vld [vmem:[%s3 + $0x130] sm:$0xff]
        %v1192 = vld [vmem:[%s3 + $0x138] sm:$0xff]
        %v1193 = vld [vmem:[%s3 + $0x140] sm:$0xff]
        %v1194 = vld [vmem:[%s3 + $0x148] sm:$0xff]
        %v1195 = vld [vmem:[%s3 + $0x150] sm:$0xff]
        %v1196 = vld [vmem:[%s3 + $0x158] sm:$0xff]
        %v1197 = vld [vmem:[%s3 + $0x160] sm:$0xff]
        %v1198 = vld [vmem:[%s3 + $0x168] sm:$0xff]
        %v1199 = vld [vmem:[%s3 + $0x170] sm:$0xff]
        %v1200 = vld [vmem:[%s3 + $0x178] sm:$0xff]
        %v1201 = vld [vmem:[%s3 + $0x180] sm:$0xff]
        %v1202 = vld [vmem:[%s3 + $0x188] sm:$0xff]
        %v1203 = vld [vmem:[%s3 + $0x190] sm:$0xff]
        %v1204 = vld [vmem:[%s3 + $0x198] sm:$0xff]
        %v1205 = vld [vmem:[%s3 + $0x1a0] sm:$0xff]
        %v1206 = vld [vmem:[%s3 + $0x1a8] sm:$0xff]
        %v1207 = vld [vmem:[%s3 + $0x1b0] sm:$0xff]
        %v1208 = vld [vmem:[%s3 + $0x1b8] sm:$0xff]
        %v1209 = vld [vmem:[%s3 + $0x1c0] sm:$0xff]
        %v1210 = vld [vmem:[%s3 + $0x1c8] sm:$0xff]
        %v1211 = vld [vmem:[%s3 + $0x1d0] sm:$0xff]
        %v1212 = vld [vmem:[%s3 + $0x1d8] sm:$0xff]
        %v1213 = vld [vmem:[%s3 + $0x1e0] sm:$0xff]
        %v1214 = vld [vmem:[%s3 + $0x1e8] sm:$0xff]
        %v1215 = vld [vmem:[%s3 + $0x1f0] sm:$0xff]
        %v1216 = vld [vmem:[%s3 + $0x1f8] sm:$0xff]
        %v1217 = vld [vmem:[%s5] sm:$0xff]
        %v1218 = vld [vmem:[%s5 + $0x8] sm:$0xff]
        %v1219 = vld [vmem:[%s5 + $0x10] sm:$0xff]
        %v1220 = vld [vmem:[%s5 + $0x18] sm:$0xff]
        %v1221 = vld [vmem:[%s5 + $0x20] sm:$0xff]
        %v1222 = vld [vmem:[%s5 + $0x28] sm:$0xff]
        %v1223 = vld [vmem:[%s5 + $0x30] sm:$0xff]
        %v1224 = vld [vmem:[%s5 + $0x38] sm:$0xff]
        %v1225 = vld [vmem:[%s5 + $0x40] sm:$0xff]
        %v1226 = vld [vmem:[%s5 + $0x48] sm:$0xff]
        %v1227 = vld [vmem:[%s5 + $0x50] sm:$0xff]
        %v1228 = vld [vmem:[%s5 + $0x58] sm:$0xff]
        %v1229 = vld [vmem:[%s5 + $0x60] sm:$0xff]
        %v1230 = vld [vmem:[%s5 + $0x68] sm:$0xff]
        %v1231 = vld [vmem:[%s5 + $0x70] sm:$0xff]
        %v1232 = vld [vmem:[%s5 + $0x78] sm:$0xff]
        %v1233 = vld [vmem:[%s5 + $0x80] sm:$0xff]
        %v1234 = vld [vmem:[%s5 + $0x88] sm:$0xff]
        %v1235 = vld [vmem:[%s5 + $0x90] sm:$0xff]
        %v1236 = vld [vmem:[%s5 + $0x98] sm:$0xff]
        %v1237 = vld [vmem:[%s5 + $0xa0] sm:$0xff]
        %v1238 = vld [vmem:[%s5 + $0xa8] sm:$0xff]
        %v1239 = vld [vmem:[%s5 + $0xb0] sm:$0xff]
        %v1240 = vld [vmem:[%s5 + $0xb8] sm:$0xff]
        %v1241 = vld [vmem:[%s5 + $0xc0] sm:$0xff]
        %v1242 = vld [vmem:[%s5 + $0xc8] sm:$0xff]
        %v1243 = vld [vmem:[%s5 + $0xd0] sm:$0xff]
        %v1244 = vld [vmem:[%s5 + $0xd8] sm:$0xff]
        %v1245 = vld [vmem:[%s5 + $0xe0] sm:$0xff]
        %v1246 = vld [vmem:[%s5 + $0xe8] sm:$0xff]
        %v1247 = vld [vmem:[%s5 + $0xf0] sm:$0xff]
        %v1248 = vld [vmem:[%s5 + $0xf8] sm:$0xff]
        %v1249 = vld [vmem:[%s5 + $0x100] sm:$0xff]
        %v1250 = vld [vmem:[%s5 + $0x108] sm:$0xff]
        %v1251 = vld [vmem:[%s5 + $0x110] sm:$0xff]
        %v1252 = vld [vmem:[%s5 + $0x118] sm:$0xff]
        %v1253 = vld [vmem:[%s5 + $0x120] sm:$0xff]
        %v1254 = vld [vmem:[%s5 + $0x128] sm:$0xff]
        %v1255 = vld [vmem:[%s5 + $0x130] sm:$0xff]
        %v1256 = vld [vmem:[%s5 + $0x138] sm:$0xff]
        %v1257 = vld [vmem:[%s5 + $0x140] sm:$0xff]
        %v1258 = vld [vmem:[%s5 + $0x148] sm:$0xff]
        %v1259 = vld [vmem:[%s5 + $0x150] sm:$0xff]
        %v1260 = vld [vmem:[%s5 + $0x158] sm:$0xff]
        %v1261 = vld [vmem:[%s5 + $0x160] sm:$0xff]
        %v1262 = vld [vmem:[%s5 + $0x168] sm:$0xff]
        %v1263 = vld [vmem:[%s5 + $0x170] sm:$0xff]
        %v1264 = vld [vmem:[%s5 + $0x178] sm:$0xff]
        %v1265 = vld [vmem:[%s5 + $0x180] sm:$0xff]
        %v1266 = vld [vmem:[%s5 + $0x188] sm:$0xff]
        %v1267 = vld [vmem:[%s5 + $0x190] sm:$0xff]
        %v1268 = vld [vmem:[%s5 + $0x198] sm:$0xff]
        %v1269 = vld [vmem:[%s5 + $0x1a0] sm:$0xff]
        %v1270 = vld [vmem:[%s5 + $0x1a8] sm:$0xff]
        %v1271 = vld [vmem:[%s5 + $0x1b0] sm:$0xff]
        %v1272 = vld [vmem:[%s5 + $0x1b8] sm:$0xff]
        %v1273 = vld [vmem:[%s5 + $0x1c0] sm:$0xff]
        %v1274 = vld [vmem:[%s5 + $0x1c8] sm:$0xff]
        %v1275 = vld [vmem:[%s5 + $0x1d0] sm:$0xff]
        %v1276 = vld [vmem:[%s5 + $0x1d8] sm:$0xff]
        %v1277 = vld [vmem:[%s5 + $0x1e0] sm:$0xff]
        %v1278 = vld [vmem:[%s5 + $0x1e8] sm:$0xff]
        %v1279 = vld [vmem:[%s5 + $0x1f0] sm:$0xff]
        %v1280 = vld [vmem:[%s5 + $0x1f8] sm:$0xff]
        %v1281 = vld [vmem:[%s7] sm:$0xff]
        %v1282 = vld [vmem:[%s7 + $0x8] sm:$0xff]
        %v1283 = vld [vmem:[%s7 + $0x10] sm:$0xff]
        %v1284 = vld [vmem:[%s7 + $0x18] sm:$0xff]
        %v1285 = vld [vmem:[%s7 + $0x20] sm:$0xff]
        %v1286 = vld [vmem:[%s7 + $0x28] sm:$0xff]
        %v1287 = vld [vmem:[%s7 + $0x30] sm:$0xff]
        %v1288 = vld [vmem:[%s7 + $0x38] sm:$0xff]
        %v1289 = vld [vmem:[%s7 + $0x40] sm:$0xff]
        %v1290 = vld [vmem:[%s7 + $0x48] sm:$0xff]
        %v1291 = vld [vmem:[%s7 + $0x50] sm:$0xff]
        %v1292 = vld [vmem:[%s7 + $0x58] sm:$0xff]
        %v1293 = vld [vmem:[%s7 + $0x60] sm:$0xff]
        %v1294 = vld [vmem:[%s7 + $0x68] sm:$0xff]
        %v1295 = vld [vmem:[%s7 + $0x70] sm:$0xff]
        %v1296 = vld [vmem:[%s7 + $0x78] sm:$0xff]
        %v1297 = vld [vmem:[%s7 + $0x80] sm:$0xff]
        %v1298 = vld [vmem:[%s7 + $0x88] sm:$0xff]
        %v1299 = vld [vmem:[%s7 + $0x90] sm:$0xff]
        %v1300 = vld [vmem:[%s7 + $0x98] sm:$0xff]
        %v1301 = vld [vmem:[%s7 + $0xa0] sm:$0xff]
        %v1302 = vld [vmem:[%s7 + $0xa8] sm:$0xff]
        %v1303 = vld [vmem:[%s7 + $0xb0] sm:$0xff]
        %v1304 = vld [vmem:[%s7 + $0xb8] sm:$0xff]
        %v1305 = vld [vmem:[%s7 + $0xc0] sm:$0xff]
        %v1306 = vld [vmem:[%s7 + $0xc8] sm:$0xff]
        %v1307 = vld [vmem:[%s7 + $0xd0] sm:$0xff]
        %v1308 = vld [vmem:[%s7 + $0xd8] sm:$0xff]
        %v1309 = vld [vmem:[%s7 + $0xe0] sm:$0xff]
        %v1310 = vld [vmem:[%s7 + $0xe8] sm:$0xff]
        %v1311 = vld [vmem:[%s7 + $0xf0] sm:$0xff]
        %v1312 = vld [vmem:[%s7 + $0xf8] sm:$0xff]
        %v1313 = vld [vmem:[%s7 + $0x100] sm:$0xff]
        %v1314 = vld [vmem:[%s7 + $0x108] sm:$0xff]
        %v1315 = vld [vmem:[%s7 + $0x110] sm:$0xff]
        %v1316 = vld [vmem:[%s7 + $0x118] sm:$0xff]
        %v1317 = vld [vmem:[%s9] sm:$0xff]
        %v1318 = vld [vmem:[%s9 + $0x8] sm:$0xff]
        %v1319 = vld [vmem:[%s9 + $0x10] sm:$0xff]
        %v1320 = vld [vmem:[%s9 + $0x18] sm:$0xff]
        %v1321 = vld [vmem:[%s9 + $0x20] sm:$0xff]
        %v1322 = vld [vmem:[%s9 + $0x28] sm:$0xff]
        %v1323 = vld [vmem:[%s9 + $0x30] sm:$0xff]
        %v1324 = vld [vmem:[%s9 + $0x38] sm:$0xff]
        %v1325 = vld [vmem:[%s9 + $0x40] sm:$0xff]
        %v1326 = vld [vmem:[%s9 + $0x48] sm:$0xff]
        %v1327 = vld [vmem:[%s9 + $0x50] sm:$0xff]
        %v1328 = vld [vmem:[%s9 + $0x58] sm:$0xff]
        %v1329 = vld [vmem:[%s9 + $0x60] sm:$0xff]
        %v1330 = vld [vmem:[%s9 + $0x68] sm:$0xff]
        %v1331 = vld [vmem:[%s9 + $0x70] sm:$0xff]
        %v1332 = vld [vmem:[%s9 + $0x78] sm:$0xff]
        %v1333 = vld [vmem:[%s9 + $0x80] sm:$0xff]
        %v1334 = vld [vmem:[%s9 + $0x88] sm:$0xff]
        %v1335 = vld [vmem:[%s9 + $0x90] sm:$0xff]
        %v1336 = vld [vmem:[%s9 + $0x98] sm:$0xff]
        %v1337 = vld [vmem:[%s9 + $0xa0] sm:$0xff]
        %v1338 = vld [vmem:[%s9 + $0xa8] sm:$0xff]
        %v1339 = vld [vmem:[%s9 + $0xb0] sm:$0xff]
        %v1340 = vld [vmem:[%s9 + $0xb8] sm:$0xff]
        %v1341 = vld [vmem:[%s9 + $0xc0] sm:$0xff]
        %v1342 = vld [vmem:[%s9 + $0xc8] sm:$0xff]
        %v1343 = vld [vmem:[%s9 + $0xd0] sm:$0xff]
        %v1344 = vld [vmem:[%s9 + $0xd8] sm:$0xff]
        %v1345 = vld [vmem:[%s9 + $0xe0] sm:$0xff]
        %v1346 = vld [vmem:[%s9 + $0xe8] sm:$0xff]
        %v1347 = vld [vmem:[%s9 + $0xf0] sm:$0xff]
        %v1348 = vld [vmem:[%s9 + $0xf8] sm:$0xff]
        %v1349 = vld [vmem:[%s9 + $0x100] sm:$0xff]
        %v1350 = vld [vmem:[%s9 + $0x108] sm:$0xff]
        %v1351 = vld [vmem:[%s9 + $0x110] sm:$0xff]
        %v1352 = vld [vmem:[%s9 + $0x118] sm:$0xff]
        %v1353 = vld [vmem:[%s11] sm:$0xff]
        %v1354 = vld [vmem:[%s11 + $0x8] sm:$0xff]
        %v1355 = vld [vmem:[%s13] sm:$0xff]
        %v1356 = vld [vmem:[%s13 + $0x8] sm:$0xff]
        %v1357 = vld [vmem:[%s35] sm:$0xff]
        %v1358 = vld [vmem:[%s37] sm:$0xff]
        %v1359 = vld [vmem:[%s43] sm:$0xff]
        %v1360 = vld [vmem:[%s43 + $0x8] sm:$0xff]
        %v1361 = vld [vmem:[%s43 + $0x10] sm:$0xff]
        %v1362 = vld [vmem:[%s43 + $0x18] sm:$0xff]
        %v1363 = vld [vmem:[%s45] sm:$0xff]
        %v1364 = vld [vmem:[%s45 + $0x8] sm:$0xff]
        %v1365 = vld [vmem:[%s45 + $0x10] sm:$0xff]
        %v1366 = vld [vmem:[%s45 + $0x18] sm:$0xff]
        %v1367 = vld [vmem:[%s47] sm:$0xff]
        %v1368 = vld [vmem:[%s49] sm:$0xff]
        %v1369 = vld [vmem:[%s59] sm:$0xff]
        %v1370 = vld [vmem:[%s61] sm:$0xff]
        %v1371 = vld [vmem:[%s67] sm:$0xff]
        %v1372 = vld [vmem:[%s67 + $0x8] sm:$0xff]
        %v1373 = vld [vmem:[%s67 + $0x10] sm:$0xff]
        %v1374 = vld [vmem:[%s67 + $0x18] sm:$0xff]
        %v1375 = vld [vmem:[%s67 + $0x20] sm:$0xff]
        %v1376 = vld [vmem:[%s67 + $0x28] sm:$0xff]
        %v1377 = vld [vmem:[%s67 + $0x30] sm:$0xff]
        %v1378 = vld [vmem:[%s67 + $0x38] sm:$0xff]
        %v1379 = vld [vmem:[%s67 + $0x40] sm:$0xff]
        %v1380 = vld [vmem:[%s67 + $0x48] sm:$0xff]
        %v1381 = vld [vmem:[%s67 + $0x50] sm:$0xff]
        %v1382 = vld [vmem:[%s67 + $0x58] sm:$0xff]
        %v1383 = vld [vmem:[%s67 + $0x60] sm:$0xff]
        %v1384 = vld [vmem:[%s67 + $0x68] sm:$0xff]
        %v1385 = vld [vmem:[%s67 + $0x70] sm:$0xff]
        %v1386 = vld [vmem:[%s67 + $0x78] sm:$0xff]
        %v1387 = vld [vmem:[%s67 + $0x80] sm:$0xff]
        %v1388 = vld [vmem:[%s67 + $0x88] sm:$0xff]
        %1392 = vrot.lane.b32.xlu0 %v1150, 64
        %v1393 = vpop.permute.xlu0 %1392
        %1394 = vrot.lane.b32.xlu0 %v1151, 64
        %v1395 = vpop.permute.xlu0 %1394
        %1396 = vrot.lane.b32.xlu0 %v1152, 64
        %v1397 = vpop.permute.xlu0 %1396
        %v1398 = vsel %vm1088, %v1393, %v1395
        %v1399 = vsel %vm1088, %v1395, %v1397
        %1402 = vmatprep.subr.mxu0 %v1184
        %1403 = vmatpush1.msra.mxu0 %v1183
        %1404 = vmatprep.subr.mxu0 %v1182
        %1405 = vmatpush1.msra.mxu0 %v1181
        %1406 = vmatprep.subr.mxu0 %v1180
        %1407 = vmatpush1.msra.mxu0 %v1179
        %1408 = vmatprep.subr.mxu0 %v1178
        %1409 = vmatpush1.msra.mxu0 %v1177
        %1410 = vmatprep.subr.mxu0 %v1176
        %1411 = vmatpush1.msra.mxu0 %v1175
        %1412 = vmatprep.subr.mxu0 %v1174
        %1413 = vmatpush1.msra.mxu0 %v1173
        %1414 = vmatprep.subr.mxu0 %v1172
        %1415 = vmatpush1.msra.mxu0 %v1171
        %1416 = vmatprep.subr.mxu0 %v1170
        %1417 = vmatpush1.msra.mxu0 %v1169
        %1418 = vmatprep.subr.mxu0 %v1168
        %1419 = vmatpush1.msra.mxu0 %v1167
        %1420 = vmatprep.subr.mxu0 %v1166
        %1421 = vmatpush1.msra.mxu0 %v1165
        %1422 = vmatprep.subr.mxu0 %v1164
        %1423 = vmatpush1.msra.mxu0 %v1163
        %1424 = vmatprep.subr.mxu0 %v1162
        %1425 = vmatpush1.msra.mxu0 %v1161
        %1426 = vmatprep.subr.mxu0 %v1160
        %1427 = vmatpush1.msra.mxu0 %v1159
        %1428 = vmatprep.subr.mxu0 %v1158
        %1429 = vmatpush1.msra.mxu0 %v1157
        %1430 = vmatprep.subr.mxu0 %v1156
        %1431 = vmatpush1.msra.mxu0 %v1155
        %1432 = vmatprep.subr.mxu0 %v1154
        %1433 = vmatpush1.msra.mxu0 %v1153
        %1434 = vmatprep.subr.mxu0 %v1216
        %1435 = vmatpush2.msra.mxu0 %v1215
        %1436 = vmatprep.subr.mxu0 %v1214
        %1437 = vmatpush2.msra.mxu0 %v1213
        %1438 = vmatprep.subr.mxu0 %v1212
        %1439 = vmatpush2.msra.mxu0 %v1211
        %1440 = vmatprep.subr.mxu0 %v1210
        %1441 = vmatpush2.msra.mxu0 %v1209
        %1442 = vmatprep.subr.mxu0 %v1208
        %1443 = vmatpush2.msra.mxu0 %v1207
        %1444 = vmatprep.subr.mxu0 %v1206
        %1445 = vmatpush2.msra.mxu0 %v1205
        %1446 = vmatprep.subr.mxu0 %v1204
        %1447 = vmatpush2.msra.mxu0 %v1203
        %1448 = vmatprep.subr.mxu0 %v1202
        %1449 = vmatpush2.msra.mxu0 %v1201
        %1450 = vmatprep.subr.mxu0 %v1200
        %1451 = vmatpush2.msra.mxu0 %v1199
        %1452 = vmatprep.subr.mxu0 %v1198
        %1453 = vmatpush2.msra.mxu0 %v1197
        %1454 = vmatprep.subr.mxu0 %v1196
        %1455 = vmatpush2.msra.mxu0 %v1195
        %1456 = vmatprep.subr.mxu0 %v1194
        %1457 = vmatpush2.msra.mxu0 %v1193
        %1458 = vmatprep.subr.mxu0 %v1192
        %1459 = vmatpush2.msra.mxu0 %v1191
        %1460 = vmatprep.subr.mxu0 %v1190
        %1461 = vmatpush2.msra.mxu0 %v1189
        %1462 = vmatprep.subr.mxu0 %v1188
        %1463 = vmatpush2.msra.mxu0 %v1187
        %1464 = vmatprep.subr.mxu0 %v1186
        %1465 = vmatpush2.msra.mxu0 %v1185
        %1466 = vmatprep.mubr.f32.mxu0 %v1399
        %1467 = vmatmul.mubr.f32.gmra.mxu0 %v1398
        %v1468 = vpop.f32.mrf.mxu0
        %v1469 = vadd.f32 0.0, %v1468
        %v1470 = vpop.f32.mrf.mxu0
        %v1471 = vadd.f32 0.0, %v1470
        %1472 = vdwg.mxu0
        %1473 = vmatprep.subr.mxu0 %v1248
        %1474 = vmatpush1.msra.mxu0 %v1247
        %1475 = vmatprep.subr.mxu0 %v1246
        %1476 = vmatpush1.msra.mxu0 %v1245
        %1477 = vmatprep.subr.mxu0 %v1244
        %1478 = vmatpush1.msra.mxu0 %v1243
        %1479 = vmatprep.subr.mxu0 %v1242
        %1480 = vmatpush1.msra.mxu0 %v1241
        %1481 = vmatprep.subr.mxu0 %v1240
        %1482 = vmatpush1.msra.mxu0 %v1239
        %1483 = vmatprep.subr.mxu0 %v1238
        %1484 = vmatpush1.msra.mxu0 %v1237
        %1485 = vmatprep.subr.mxu0 %v1236
        %1486 = vmatpush1.msra.mxu0 %v1235
        %1487 = vmatprep.subr.mxu0 %v1234
        %1488 = vmatpush1.msra.mxu0 %v1233
        %1489 = vmatprep.subr.mxu0 %v1232
        %1490 = vmatpush1.msra.mxu0 %v1231
        %1491 = vmatprep.subr.mxu0 %v1230
        %1492 = vmatpush1.msra.mxu0 %v1229
        %1493 = vmatprep.subr.mxu0 %v1228
        %1494 = vmatpush1.msra.mxu0 %v1227
        %1495 = vmatprep.subr.mxu0 %v1226
        %1496 = vmatpush1.msra.mxu0 %v1225
        %1497 = vmatprep.subr.mxu0 %v1224
        %1498 = vmatpush1.msra.mxu0 %v1223
        %1499 = vmatprep.subr.mxu0 %v1222
        %1500 = vmatpush1.msra.mxu0 %v1221
        %1501 = vmatprep.subr.mxu0 %v1220
        %1502 = vmatpush1.msra.mxu0 %v1219
        %1503 = vmatprep.subr.mxu0 %v1218
        %1504 = vmatpush1.msra.mxu0 %v1217
        %1505 = vmatprep.subr.mxu0 %v1280
        %1506 = vmatpush2.msra.mxu0 %v1279
        %1507 = vmatprep.subr.mxu0 %v1278
        %1508 = vmatpush2.msra.mxu0 %v1277
        %1509 = vmatprep.subr.mxu0 %v1276
        %1510 = vmatpush2.msra.mxu0 %v1275
        %1511 = vmatprep.subr.mxu0 %v1274
        %1512 = vmatpush2.msra.mxu0 %v1273
        %1513 = vmatprep.subr.mxu0 %v1272
        %1514 = vmatpush2.msra.mxu0 %v1271
        %1515 = vmatprep.subr.mxu0 %v1270
        %1516 = vmatpush2.msra.mxu0 %v1269
        %1517 = vmatprep.subr.mxu0 %v1268
        %1518 = vmatpush2.msra.mxu0 %v1267
        %1519 = vmatprep.subr.mxu0 %v1266
        %1520 = vmatpush2.msra.mxu0 %v1265
        %1521 = vmatprep.subr.mxu0 %v1264
        %1522 = vmatpush2.msra.mxu0 %v1263
        %1523 = vmatprep.subr.mxu0 %v1262
        %1524 = vmatpush2.msra.mxu0 %v1261
        %1525 = vmatprep.subr.mxu0 %v1260
        %1526 = vmatpush2.msra.mxu0 %v1259
        %1527 = vmatprep.subr.mxu0 %v1258
        %1528 = vmatpush2.msra.mxu0 %v1257
        %1529 = vmatprep.subr.mxu0 %v1256
        %1530 = vmatpush2.msra.mxu0 %v1255
        %1531 = vmatprep.subr.mxu0 %v1254
        %1532 = vmatpush2.msra.mxu0 %v1253
        %1533 = vmatprep.subr.mxu0 %v1252
        %1534 = vmatpush2.msra.mxu0 %v1251
        %1535 = vmatprep.subr.mxu0 %v1250
        %1536 = vmatpush2.msra.mxu0 %v1249
        %1537 = vmatprep.mubr.f32.mxu0 %v1399
        %1538 = vmatmul.mubr.f32.gmra.mxu0 %v1398
        %v1539 = vpop.f32.mrf.mxu0
        %v1540 = vadd.f32 0.0, %v1539
        %v1541 = vpop.f32.mrf.mxu0
        %v1542 = vadd.f32 0.0, %v1541
        %1543 = vdwg.mxu0
        %v1544 = vmul.f32 %v1469, %v1353
        %v1545 = vmul.f32 %v1471, %v1354
        %v1546 = vmul.f32 %v1540, %v1355
        %v1547 = vmul.f32 %v1542, %v1356
        %v1548 = vsub.f32 %v1544, %v1546
        %v1549 = vsub.f32 %v1545, %v1547
        %v1550 = vmul.f32 %v1469, %v1355
        %v1551 = vmul.f32 %v1471, %v1356
        %v1552 = vmul.f32 %v1540, %v1353
        %v1553 = vmul.f32 %v1542, %v1354
        %v1554 = vadd.f32 %v1550, %v1552
        %v1555 = vadd.f32 %v1551, %v1553
        %vm1556 = vcmask 130048
        %v1558 = vsel %vm1556, %v1555, 0
        %1560 = vmatprep.subr.mxu0 %v1348
        %1561 = vmatpush1.msra.mxu0 %v1347
        %1562 = vmatprep.subr.mxu0 %v1346
        %1563 = vmatpush1.msra.mxu0 %v1345
        %1564 = vmatprep.subr.mxu0 %v1344
        %1565 = vmatpush1.msra.mxu0 %v1343
        %1566 = vmatprep.subr.mxu0 %v1342
        %1567 = vmatpush1.msra.mxu0 %v1341
        %1568 = vmatprep.subr.mxu0 %v1340
        %1569 = vmatpush1.msra.mxu0 %v1339
        %1570 = vmatprep.subr.mxu0 %v1338
        %1571 = vmatpush1.msra.mxu0 %v1337
        %1572 = vmatprep.subr.mxu0 %v1336
        %1573 = vmatpush1.msra.mxu0 %v1335
        %1574 = vmatprep.subr.mxu0 %v1334
        %1575 = vmatpush1.msra.mxu0 %v1333
        %1576 = vmatprep.subr.mxu0 %v1332
        %1577 = vmatpush1.msra.mxu0 %v1331
        %1578 = vmatprep.subr.mxu0 %v1330
        %1579 = vmatpush1.msra.mxu0 %v1329
        %1580 = vmatprep.subr.mxu0 %v1328
        %1581 = vmatpush1.msra.mxu0 %v1327
        %1582 = vmatprep.subr.mxu0 %v1326
        %1583 = vmatpush1.msra.mxu0 %v1325
        %1584 = vmatprep.subr.mxu0 %v1324
        %1585 = vmatpush1.msra.mxu0 %v1323
        %1586 = vmatprep.subr.mxu0 %v1322
        %1587 = vmatpush1.msra.mxu0 %v1321
        %1588 = vmatprep.subr.mxu0 %v1320
        %1589 = vmatpush1.msra.mxu0 %v1319
        %1590 = vmatprep.subr.mxu0 %v1318
        %1591 = vmatpush1.msra.mxu0 %v1317
        %1592 = vmatprep.subr.mxu0 0.0
        %1593 = vmatpush2.msra.mxu0 0.0
        %1594 = vmatprep.subr.mxu0 0.0
        %1595 = vmatpush2.msra.mxu0 0.0
        %1596 = vmatprep.subr.mxu0 0.0
        %1597 = vmatpush2.msra.mxu0 0.0
        %1598 = vmatprep.subr.mxu0 0.0
        %1599 = vmatpush2.msra.mxu0 0.0
        %1600 = vmatprep.subr.mxu0 0.0
        %1601 = vmatpush2.msra.mxu0 0.0
        %1602 = vmatprep.subr.mxu0 0.0
        %1603 = vmatpush2.msra.mxu0 0.0
        %1604 = vmatprep.subr.mxu0 0.0
        %1605 = vmatpush2.msra.mxu0 0.0
        %1606 = vmatprep.subr.mxu0 0.0
        %1607 = vmatpush2.msra.mxu0 0.0
        %1608 = vmatprep.subr.mxu0 0.0
        %1609 = vmatpush2.msra.mxu0 0.0
        %1610 = vmatprep.subr.mxu0 0.0
        %1611 = vmatpush2.msra.mxu0 0.0
        %1612 = vmatprep.subr.mxu0 0.0
        %1613 = vmatpush2.msra.mxu0 0.0
        %1614 = vmatprep.subr.mxu0 0.0
        %1615 = vmatpush2.msra.mxu0 0.0
        %1616 = vmatprep.subr.mxu0 0.0
        %1617 = vmatpush2.msra.mxu0 0.0
        %1618 = vmatprep.subr.mxu0 0.0
        %1619 = vmatpush2.msra.mxu0 0.0
        %1620 = vmatprep.subr.mxu0 %v1352
        %1621 = vmatpush2.msra.mxu0 %v1351
        %1622 = vmatprep.subr.mxu0 %v1350
        %1623 = vmatpush2.msra.mxu0 %v1349
        %1624 = vmatprep.mubr.f32.mxu0 %v1558
        %1625 = vmatmul.mubr.f32.gmra.mxu0 %v1554
        %v1626 = vpop.f32.mrf.mxu0
        %v1627 = vadd.f32 0.0, %v1626
        %v1628 = vpop.f32.mrf.mxu0
        %v1629 = vadd.f32 0.0, %v1628
        %1630 = vdwg.mxu0
        %v1632 = vsel %vm1556, %v1549, 0
        %1634 = vmatprep.subr.mxu0 %v1312
        %1635 = vmatpush1.msra.mxu0 %v1311
        %1636 = vmatprep.subr.mxu0 %v1310
        %1637 = vmatpush1.msra.mxu0 %v1309
        %1638 = vmatprep.subr.mxu0 %v1308
        %1639 = vmatpush1.msra.mxu0 %v1307
        %1640 = vmatprep.subr.mxu0 %v1306
        %1641 = vmatpush1.msra.mxu0 %v1305
        %1642 = vmatprep.subr.mxu0 %v1304
        %1643 = vmatpush1.msra.mxu0 %v1303
        %1644 = vmatprep.subr.mxu0 %v1302
        %1645 = vmatpush1.msra.mxu0 %v1301
        %1646 = vmatprep.subr.mxu0 %v1300
        %1647 = vmatpush1.msra.mxu0 %v1299
        %1648 = vmatprep.subr.mxu0 %v1298
        %1649 = vmatpush1.msra.mxu0 %v1297
        %1650 = vmatprep.subr.mxu0 %v1296
        %1651 = vmatpush1.msra.mxu0 %v1295
        %1652 = vmatprep.subr.mxu0 %v1294
        %1653 = vmatpush1.msra.mxu0 %v1293
        %1654 = vmatprep.subr.mxu0 %v1292
        %1655 = vmatpush1.msra.mxu0 %v1291
        %1656 = vmatprep.subr.mxu0 %v1290
        %1657 = vmatpush1.msra.mxu0 %v1289
        %1658 = vmatprep.subr.mxu0 %v1288
        %1659 = vmatpush1.msra.mxu0 %v1287
        %1660 = vmatprep.subr.mxu0 %v1286
        %1661 = vmatpush1.msra.mxu0 %v1285
        %1662 = vmatprep.subr.mxu0 %v1284
        %1663 = vmatpush1.msra.mxu0 %v1283
        %1664 = vmatprep.subr.mxu0 %v1282
        %1665 = vmatpush1.msra.mxu0 %v1281
        %1666 = vmatprep.subr.mxu0 0.0
        %1667 = vmatpush2.msra.mxu0 0.0
        %1668 = vmatprep.subr.mxu0 0.0
        %1669 = vmatpush2.msra.mxu0 0.0
        %1670 = vmatprep.subr.mxu0 0.0
        %1671 = vmatpush2.msra.mxu0 0.0
        %1672 = vmatprep.subr.mxu0 0.0
        %1673 = vmatpush2.msra.mxu0 0.0
        %1674 = vmatprep.subr.mxu0 0.0
        %1675 = vmatpush2.msra.mxu0 0.0
        %1676 = vmatprep.subr.mxu0 0.0
        %1677 = vmatpush2.msra.mxu0 0.0
        %1678 = vmatprep.subr.mxu0 0.0
        %1679 = vmatpush2.msra.mxu0 0.0
        %1680 = vmatprep.subr.mxu0 0.0
        %1681 = vmatpush2.msra.mxu0 0.0
        %1682 = vmatprep.subr.mxu0 0.0
        %1683 = vmatpush2.msra.mxu0 0.0
        %1684 = vmatprep.subr.mxu0 0.0
        %1685 = vmatpush2.msra.mxu0 0.0
        %1686 = vmatprep.subr.mxu0 0.0
        %1687 = vmatpush2.msra.mxu0 0.0
        %1688 = vmatprep.subr.mxu0 0.0
        %1689 = vmatpush2.msra.mxu0 0.0
        %1690 = vmatprep.subr.mxu0 0.0
        %1691 = vmatpush2.msra.mxu0 0.0
        %1692 = vmatprep.subr.mxu0 0.0
        %1693 = vmatpush2.msra.mxu0 0.0
        %1694 = vmatprep.subr.mxu0 %v1316
        %1695 = vmatpush2.msra.mxu0 %v1315
        %1696 = vmatprep.subr.mxu0 %v1314
        %1697 = vmatpush2.msra.mxu0 %v1313
        %1698 = vmatprep.mubr.f32.mxu0 %v1632
        %1699 = vmatmul.mubr.f32.gmra.mxu0 %v1548
        %v1700 = vpop.f32.mrf.mxu0
        %v1701 = vadd.f32 %v1627, %v1700
        %v1702 = vpop.f32.mrf.mxu0
        %v1703 = vadd.f32 %v1629, %v1702
        %1704 = vdwg.mxu0
        %v1705 = vrot.slane %v1701, 4
        %v1706 = vadd.f32 %v1701, %v1705
        %v1707 = vrot.slane %v1706, 2
        %v1708 = vadd.f32 %v1706, %v1707
        %v1709 = vrot.slane %v1708, 1
        %v1710 = vadd.f32 %v1708, %v1709
        %v1711 = vrot.slane %v1703, 4
        %v1712 = vadd.f32 %v1703, %v1711
        %v1713 = vrot.slane %v1712, 2
        %v1714 = vadd.f32 %v1712, %v1713
        %v1715 = vrot.slane %v1714, 1
        %v1716 = vadd.f32 %v1714, %v1715
        %v1717 = vmul.f32 %v1710, %v1096
        %v1718 = vmul.f32 %v1716, %v1096
        %v1719 = vsub.f32 %v1701, %v1717
        %v1720 = vsub.f32 %v1703, %v1718
        %v1721 = vmul.f32 %v1719, %v1719
        %v1722 = vmul.f32 %v1720, %v1720
        %v1723 = vrot.slane %v1721, 4
        %v1724 = vadd.f32 %v1721, %v1723
        %v1725 = vrot.slane %v1724, 2
        %v1726 = vadd.f32 %v1724, %v1725
        %v1727 = vrot.slane %v1726, 1
        %v1728 = vadd.f32 %v1726, %v1727
        %v1729 = vrot.slane %v1722, 4
        %v1730 = vadd.f32 %v1722, %v1729
        %v1731 = vrot.slane %v1730, 2
        %v1732 = vadd.f32 %v1730, %v1731
        %v1733 = vrot.slane %v1732, 1
        %v1734 = vadd.f32 %v1732, %v1733
        %v1735 = vmul.f32 %v1728, %v1096
        %v1736 = vmul.f32 %v1734, %v1096
        %v1737 = vadd.f32 %v1735, 1e-05
        %v1738 = vadd.f32 %v1736, 1e-05
        %v1739 = vrsqrt.pop %v1737
        %v1740 = vrsqrt.pop %v1738
        %v1741 = vmul.f32 %v1719, %v1739
        %v1742 = vmul.f32 %v1720, %v1740
        %1744 = vset.pattern.permute.xlu0 0
        %1745 = vperm.xlu0 %1744, %v1072
        %v1746 = vpop.permute.xlu0 %1745
        %v1748 = vmul.f32 %v1741, %v1746
        %v1749 = vmul.f32 %v1742, %v1746
        %1751 = vset.pattern.permute.xlu0 0
        %1752 = vperm.xlu0 %1751, %v1073
        %v1753 = vpop.permute.xlu0 %1752
        %v1755 = vadd.f32 %v1748, %v1753
        %v1756 = vadd.f32 %v1749, %v1753
        %1758 = vset.pattern.permute.xlu0 0
        %1759 = vperm.xlu0 %1758, %v1363
        %v1760 = vpop.permute.xlu0 %1759
        %1763 = vset.pattern.permute.xlu0 0
        %1764 = vperm.xlu0 %1763, %v1364
        %v1765 = vpop.permute.xlu0 %1764
        %1768 = vset.pattern.permute.xlu0 0
        %1769 = vperm.xlu0 %1768, %v1365
        %v1770 = vpop.permute.xlu0 %1769
        %1773 = vset.pattern.permute.xlu0 0
        %1774 = vperm.xlu0 %1773, %v1366
        %v1775 = vpop.permute.xlu0 %1774
        %vm1777 = vcmask 64512
        %v1779 = vsel %vm1777, %v1359, 0
        %v1782 = vsel %vm1777, %v1360, 0
        %v1785 = vsel %vm1777, %v1361, 0
        %v1788 = vsel %vm1777, %v1362, 0
        %1790 = vmatprep.subr.mxu0 0.0
        %1791 = vmatpush1.msra.mxu0 0.0
        %1792 = vmatprep.subr.mxu0 0.0
        %1793 = vmatpush1.msra.mxu0 0.0
        %1794 = vmatprep.subr.mxu0 0.0
        %1795 = vmatpush1.msra.mxu0 0.0
        %1796 = vmatprep.subr.mxu0 0.0
        %1797 = vmatpush1.msra.mxu0 0.0
        %1798 = vmatprep.subr.mxu0 0.0
        %1799 = vmatpush1.msra.mxu0 0.0
        %1800 = vmatprep.subr.mxu0 0.0
        %1801 = vmatpush1.msra.mxu0 0.0
        %1802 = vmatprep.subr.mxu0 0.0
        %1803 = vmatpush1.msra.mxu0 0.0
        %1804 = vmatprep.subr.mxu0 0.0
        %1805 = vmatpush1.msra.mxu0 0.0
        %1806 = vmatprep.subr.mxu0 0.0
        %1807 = vmatpush1.msra.mxu0 0.0
        %1808 = vmatprep.subr.mxu0 0.0
        %1809 = vmatpush1.msra.mxu0 0.0
        %1810 = vmatprep.subr.mxu0 0.0
        %1811 = vmatpush1.msra.mxu0 0.0
        %1812 = vmatprep.subr.mxu0 0.0
        %1813 = vmatpush1.msra.mxu0 0.0
        %1814 = vmatprep.subr.mxu0 0.0
        %1815 = vmatpush1.msra.mxu0 0.0
        %1816 = vmatprep.subr.mxu0 0.0
        %1817 = vmatpush1.msra.mxu0 0.0
        %1818 = vmatprep.subr.mxu0 0.0
        %1819 = vmatpush1.msra.mxu0 0.0
        %1820 = vmatprep.subr.mxu0 %v1756
        %1821 = vmatpush1.msra.mxu0 %v1755
        %1822 = vmatprep.subr.mxu0 0.0
        %1823 = vmatpush2.msra.mxu0 0.0
        %1824 = vmatprep.subr.mxu0 0.0
        %1825 = vmatpush2.msra.mxu0 0.0
        %1826 = vmatprep.subr.mxu0 0.0
        %1827 = vmatpush2.msra.mxu0 0.0
        %1828 = vmatprep.subr.mxu0 0.0
        %1829 = vmatpush2.msra.mxu0 0.0
        %1830 = vmatprep.subr.mxu0 0.0
        %1831 = vmatpush2.msra.mxu0 0.0
        %1832 = vmatprep.subr.mxu0 0.0
        %1833 = vmatpush2.msra.mxu0 0.0
        %1834 = vmatprep.subr.mxu0 0.0
        %1835 = vmatpush2.msra.mxu0 0.0
        %1836 = vmatprep.subr.mxu0 0.0
        %1837 = vmatpush2.msra.mxu0 0.0
        %1838 = vmatprep.subr.mxu0 0.0
        %1839 = vmatpush2.msra.mxu0 0.0
        %1840 = vmatprep.subr.mxu0 0.0
        %1841 = vmatpush2.msra.mxu0 0.0
        %1842 = vmatprep.subr.mxu0 0.0
        %1843 = vmatpush2.msra.mxu0 0.0
        %1844 = vmatprep.subr.mxu0 0.0
        %1845 = vmatpush2.msra.mxu0 0.0
        %1846 = vmatprep.subr.mxu0 0.0
        %1847 = vmatpush2.msra.mxu0 0.0
        %1848 = vmatprep.subr.mxu0 0.0
        %1849 = vmatpush2.msra.mxu0 0.0
        %1850 = vmatprep.subr.mxu0 0.0
        %1851 = vmatpush2.msra.mxu0 0.0
        %1852 = vmatprep.subr.mxu0 0.0
        %1853 = vmatpush2.msra.mxu0 0.0
        %1854 = vmatprep.mubr.f32.mxu0 0.0
        %1855 = vmatmul.mubr.f32.gmra.mxu0 %v1779
        %v1856 = vpop.f32.mrf.mxu0
        %v1857 = vadd.f32 %v1760, %v1856
        %v1858 = vpop.f32.mrf.mxu0
        %v1859 = vadd.f32 %v1760, %v1858
        %1860 = vmatprep.mubr.f32.mxu0 0.0
        %1861 = vmatmul.mubr.f32.gmra.mxu0 %v1782
        %v1862 = vpop.f32.mrf.mxu0
        %v1863 = vadd.f32 %v1765, %v1862
        %v1864 = vpop.f32.mrf.mxu0
        %v1865 = vadd.f32 %v1765, %v1864
        %1866 = vmatprep.mubr.f32.mxu0 0.0
        %1867 = vmatmul.mubr.f32.gmra.mxu0 %v1785
        %v1868 = vpop.f32.mrf.mxu0
        %v1869 = vadd.f32 %v1770, %v1868
        %v1870 = vpop.f32.mrf.mxu0
        %v1871 = vadd.f32 %v1770, %v1870
        %1872 = vmatprep.mubr.f32.mxu0 0.0
        %1873 = vmatmul.mubr.f32.gmra.mxu0 %v1788
        %v1874 = vpop.f32.mrf.mxu0
        %v1875 = vadd.f32 %v1775, %v1874
        %v1876 = vpop.f32.mrf.mxu0
        %v1877 = vadd.f32 %v1775, %v1876
        %1878 = vdwg.mxu0
        %v1879 = vmul.f32 %v1857, 0.5
        %v1880 = vmul.f32 %v1859, 0.5
        %v1881 = vmul.f32 %v1863, 0.5
        %v1882 = vmul.f32 %v1865, 0.5
        %v1883 = vmul.f32 %v1869, 0.5
        %v1884 = vmul.f32 %v1871, 0.5
        %v1885 = vmul.f32 %v1875, 0.5
        %v1886 = vmul.f32 %v1877, 0.5
        %v1887 = vmul.f32 %v1857, 0.70710677
        %v1888 = vmul.f32 %v1859, 0.70710677
        %v1889 = vmul.f32 %v1863, 0.70710677
        %v1890 = vmul.f32 %v1865, 0.70710677
        %v1891 = vmul.f32 %v1869, 0.70710677
        %v1892 = vmul.f32 %v1871, 0.70710677
        %v1893 = vmul.f32 %v1875, 0.70710677
        %v1894 = vmul.f32 %v1877, 0.70710677
        %v1895 = vand.u32 2147483647, %v1887
        %v1896 = vand.u32 2147483647, %v1888
        %v1897 = vand.u32 2147483647, %v1889
        %v1898 = vand.u32 2147483647, %v1890
        %v1899 = vand.u32 2147483647, %v1891
        %v1900 = vand.u32 2147483647, %v1892
        %v1901 = vand.u32 2147483647, %v1893
        %v1902 = vand.u32 2147483647, %v1894
        %v1903 = vmul.f32 %v1895, 0.3275911
        %v1904 = vmul.f32 %v1896, 0.3275911
        %v1905 = vmul.f32 %v1897, 0.3275911
        %v1906 = vmul.f32 %v1898, 0.3275911
        %v1907 = vmul.f32 %v1899, 0.3275911
        %v1908 = vmul.f32 %v1900, 0.3275911
        %v1909 = vmul.f32 %v1901, 0.3275911
        %v1910 = vmul.f32 %v1902, 0.3275911
        %v1911 = vadd.f32 %v1903, 1.0
        %v1912 = vadd.f32 %v1904, 1.0
        %v1913 = vadd.f32 %v1905, 1.0
        %v1914 = vadd.f32 %v1906, 1.0
        %v1915 = vadd.f32 %v1907, 1.0
        %v1916 = vadd.f32 %v1908, 1.0
        %v1917 = vadd.f32 %v1909, 1.0
        %v1918 = vadd.f32 %v1910, 1.0
        %v1919 = vrcp.pop %v1911
        %v1920 = vmul.f32 1.0, %v1919
        %v1921 = vrcp.pop %v1912
        %v1922 = vmul.f32 1.0, %v1921
        %v1923 = vrcp.pop %v1913
        %v1924 = vmul.f32 1.0, %v1923
        %v1925 = vrcp.pop %v1914
        %v1926 = vmul.f32 1.0, %v1925
        %v1927 = vrcp.pop %v1915
        %v1928 = vmul.f32 1.0, %v1927
        %v1929 = vrcp.pop %v1916
        %v1930 = vmul.f32 1.0, %v1929
        %v1931 = vrcp.pop %v1917
        %v1932 = vmul.f32 1.0, %v1931
        %v1933 = vrcp.pop %v1918
        %v1934 = vmul.f32 1.0, %v1933
        %v1935 = vmul.f32 %v1920, 1.0614054
        %v1936 = vmul.f32 %v1922, 1.0614054
        %v1937 = vmul.f32 %v1924, 1.0614054
        %v1938 = vmul.f32 %v1926, 1.0614054
        %v1939 = vmul.f32 %v1928, 1.0614054
        %v1940 = vmul.f32 %v1930, 1.0614054
        %v1941 = vmul.f32 %v1932, 1.0614054
        %v1942 = vmul.f32 %v1934, 1.0614054
        %v1943 = vadd.f32 %v1935, -1.4531521
        %v1944 = vadd.f32 %v1936, -1.4531521
        %v1945 = vadd.f32 %v1937, -1.4531521
        %v1946 = vadd.f32 %v1938, -1.4531521
        %v1947 = vadd.f32 %v1939, -1.4531521
        %v1948 = vadd.f32 %v1940, -1.4531521
        %v1949 = vadd.f32 %v1941, -1.4531521
        %v1950 = vadd.f32 %v1942, -1.4531521
        %v1951 = vmul.f32 %v1943, %v1920
        %v1952 = vmul.f32 %v1944, %v1922
        %v1953 = vmul.f32 %v1945, %v1924
        %v1954 = vmul.f32 %v1946, %v1926
        %v1955 = vmul.f32 %v1947, %v1928
        %v1956 = vmul.f32 %v1948, %v1930
        %v1957 = vmul.f32 %v1949, %v1932
        %v1958 = vmul.f32 %v1950, %v1934
        %v1959 = vadd.f32 %v1951, 1.4214138
        %v1960 = vadd.f32 %v1952, 1.4214138
        %v1961 = vadd.f32 %v1953, 1.4214138
        %v1962 = vadd.f32 %v1954, 1.4214138
        %v1963 = vadd.f32 %v1955, 1.4214138
        %v1964 = vadd.f32 %v1956, 1.4214138
        %v1965 = vadd.f32 %v1957, 1.4214138
        %v1966 = vadd.f32 %v1958, 1.4214138
        %v1967 = vmul.f32 %v1959, %v1920
        %v1968 = vmul.f32 %v1960, %v1922
        %v1969 = vmul.f32 %v1961, %v1924
        %v1970 = vmul.f32 %v1962, %v1926
        %v1971 = vmul.f32 %v1963, %v1928
        %v1972 = vmul.f32 %v1964, %v1930
        %v1973 = vmul.f32 %v1965, %v1932
        %v1974 = vmul.f32 %v1966, %v1934
        %v1975 = vadd.f32 %v1967, -0.28449672
        %v1976 = vadd.f32 %v1968, -0.28449672
        %v1977 = vadd.f32 %v1969, -0.28449672
        %v1978 = vadd.f32 %v1970, -0.28449672
        %v1979 = vadd.f32 %v1971, -0.28449672
        %v1980 = vadd.f32 %v1972, -0.28449672
        %v1981 = vadd.f32 %v1973, -0.28449672
        %v1982 = vadd.f32 %v1974, -0.28449672
        %v1983 = vmul.f32 %v1975, %v1920
        %v1984 = vmul.f32 %v1976, %v1922
        %v1985 = vmul.f32 %v1977, %v1924
        %v1986 = vmul.f32 %v1978, %v1926
        %v1987 = vmul.f32 %v1979, %v1928
        %v1988 = vmul.f32 %v1980, %v1930
        %v1989 = vmul.f32 %v1981, %v1932
        %v1990 = vmul.f32 %v1982, %v1934
        %v1991 = vadd.f32 %v1983, 0.2548296
        %v1992 = vadd.f32 %v1984, 0.2548296
        %v1993 = vadd.f32 %v1985, 0.2548296
        %v1994 = vadd.f32 %v1986, 0.2548296
        %v1995 = vadd.f32 %v1987, 0.2548296
        %v1996 = vadd.f32 %v1988, 0.2548296
        %v1997 = vadd.f32 %v1989, 0.2548296
        %v1998 = vadd.f32 %v1990, 0.2548296
        %v1999 = vmul.f32 %v1991, %v1920
        %v2000 = vmul.f32 %v1992, %v1922
        %v2001 = vmul.f32 %v1993, %v1924
        %v2002 = vmul.f32 %v1994, %v1926
        %v2003 = vmul.f32 %v1995, %v1928
        %v2004 = vmul.f32 %v1996, %v1930
        %v2005 = vmul.f32 %v1997, %v1932
        %v2006 = vmul.f32 %v1998, %v1934
        %v2007 = vsub.f32 0.0, %v1895
        %v2008 = vsub.f32 0.0, %v1896
        %v2009 = vsub.f32 0.0, %v1897
        %v2010 = vsub.f32 0.0, %v1898
        %v2011 = vsub.f32 0.0, %v1899
        %v2012 = vsub.f32 0.0, %v1900
        %v2013 = vsub.f32 0.0, %v1901
        %v2014 = vsub.f32 0.0, %v1902
        %v2015 = vmul.f32 %v2007, %v1895
        %v2016 = vmul.f32 %v2008, %v1896
        %v2017 = vmul.f32 %v2009, %v1897
        %v2018 = vmul.f32 %v2010, %v1898
        %v2019 = vmul.f32 %v2011, %v1899
        %v2020 = vmul.f32 %v2012, %v1900
        %v2021 = vmul.f32 %v2013, %v1901
        %v2022 = vmul.f32 %v2014, %v1902
        %v2023 = vmul.f32 %v2015, 1.442695
        %v2024 = vpow.pop %v2023
        %v2025 = vmul.f32 %v2016, 1.442695
        %v2026 = vpow.pop %v2025
        %v2027 = vmul.f32 %v2017, 1.442695
        %v2028 = vpow.pop %v2027
        %v2029 = vmul.f32 %v2018, 1.442695
        %v2030 = vpow.pop %v2029
        %v2031 = vmul.f32 %v2019, 1.442695
        %v2032 = vpow.pop %v2031
        %v2033 = vmul.f32 %v2020, 1.442695
        %v2034 = vpow.pop %v2033
        %v2035 = vmul.f32 %v2021, 1.442695
        %v2036 = vpow.pop %v2035
        %v2037 = vmul.f32 %v2022, 1.442695
        %v2038 = vpow.pop %v2037
        %v2039 = vmul.f32 %v1999, %v2024
        %v2040 = vmul.f32 %v2000, %v2026
        %v2041 = vmul.f32 %v2001, %v2028
        %v2042 = vmul.f32 %v2002, %v2030
        %v2043 = vmul.f32 %v2003, %v2032
        %v2044 = vmul.f32 %v2004, %v2034
        %v2045 = vmul.f32 %v2005, %v2036
        %v2046 = vmul.f32 %v2006, %v2038
        %v2047 = vsub.f32 1.0, %v2039
        %v2048 = vsub.f32 1.0, %v2040
        %v2049 = vsub.f32 1.0, %v2041
        %v2050 = vsub.f32 1.0, %v2042
        %v2051 = vsub.f32 1.0, %v2043
        %v2052 = vsub.f32 1.0, %v2044
        %v2053 = vsub.f32 1.0, %v2045
        %v2054 = vsub.f32 1.0, %v2046
        %vm2055 = vcmp.ge.f32.partialorder %v1887, 0.0
        %vm2056 = vcmp.ge.f32.partialorder %v1888, 0.0
        %vm2057 = vcmp.ge.f32.partialorder %v1889, 0.0
        %vm2058 = vcmp.ge.f32.partialorder %v1890, 0.0
        %vm2059 = vcmp.ge.f32.partialorder %v1891, 0.0
        %vm2060 = vcmp.ge.f32.partialorder %v1892, 0.0
        %vm2061 = vcmp.ge.f32.partialorder %v1893, 0.0
        %vm2062 = vcmp.ge.f32.partialorder %v1894, 0.0
        %v2063 = vsub.f32 0.0, %v2047
        %v2064 = vsub.f32 0.0, %v2048
        %v2065 = vsub.f32 0.0, %v2049
        %v2066 = vsub.f32 0.0, %v2050
        %v2067 = vsub.f32 0.0, %v2051
        %v2068 = vsub.f32 0.0, %v2052
        %v2069 = vsub.f32 0.0, %v2053
        %v2070 = vsub.f32 0.0, %v2054
        %v2071 = vsel %vm2055, %v2047, %v2063
        %v2072 = vsel %vm2056, %v2048, %v2064
        %v2073 = vsel %vm2057, %v2049, %v2065
        %v2074 = vsel %vm2058, %v2050, %v2066
        %v2075 = vsel %vm2059, %v2051, %v2067
        %v2076 = vsel %vm2060, %v2052, %v2068
        %v2077 = vsel %vm2061, %v2053, %v2069
        %v2078 = vsel %vm2062, %v2054, %v2070
        %v2079 = vadd.f32 %v2071, 1.0
        %v2080 = vadd.f32 %v2072, 1.0
        %v2081 = vadd.f32 %v2073, 1.0
        %v2082 = vadd.f32 %v2074, 1.0
        %v2083 = vadd.f32 %v2075, 1.0
        %v2084 = vadd.f32 %v2076, 1.0
        %v2085 = vadd.f32 %v2077, 1.0
        %v2086 = vadd.f32 %v2078, 1.0
        %v2087 = vmul.f32 %v1879, %v2079
        %v2088 = vmul.f32 %v1880, %v2080
        %v2089 = vmul.f32 %v1881, %v2081
        %v2090 = vmul.f32 %v1882, %v2082
        %v2091 = vmul.f32 %v1883, %v2083
        %v2092 = vmul.f32 %v1884, %v2084
        %v2093 = vmul.f32 %v1885, %v2085
        %v2094 = vmul.f32 %v1886, %v2086
        %2096 = vset.pattern.permute.xlu0 0
        %2097 = vperm.xlu0 %2096, %v1368
        %v2098 = vpop.permute.xlu0 %2097
        %vm2100 = vcmask 261120
        %v2102 = vsel %vm2100, %v1367, 0
        %2104 = vmatprep.subr.mxu0 0.0
        %2105 = vmatpush1.msra.mxu0 0.0
        %2106 = vmatprep.subr.mxu0 0.0
        %2107 = vmatpush1.msra.mxu0 0.0
        %2108 = vmatprep.subr.mxu0 0.0
        %2109 = vmatpush1.msra.mxu0 0.0
        %2110 = vmatprep.subr.mxu0 0.0
        %2111 = vmatpush1.msra.mxu0 0.0
        %2112 = vmatprep.subr.mxu0 0.0
        %2113 = vmatpush1.msra.mxu0 0.0
        %2114 = vmatprep.subr.mxu0 0.0
        %2115 = vmatpush1.msra.mxu0 0.0
        %2116 = vmatprep.subr.mxu0 0.0
        %2117 = vmatpush1.msra.mxu0 0.0
        %2118 = vmatprep.subr.mxu0 0.0
        %2119 = vmatpush1.msra.mxu0 0.0
        %2120 = vmatprep.subr.mxu0 0.0
        %2121 = vmatpush1.msra.mxu0 0.0
        %2122 = vmatprep.subr.mxu0 0.0
        %2123 = vmatpush1.msra.mxu0 0.0
        %2124 = vmatprep.subr.mxu0 0.0
        %2125 = vmatpush1.msra.mxu0 0.0
        %2126 = vmatprep.subr.mxu0 0.0
        %2127 = vmatpush1.msra.mxu0 0.0
        %2128 = vmatprep.subr.mxu0 %v2094
        %2129 = vmatpush1.msra.mxu0 %v2093
        %2130 = vmatprep.subr.mxu0 %v2092
        %2131 = vmatpush1.msra.mxu0 %v2091
        %2132 = vmatprep.subr.mxu0 %v2090
        %2133 = vmatpush1.msra.mxu0 %v2089
        %2134 = vmatprep.subr.mxu0 %v2088
        %2135 = vmatpush1.msra.mxu0 %v2087
        %2136 = vmatprep.subr.mxu0 0.0
        %2137 = vmatpush2.msra.mxu0 0.0
        %2138 = vmatprep.subr.mxu0 0.0
        %2139 = vmatpush2.msra.mxu0 0.0
        %2140 = vmatprep.subr.mxu0 0.0
        %2141 = vmatpush2.msra.mxu0 0.0
        %2142 = vmatprep.subr.mxu0 0.0
        %2143 = vmatpush2.msra.mxu0 0.0
        %2144 = vmatprep.subr.mxu0 0.0
        %2145 = vmatpush2.msra.mxu0 0.0
        %2146 = vmatprep.subr.mxu0 0.0
        %2147 = vmatpush2.msra.mxu0 0.0
        %2148 = vmatprep.subr.mxu0 0.0
        %2149 = vmatpush2.msra.mxu0 0.0
        %2150 = vmatprep.subr.mxu0 0.0
        %2151 = vmatpush2.msra.mxu0 0.0
        %2152 = vmatprep.subr.mxu0 0.0
        %2153 = vmatpush2.msra.mxu0 0.0
        %2154 = vmatprep.subr.mxu0 0.0
        %2155 = vmatpush2.msra.mxu0 0.0
        %2156 = vmatprep.subr.mxu0 0.0
        %2157 = vmatpush2.msra.mxu0 0.0
        %2158 = vmatprep.subr.mxu0 0.0
        %2159 = vmatpush2.msra.mxu0 0.0
        %2160 = vmatprep.subr.mxu0 0.0
        %2161 = vmatpush2.msra.mxu0 0.0
        %2162 = vmatprep.subr.mxu0 0.0
        %2163 = vmatpush2.msra.mxu0 0.0
        %2164 = vmatprep.subr.mxu0 0.0
        %2165 = vmatpush2.msra.mxu0 0.0
        %2166 = vmatprep.subr.mxu0 0.0
        %2167 = vmatpush2.msra.mxu0 0.0
        %2168 = vmatprep.mubr.f32.mxu0 0.0
        %2169 = vmatmul.mubr.f32.gmra.mxu0 %v2102
        %v2170 = vpop.f32.mrf.mxu0
        %v2171 = vadd.f32 %v2098, %v2170
        %v2172 = vpop.f32.mrf.mxu0
        %v2173 = vadd.f32 %v2098, %v2172
        %2174 = vdwg.mxu0
        %2175 = vrot.lane.b32.xlu0 %v1398, 17
        %v2176 = vpop.permute.xlu0 %2175
        %2177 = vrot.lane.b32.xlu0 %v1399, 17
        %v2178 = vpop.permute.xlu0 %2177
        %v2179 = vlaneseq
        %v2180 = vand.u32 %v2179, 127
        %vm2181 = vcmp.lt.s32.totalorder %v2180, 17
        %v2182 = vsel %vm2181, %v2176, %v2178
        %v2183 = vsel %vm2181, %v2178, %v2176
        %2184 = vrot.lane.b32.xlu0 %v1398, 16
        %v2185 = vpop.permute.xlu0 %2184
        %2186 = vrot.lane.b32.xlu0 %v1399, 16
        %v2187 = vpop.permute.xlu0 %2186
        %vm2188 = vcmp.lt.s32.totalorder %v2180, 16
        %v2189 = vsel %vm2188, %v2185, %v2187
        %v2190 = vsel %vm2188, %v2187, %v2185
        %2191 = vrot.lane.b32.xlu0 %v1398, 15
        %v2192 = vpop.permute.xlu0 %2191
        %2193 = vrot.lane.b32.xlu0 %v1399, 15
        %v2194 = vpop.permute.xlu0 %2193
        %vm2195 = vcmp.lt.s32.totalorder %v2180, 15
        %v2196 = vsel %vm2195, %v2192, %v2194
        %v2197 = vsel %vm2195, %v2194, %v2192
        %2198 = vrot.lane.b32.xlu0 %v1398, 1
        %v2199 = vpop.permute.xlu0 %2198
        %2200 = vrot.lane.b32.xlu0 %v1399, 1
        %v2201 = vpop.permute.xlu0 %2200
        %vm2202 = vcmp.lt.s32.totalorder %v2180, 1
        %v2203 = vsel %vm2202, %v2199, %v2201
        %v2204 = vsel %vm2202, %v2201, %v2199
        %2205 = vrot.lane.b32.xlu0 %v1398, 127
        %v2206 = vpop.permute.xlu0 %2205
        %2207 = vrot.lane.b32.xlu0 %v1399, 127
        %v2208 = vpop.permute.xlu0 %2207
        %vm2209 = vcmp.lt.s32.totalorder %v2180, 127
        %v2210 = vsel %vm2209, %v2206, %v2208
        %v2211 = vsel %vm2209, %v2208, %v2206
        %2212 = vrot.lane.b32.xlu0 %v1398, 113
        %v2213 = vpop.permute.xlu0 %2212
        %2214 = vrot.lane.b32.xlu0 %v1399, 113
        %v2215 = vpop.permute.xlu0 %2214
        %vm2216 = vcmp.lt.s32.totalorder %v2180, 113
        %v2217 = vsel %vm2216, %v2213, %v2215
        %v2218 = vsel %vm2216, %v2215, %v2213
        %2219 = vrot.lane.b32.xlu0 %v1398, 112
        %v2220 = vpop.permute.xlu0 %2219
        %2221 = vrot.lane.b32.xlu0 %v1399, 112
        %v2222 = vpop.permute.xlu0 %2221
        %vm2223 = vcmp.lt.s32.totalorder %v2180, 112
        %v2224 = vsel %vm2223, %v2220, %v2222
        %v2225 = vsel %vm2223, %v2222, %v2220
        %2226 = vrot.lane.b32.xlu0 %v1398, 111
        %v2227 = vpop.permute.xlu0 %2226
        %2228 = vrot.lane.b32.xlu0 %v1399, 111
        %v2229 = vpop.permute.xlu0 %2228
        %vm2230 = vcmp.lt.s32.totalorder %v2180, 111
        %v2231 = vsel %vm2230, %v2227, %v2229
        %v2232 = vsel %vm2230, %v2229, %v2227
        %v2233 = vmul.f32 %v2183, %v1371
        %v2234 = vmul.f32 %v2182, %v1372
        %v2235 = vmul.f32 %v2190, %v1373
        %v2236 = vmul.f32 %v2189, %v1374
        %v2237 = vmul.f32 %v2197, %v1375
        %v2238 = vmul.f32 %v2196, %v1376
        %v2239 = vmul.f32 %v2204, %v1377
        %v2240 = vmul.f32 %v2203, %v1378
        %v2241 = vmul.f32 %v1398, %v1379
        %v2242 = vmul.f32 %v1399, %v1380
        %v2243 = vmul.f32 %v2210, %v1381
        %v2244 = vmul.f32 %v2211, %v1382
        %v2245 = vmul.f32 %v2217, %v1383
        %v2246 = vmul.f32 %v2218, %v1384
        %v2247 = vmul.f32 %v2224, %v1385
        %v2248 = vmul.f32 %v2225, %v1386
        %v2249 = vmul.f32 %v2231, %v1387
        %v2250 = vmul.f32 %v2232, %v1388
        %2252 = vset.pattern.permute.xlu0 0
        %2253 = vperm.xlu0 %2252, %v1370
        %v2254 = vpop.permute.xlu0 %2253
        %vm2256 = vcmask 588800
        %v2258 = vsel %vm2256, %v1369, 0
        %2260 = vmatprep.subr.mxu0 0.0
        %2261 = vmatpush1.msra.mxu0 0.0
        %2262 = vmatprep.subr.mxu0 0.0
        %2263 = vmatpush1.msra.mxu0 0.0
        %2264 = vmatprep.subr.mxu0 0.0
        %2265 = vmatpush1.msra.mxu0 0.0
        %2266 = vmatprep.subr.mxu0 0.0
        %2267 = vmatpush1.msra.mxu0 0.0
        %2268 = vmatprep.subr.mxu0 0.0
        %2269 = vmatpush1.msra.mxu0 0.0
        %2270 = vmatprep.subr.mxu0 0.0
        %2271 = vmatpush1.msra.mxu0 0.0
        %2272 = vmatprep.subr.mxu0 0.0
        %2273 = vmatpush1.msra.mxu0 0.0
        %2274 = vmatprep.subr.mxu0 %v2250
        %2275 = vmatpush1.msra.mxu0 %v2249
        %2276 = vmatprep.subr.mxu0 %v2248
        %2277 = vmatpush1.msra.mxu0 %v2247
        %2278 = vmatprep.subr.mxu0 %v2246
        %2279 = vmatpush1.msra.mxu0 %v2245
        %2280 = vmatprep.subr.mxu0 %v2244
        %2281 = vmatpush1.msra.mxu0 %v2243
        %2282 = vmatprep.subr.mxu0 %v2242
        %2283 = vmatpush1.msra.mxu0 %v2241
        %2284 = vmatprep.subr.mxu0 %v2240
        %2285 = vmatpush1.msra.mxu0 %v2239
        %2286 = vmatprep.subr.mxu0 %v2238
        %2287 = vmatpush1.msra.mxu0 %v2237
        %2288 = vmatprep.subr.mxu0 %v2236
        %2289 = vmatpush1.msra.mxu0 %v2235
        %2290 = vmatprep.subr.mxu0 %v2234
        %2291 = vmatpush1.msra.mxu0 %v2233
        %2292 = vmatprep.subr.mxu0 0.0
        %2293 = vmatpush2.msra.mxu0 0.0
        %2294 = vmatprep.subr.mxu0 0.0
        %2295 = vmatpush2.msra.mxu0 0.0
        %2296 = vmatprep.subr.mxu0 0.0
        %2297 = vmatpush2.msra.mxu0 0.0
        %2298 = vmatprep.subr.mxu0 0.0
        %2299 = vmatpush2.msra.mxu0 0.0
        %2300 = vmatprep.subr.mxu0 0.0
        %2301 = vmatpush2.msra.mxu0 0.0
        %2302 = vmatprep.subr.mxu0 0.0
        %2303 = vmatpush2.msra.mxu0 0.0
        %2304 = vmatprep.subr.mxu0 0.0
        %2305 = vmatpush2.msra.mxu0 0.0
        %2306 = vmatprep.subr.mxu0 0.0
        %2307 = vmatpush2.msra.mxu0 0.0
        %2308 = vmatprep.subr.mxu0 0.0
        %2309 = vmatpush2.msra.mxu0 0.0
        %2310 = vmatprep.subr.mxu0 0.0
        %2311 = vmatpush2.msra.mxu0 0.0
        %2312 = vmatprep.subr.mxu0 0.0
        %2313 = vmatpush2.msra.mxu0 0.0
        %2314 = vmatprep.subr.mxu0 0.0
        %2315 = vmatpush2.msra.mxu0 0.0
        %2316 = vmatprep.subr.mxu0 0.0
        %2317 = vmatpush2.msra.mxu0 0.0
        %2318 = vmatprep.subr.mxu0 0.0
        %2319 = vmatpush2.msra.mxu0 0.0
        %2320 = vmatprep.subr.mxu0 0.0
        %2321 = vmatpush2.msra.mxu0 0.0
        %2322 = vmatprep.subr.mxu0 0.0
        %2323 = vmatpush2.msra.mxu0 0.0
        %2324 = vmatprep.mubr.f32.mxu0 0.0
        %2325 = vmatmul.mubr.f32.gmra.mxu0 %v2258
        %v2326 = vpop.f32.mrf.mxu0
        %v2327 = vadd.f32 %v2254, %v2326
        %v2328 = vpop.f32.mrf.mxu0
        %v2329 = vadd.f32 %v2254, %v2328
        %2330 = vdwg.mxu0
        %v2331 = vadd.f32 %v2327, %v2171
        %v2332 = vadd.f32 %v2329, %v2173
        %v2333 = vrot.slane %v2331, 4
        %v2334 = vadd.f32 %v2331, %v2333
        %v2335 = vrot.slane %v2334, 2
        %v2336 = vadd.f32 %v2334, %v2335
        %v2337 = vrot.slane %v2336, 1
        %v2338 = vadd.f32 %v2336, %v2337
        %v2339 = vrot.slane %v2332, 4
        %v2340 = vadd.f32 %v2332, %v2339
        %v2341 = vrot.slane %v2340, 2
        %v2342 = vadd.f32 %v2340, %v2341
        %v2343 = vrot.slane %v2342, 1
        %v2344 = vadd.f32 %v2342, %v2343
        %v2345 = vmul.f32 %v2338, %v1096
        %v2346 = vmul.f32 %v2344, %v1096
        %v2347 = vsub.f32 %v2331, %v2345
        %v2348 = vsub.f32 %v2332, %v2346
        %v2349 = vmul.f32 %v2347, %v2347
        %v2350 = vmul.f32 %v2348, %v2348
        %v2351 = vrot.slane %v2349, 4
        %v2352 = vadd.f32 %v2349, %v2351
        %v2353 = vrot.slane %v2352, 2
        %v2354 = vadd.f32 %v2352, %v2353
        %v2355 = vrot.slane %v2354, 1
        %v2356 = vadd.f32 %v2354, %v2355
        %v2357 = vrot.slane %v2350, 4
        %v2358 = vadd.f32 %v2350, %v2357
        %v2359 = vrot.slane %v2358, 2
        %v2360 = vadd.f32 %v2358, %v2359
        %v2361 = vrot.slane %v2360, 1
        %v2362 = vadd.f32 %v2360, %v2361
        %v2363 = vmul.f32 %v2356, %v1096
        %v2364 = vmul.f32 %v2362, %v1096
        %v2365 = vadd.f32 %v2363, 1e-05
        %v2366 = vadd.f32 %v2364, 1e-05
        %v2367 = vrsqrt.pop %v2365
        %v2368 = vrsqrt.pop %v2366
        %v2369 = vmul.f32 %v2347, %v2367
        %v2370 = vmul.f32 %v2348, %v2368
        %2372 = vset.pattern.permute.xlu0 0
        %2373 = vperm.xlu0 %2372, %v1357
        %v2374 = vpop.permute.xlu0 %2373
        %v2376 = vmul.f32 %v2369, %v2374
        %v2377 = vmul.f32 %v2370, %v2374
        %2379 = vset.pattern.permute.xlu0 0
        %2380 = vperm.xlu0 %2379, %v1358
        %v2381 = vpop.permute.xlu0 %2380
        %v2383 = vadd.f32 %v2376, %v2381
        %v2384 = vadd.f32 %v2377, %v2381
        %v2385 = vmax.f32 %v2383, 0.0
        %v2386 = vmax.f32 %v2384, 0.0
        %v2387 = vld [vmem:[%s15] sm:$0xff]
        %v2388 = vld [vmem:[%s15 + $0x8] sm:$0xff]
        %v2389 = vld [vmem:[%s15 + $0x10] sm:$0xff]
        %v2390 = vld [vmem:[%s15 + $0x18] sm:$0xff]
        %v2391 = vld [vmem:[%s15 + $0x20] sm:$0xff]
        %v2392 = vld [vmem:[%s15 + $0x28] sm:$0xff]
        %v2393 = vld [vmem:[%s15 + $0x30] sm:$0xff]
        %v2394 = vld [vmem:[%s15 + $0x38] sm:$0xff]
        %v2395 = vld [vmem:[%s17] sm:$0xff]
        %v2396 = vld [vmem:[%s17 + $0x8] sm:$0xff]
        %v2397 = vld [vmem:[%s17 + $0x10] sm:$0xff]
        %v2398 = vld [vmem:[%s17 + $0x18] sm:$0xff]
        %v2399 = vld [vmem:[%s17 + $0x20] sm:$0xff]
        %v2400 = vld [vmem:[%s17 + $0x28] sm:$0xff]
        %v2401 = vld [vmem:[%s17 + $0x30] sm:$0xff]
        %v2402 = vld [vmem:[%s17 + $0x38] sm:$0xff]
        %v2403 = vld [vmem:[%s19] sm:$0xff]
        %v2404 = vld [vmem:[%s19 + $0x8] sm:$0xff]
        %v2405 = vld [vmem:[%s19 + $0x10] sm:$0xff]
        %v2406 = vld [vmem:[%s19 + $0x18] sm:$0xff]
        %v2407 = vld [vmem:[%s19 + $0x20] sm:$0xff]
        %v2408 = vld [vmem:[%s21] sm:$0xff]
        %v2409 = vld [vmem:[%s21 + $0x8] sm:$0xff]
        %v2410 = vld [vmem:[%s21 + $0x10] sm:$0xff]
        %v2411 = vld [vmem:[%s21 + $0x18] sm:$0xff]
        %v2412 = vld [vmem:[%s21 + $0x20] sm:$0xff]
        %v2413 = vld [vmem:[%s23] sm:$0xff]
        %v2414 = vld [vmem:[%s25] sm:$0xff]
        %v2415 = vld [vmem:[%s39] sm:$0xff]
        %v2416 = vld [vmem:[%s41] sm:$0xff]
        %v2417 = vld [vmem:[%s51] sm:$0xff]
        %v2418 = vld [vmem:[%s51 + $0x8] sm:$0xff]
        %v2419 = vld [vmem:[%s51 + $0x10] sm:$0xff]
        %v2420 = vld [vmem:[%s51 + $0x18] sm:$0xff]
        %v2421 = vld [vmem:[%s53] sm:$0xff]
        %v2422 = vld [vmem:[%s53 + $0x8] sm:$0xff]
        %v2423 = vld [vmem:[%s53 + $0x10] sm:$0xff]
        %v2424 = vld [vmem:[%s53 + $0x18] sm:$0xff]
        %v2425 = vld [vmem:[%s55] sm:$0xff]
        %v2426 = vld [vmem:[%s57] sm:$0xff]
        %v2427 = vld [vmem:[%s63] sm:$0xff]
        %v2428 = vld [vmem:[%s65] sm:$0xff]
        %v2429 = vld [vmem:[%s69] sm:$0xff]
        %v2430 = vld [vmem:[%s69 + $0x8] sm:$0xff]
        %v2431 = vld [vmem:[%s69 + $0x10] sm:$0xff]
        %v2432 = vld [vmem:[%s69 + $0x18] sm:$0xff]
        %v2433 = vld [vmem:[%s69 + $0x20] sm:$0xff]
        %v2434 = vld [vmem:[%s69 + $0x28] sm:$0xff]
        %v2435 = vld [vmem:[%s69 + $0x30] sm:$0xff]
        %v2436 = vld [vmem:[%s69 + $0x38] sm:$0xff]
        %v2437 = vld [vmem:[%s69 + $0x40] sm:$0xff]
        %v2438 = vsel %vm1088, %v1150, 0
        %2440 = vmatprep.subr.mxu0 0.0
        %2441 = vmatpush1.msra.mxu0 0.0
        %2442 = vmatprep.subr.mxu0 0.0
        %2443 = vmatpush1.msra.mxu0 0.0
        %2444 = vmatprep.subr.mxu0 0.0
        %2445 = vmatpush1.msra.mxu0 0.0
        %2446 = vmatprep.subr.mxu0 0.0
        %2447 = vmatpush1.msra.mxu0 0.0
        %2448 = vmatprep.subr.mxu0 0.0
        %2449 = vmatpush1.msra.mxu0 0.0
        %2450 = vmatprep.subr.mxu0 0.0
        %2451 = vmatpush1.msra.mxu0 0.0
        %2452 = vmatprep.subr.mxu0 0.0
        %2453 = vmatpush1.msra.mxu0 0.0
        %2454 = vmatprep.subr.mxu0 0.0
        %2455 = vmatpush1.msra.mxu0 0.0
        %2456 = vmatprep.subr.mxu0 0.0
        %2457 = vmatpush1.msra.mxu0 %v2394
        %2458 = vmatprep.subr.mxu0 0.0
        %2459 = vmatpush1.msra.mxu0 %v2393
        %2460 = vmatprep.subr.mxu0 0.0
        %2461 = vmatpush1.msra.mxu0 %v2392
        %2462 = vmatprep.subr.mxu0 0.0
        %2463 = vmatpush1.msra.mxu0 %v2391
        %2464 = vmatprep.subr.mxu0 0.0
        %2465 = vmatpush1.msra.mxu0 %v2390
        %2466 = vmatprep.subr.mxu0 0.0
        %2467 = vmatpush1.msra.mxu0 %v2389
        %2468 = vmatprep.subr.mxu0 0.0
        %2469 = vmatpush1.msra.mxu0 %v2388
        %2470 = vmatprep.subr.mxu0 0.0
        %2471 = vmatpush1.msra.mxu0 %v2387
        %2472 = vmatprep.subr.mxu0 0.0
        %2473 = vmatpush2.msra.mxu0 0.0
        %2474 = vmatprep.subr.mxu0 0.0
        %2475 = vmatpush2.msra.mxu0 0.0
        %2476 = vmatprep.subr.mxu0 0.0
        %2477 = vmatpush2.msra.mxu0 0.0
        %2478 = vmatprep.subr.mxu0 0.0
        %2479 = vmatpush2.msra.mxu0 0.0
        %2480 = vmatprep.subr.mxu0 0.0
        %2481 = vmatpush2.msra.mxu0 0.0
        %2482 = vmatprep.subr.mxu0 0.0
        %2483 = vmatpush2.msra.mxu0 0.0
        %2484 = vmatprep.subr.mxu0 0.0
        %2485 = vmatpush2.msra.mxu0 0.0
        %2486 = vmatprep.subr.mxu0 0.0
        %2487 = vmatpush2.msra.mxu0 0.0
        %2488 = vmatprep.subr.mxu0 0.0
        %2489 = vmatpush2.msra.mxu0 0.0
        %2490 = vmatprep.subr.mxu0 0.0
        %2491 = vmatpush2.msra.mxu0 0.0
        %2492 = vmatprep.subr.mxu0 0.0
        %2493 = vmatpush2.msra.mxu0 0.0
        %2494 = vmatprep.subr.mxu0 0.0
        %2495 = vmatpush2.msra.mxu0 0.0
        %2496 = vmatprep.subr.mxu0 0.0
        %2497 = vmatpush2.msra.mxu0 0.0
        %2498 = vmatprep.subr.mxu0 0.0
        %2499 = vmatpush2.msra.mxu0 0.0
        %2500 = vmatprep.subr.mxu0 0.0
        %2501 = vmatpush2.msra.mxu0 0.0
        %2502 = vmatprep.subr.mxu0 0.0
        %2503 = vmatpush2.msra.mxu0 0.0
        %2504 = vmatprep.mubr.f32.mxu0 0.0
        %2505 = vmatmul.mubr.f32.gmra.mxu0 %v2438
        %v2506 = vpop.f32.mrf.mxu0
        %v2507 = vadd.f32 0.0, %v2506
        %v2508 = vpop.f32.mrf.mxu0
        %2509 = vdwg.mxu0
        %2510 = vmatprep.subr.mxu0 0.0
        %2511 = vmatpush1.msra.mxu0 0.0
        %2512 = vmatprep.subr.mxu0 0.0
        %2513 = vmatpush1.msra.mxu0 0.0
        %2514 = vmatprep.subr.mxu0 0.0
        %2515 = vmatpush1.msra.mxu0 0.0
        %2516 = vmatprep.subr.mxu0 0.0
        %2517 = vmatpush1.msra.mxu0 0.0
        %2518 = vmatprep.subr.mxu0 0.0
        %2519 = vmatpush1.msra.mxu0 0.0
        %2520 = vmatprep.subr.mxu0 0.0
        %2521 = vmatpush1.msra.mxu0 0.0
        %2522 = vmatprep.subr.mxu0 0.0
        %2523 = vmatpush1.msra.mxu0 0.0
        %2524 = vmatprep.subr.mxu0 0.0
        %2525 = vmatpush1.msra.mxu0 0.0
        %2526 = vmatprep.subr.mxu0 0.0
        %2527 = vmatpush1.msra.mxu0 %v2402
        %2528 = vmatprep.subr.mxu0 0.0
        %2529 = vmatpush1.msra.mxu0 %v2401
        %2530 = vmatprep.subr.mxu0 0.0
        %2531 = vmatpush1.msra.mxu0 %v2400
        %2532 = vmatprep.subr.mxu0 0.0
        %2533 = vmatpush1.msra.mxu0 %v2399
        %2534 = vmatprep.subr.mxu0 0.0
        %2535 = vmatpush1.msra.mxu0 %v2398
        %2536 = vmatprep.subr.mxu0 0.0
        %2537 = vmatpush1.msra.mxu0 %v2397
        %2538 = vmatprep.subr.mxu0 0.0
        %2539 = vmatpush1.msra.mxu0 %v2396
        %2540 = vmatprep.subr.mxu0 0.0
        %2541 = vmatpush1.msra.mxu0 %v2395
        %2542 = vmatprep.subr.mxu0 0.0
        %2543 = vmatpush2.msra.mxu0 0.0
        %2544 = vmatprep.subr.mxu0 0.0
        %2545 = vmatpush2.msra.mxu0 0.0
        %2546 = vmatprep.subr.mxu0 0.0
        %2547 = vmatpush2.msra.mxu0 0.0
        %2548 = vmatprep.subr.mxu0 0.0
        %2549 = vmatpush2.msra.mxu0 0.0
        %2550 = vmatprep.subr.mxu0 0.0
        %2551 = vmatpush2.msra.mxu0 0.0
        %2552 = vmatprep.subr.mxu0 0.0
        %2553 = vmatpush2.msra.mxu0 0.0
        %2554 = vmatprep.subr.mxu0 0.0
        %2555 = vmatpush2.msra.mxu0 0.0
        %2556 = vmatprep.subr.mxu0 0.0
        %2557 = vmatpush2.msra.mxu0 0.0
        %2558 = vmatprep.subr.mxu0 0.0
        %2559 = vmatpush2.msra.mxu0 0.0
        %2560 = vmatprep.subr.mxu0 0.0
        %2561 = vmatpush2.msra.mxu0 0.0
        %2562 = vmatprep.subr.mxu0 0.0
        %2563 = vmatpush2.msra.mxu0 0.0
        %2564 = vmatprep.subr.mxu0 0.0
        %2565 = vmatpush2.msra.mxu0 0.0
        %2566 = vmatprep.subr.mxu0 0.0
        %2567 = vmatpush2.msra.mxu0 0.0
        %2568 = vmatprep.subr.mxu0 0.0
        %2569 = vmatpush2.msra.mxu0 0.0
        %2570 = vmatprep.subr.mxu0 0.0
        %2571 = vmatpush2.msra.mxu0 0.0
        %2572 = vmatprep.subr.mxu0 0.0
        %2573 = vmatpush2.msra.mxu0 0.0
        %2574 = vmatprep.mubr.f32.mxu0 0.0
        %2575 = vmatmul.mubr.f32.gmra.mxu0 %v2438
        %v2576 = vpop.f32.mrf.mxu0
        %v2577 = vadd.f32 0.0, %v2576
        %v2578 = vpop.f32.mrf.mxu0
        %2579 = vdwg.mxu0
        %v2580 = vmul.f32 %v2507, %v2413
        %v2581 = vmul.f32 %v2577, %v2414
        %v2582 = vsub.f32 %v2580, %v2581
        %v2583 = vmul.f32 %v2507, %v2414
        %v2584 = vmul.f32 %v2577, %v2413
        %v2585 = vadd.f32 %v2583, %v2584
        %vm2586 = vcmask 326656
        %v2588 = vsel %vm2586, %v2585, 0
        %2590 = vmatprep.subr.mxu0 0.0
        %2591 = vmatpush1.msra.mxu0 0.0
        %2592 = vmatprep.subr.mxu0 0.0
        %2593 = vmatpush1.msra.mxu0 0.0
        %2594 = vmatprep.subr.mxu0 0.0
        %2595 = vmatpush1.msra.mxu0 0.0
        %2596 = vmatprep.subr.mxu0 0.0
        %2597 = vmatpush1.msra.mxu0 0.0
        %2598 = vmatprep.subr.mxu0 0.0
        %2599 = vmatpush1.msra.mxu0 0.0
        %2600 = vmatprep.subr.mxu0 0.0
        %2601 = vmatpush1.msra.mxu0 0.0
        %2602 = vmatprep.subr.mxu0 0.0
        %2603 = vmatpush1.msra.mxu0 0.0
        %2604 = vmatprep.subr.mxu0 0.0
        %2605 = vmatpush1.msra.mxu0 0.0
        %2606 = vmatprep.subr.mxu0 0.0
        %2607 = vmatpush1.msra.mxu0 0.0
        %2608 = vmatprep.subr.mxu0 0.0
        %2609 = vmatpush1.msra.mxu0 0.0
        %2610 = vmatprep.subr.mxu0 0.0
        %2611 = vmatpush1.msra.mxu0 0.0
        %2612 = vmatprep.subr.mxu0 0.0
        %2613 = vmatpush1.msra.mxu0 %v2412
        %2614 = vmatprep.subr.mxu0 0.0
        %2615 = vmatpush1.msra.mxu0 %v2411
        %2616 = vmatprep.subr.mxu0 0.0
        %2617 = vmatpush1.msra.mxu0 %v2410
        %2618 = vmatprep.subr.mxu0 0.0
        %2619 = vmatpush1.msra.mxu0 %v2409
        %2620 = vmatprep.subr.mxu0 0.0
        %2621 = vmatpush1.msra.mxu0 %v2408
        %2622 = vmatprep.subr.mxu0 0.0
        %2623 = vmatpush2.msra.mxu0 0.0
        %2624 = vmatprep.subr.mxu0 0.0
        %2625 = vmatpush2.msra.mxu0 0.0
        %2626 = vmatprep.subr.mxu0 0.0
        %2627 = vmatpush2.msra.mxu0 0.0
        %2628 = vmatprep.subr.mxu0 0.0
        %2629 = vmatpush2.msra.mxu0 0.0
        %2630 = vmatprep.subr.mxu0 0.0
        %2631 = vmatpush2.msra.mxu0 0.0
        %2632 = vmatprep.subr.mxu0 0.0
        %2633 = vmatpush2.msra.mxu0 0.0
        %2634 = vmatprep.subr.mxu0 0.0
        %2635 = vmatpush2.msra.mxu0 0.0
        %2636 = vmatprep.subr.mxu0 0.0
        %2637 = vmatpush2.msra.mxu0 0.0
        %2638 = vmatprep.subr.mxu0 0.0
        %2639 = vmatpush2.msra.mxu0 0.0
        %2640 = vmatprep.subr.mxu0 0.0
        %2641 = vmatpush2.msra.mxu0 0.0
        %2642 = vmatprep.subr.mxu0 0.0
        %2643 = vmatpush2.msra.mxu0 0.0
        %2644 = vmatprep.subr.mxu0 0.0
        %2645 = vmatpush2.msra.mxu0 0.0
        %2646 = vmatprep.subr.mxu0 0.0
        %2647 = vmatpush2.msra.mxu0 0.0
        %2648 = vmatprep.subr.mxu0 0.0
        %2649 = vmatpush2.msra.mxu0 0.0
        %2650 = vmatprep.subr.mxu0 0.0
        %2651 = vmatpush2.msra.mxu0 0.0
        %2652 = vmatprep.subr.mxu0 0.0
        %2653 = vmatpush2.msra.mxu0 0.0
        %2654 = vmatprep.mubr.f32.mxu0 0.0
        %2655 = vmatmul.mubr.f32.gmra.mxu0 %v2588
        %v2656 = vpop.f32.mrf.mxu0
        %v2657 = vadd.f32 0.0, %v2656
        %v2658 = vpop.f32.mrf.mxu0
        %2659 = vdwg.mxu0
        %v2661 = vsel %vm2586, %v2582, 0
        %2663 = vmatprep.subr.mxu0 0.0
        %2664 = vmatpush1.msra.mxu0 0.0
        %2665 = vmatprep.subr.mxu0 0.0
        %2666 = vmatpush1.msra.mxu0 0.0
        %2667 = vmatprep.subr.mxu0 0.0
        %2668 = vmatpush1.msra.mxu0 0.0
        %2669 = vmatprep.subr.mxu0 0.0
        %2670 = vmatpush1.msra.mxu0 0.0
        %2671 = vmatprep.subr.mxu0 0.0
        %2672 = vmatpush1.msra.mxu0 0.0
        %2673 = vmatprep.subr.mxu0 0.0
        %2674 = vmatpush1.msra.mxu0 0.0
        %2675 = vmatprep.subr.mxu0 0.0
        %2676 = vmatpush1.msra.mxu0 0.0
        %2677 = vmatprep.subr.mxu0 0.0
        %2678 = vmatpush1.msra.mxu0 0.0
        %2679 = vmatprep.subr.mxu0 0.0
        %2680 = vmatpush1.msra.mxu0 0.0
        %2681 = vmatprep.subr.mxu0 0.0
        %2682 = vmatpush1.msra.mxu0 0.0
        %2683 = vmatprep.subr.mxu0 0.0
        %2684 = vmatpush1.msra.mxu0 0.0
        %2685 = vmatprep.subr.mxu0 0.0
        %2686 = vmatpush1.msra.mxu0 %v2407
        %2687 = vmatprep.subr.mxu0 0.0
        %2688 = vmatpush1.msra.mxu0 %v2406
        %2689 = vmatprep.subr.mxu0 0.0
        %2690 = vmatpush1.msra.mxu0 %v2405
        %2691 = vmatprep.subr.mxu0 0.0
        %2692 = vmatpush1.msra.mxu0 %v2404
        %2693 = vmatprep.subr.mxu0 0.0
        %2694 = vmatpush1.msra.mxu0 %v2403
        %2695 = vmatprep.subr.mxu0 0.0
        %2696 = vmatpush2.msra.mxu0 0.0
        %2697 = vmatprep.subr.mxu0 0.0
        %2698 = vmatpush2.msra.mxu0 0.0
        %2699 = vmatprep.subr.mxu0 0.0
        %2700 = vmatpush2.msra.mxu0 0.0
        %2701 = vmatprep.subr.mxu0 0.0
        %2702 = vmatpush2.msra.mxu0 0.0
        %2703 = vmatprep.subr.mxu0 0.0
        %2704 = vmatpush2.msra.mxu0 0.0
        %2705 = vmatprep.subr.mxu0 0.0
        %2706 = vmatpush2.msra.mxu0 0.0
        %2707 = vmatprep.subr.mxu0 0.0
        %2708 = vmatpush2.msra.mxu0 0.0
        %2709 = vmatprep.subr.mxu0 0.0
        %2710 = vmatpush2.msra.mxu0 0.0
        %2711 = vmatprep.subr.mxu0 0.0
        %2712 = vmatpush2.msra.mxu0 0.0
        %2713 = vmatprep.subr.mxu0 0.0
        %2714 = vmatpush2.msra.mxu0 0.0
        %2715 = vmatprep.subr.mxu0 0.0
        %2716 = vmatpush2.msra.mxu0 0.0
        %2717 = vmatprep.subr.mxu0 0.0
        %2718 = vmatpush2.msra.mxu0 0.0
        %2719 = vmatprep.subr.mxu0 0.0
        %2720 = vmatpush2.msra.mxu0 0.0
        %2721 = vmatprep.subr.mxu0 0.0
        %2722 = vmatpush2.msra.mxu0 0.0
        %2723 = vmatprep.subr.mxu0 0.0
        %2724 = vmatpush2.msra.mxu0 0.0
        %2725 = vmatprep.subr.mxu0 0.0
        %2726 = vmatpush2.msra.mxu0 0.0
        %2727 = vmatprep.mubr.f32.mxu0 0.0
        %2728 = vmatmul.mubr.f32.gmra.mxu0 %v2661
        %v2729 = vpop.f32.mrf.mxu0
        %v2730 = vadd.f32 %v2657, %v2729
        %v2731 = vpop.f32.mrf.mxu0
        %2732 = vdwg.mxu0
        %v2733 = vsel %vm1088, %v2730, 0.0
        %v2734 = vrot.slane %v2733, 4
        %v2735 = vadd.f32 %v2733, %v2734
        %v2736 = vrot.slane %v2735, 2
        %v2737 = vadd.f32 %v2735, %v2736
        %v2738 = vrot.slane %v2737, 1
        %v2739 = vadd.f32 %v2737, %v2738
        %v2740 = vmul.f32 %v2739, %v1096
        %v2741 = vsub.f32 %v2730, %v2740
        %v2742 = vmul.f32 %v2741, %v2741
        %v2743 = vsel %vm1088, %v2742, 0.0
        %v2744 = vrot.slane %v2743, 4
        %v2745 = vadd.f32 %v2743, %v2744
        %v2746 = vrot.slane %v2745, 2
        %v2747 = vadd.f32 %v2745, %v2746
        %v2748 = vrot.slane %v2747, 1
        %v2749 = vadd.f32 %v2747, %v2748
        %v2750 = vmul.f32 %v2749, %v1096
        %v2751 = vadd.f32 %v2750, 1e-05
        %v2752 = vrsqrt.pop %v2751
        %v2753 = vmul.f32 %v2741, %v2752
        %v2754 = vmul.f32 %v2753, %v1746
        %v2755 = vadd.f32 %v2754, %v1753
        %2757 = vset.pattern.permute.xlu0 0
        %2758 = vperm.xlu0 %2757, %v2421
        %v2759 = vpop.permute.xlu0 %2758
        %2762 = vset.pattern.permute.xlu0 0
        %2763 = vperm.xlu0 %2762, %v2422
        %v2764 = vpop.permute.xlu0 %2763
        %2767 = vset.pattern.permute.xlu0 0
        %2768 = vperm.xlu0 %2767, %v2423
        %v2769 = vpop.permute.xlu0 %2768
        %2772 = vset.pattern.permute.xlu0 0
        %2773 = vperm.xlu0 %2772, %v2424
        %v2774 = vpop.permute.xlu0 %2773
        %v2777 = vsel %vm1777, %v2417, 0
        %v2780 = vsel %vm1777, %v2418, 0
        %v2783 = vsel %vm1777, %v2419, 0
        %v2786 = vsel %vm1777, %v2420, 0
        %2788 = vmatprep.subr.mxu0 0.0
        %2789 = vmatpush1.msra.mxu0 0.0
        %2790 = vmatprep.subr.mxu0 0.0
        %2791 = vmatpush1.msra.mxu0 0.0
        %2792 = vmatprep.subr.mxu0 0.0
        %2793 = vmatpush1.msra.mxu0 0.0
        %2794 = vmatprep.subr.mxu0 0.0
        %2795 = vmatpush1.msra.mxu0 0.0
        %2796 = vmatprep.subr.mxu0 0.0
        %2797 = vmatpush1.msra.mxu0 0.0
        %2798 = vmatprep.subr.mxu0 0.0
        %2799 = vmatpush1.msra.mxu0 0.0
        %2800 = vmatprep.subr.mxu0 0.0
        %2801 = vmatpush1.msra.mxu0 0.0
        %2802 = vmatprep.subr.mxu0 0.0
        %2803 = vmatpush1.msra.mxu0 0.0
        %2804 = vmatprep.subr.mxu0 0.0
        %2805 = vmatpush1.msra.mxu0 0.0
        %2806 = vmatprep.subr.mxu0 0.0
        %2807 = vmatpush1.msra.mxu0 0.0
        %2808 = vmatprep.subr.mxu0 0.0
        %2809 = vmatpush1.msra.mxu0 0.0
        %2810 = vmatprep.subr.mxu0 0.0
        %2811 = vmatpush1.msra.mxu0 0.0
        %2812 = vmatprep.subr.mxu0 0.0
        %2813 = vmatpush1.msra.mxu0 0.0
        %2814 = vmatprep.subr.mxu0 0.0
        %2815 = vmatpush1.msra.mxu0 0.0
        %2816 = vmatprep.subr.mxu0 0.0
        %2817 = vmatpush1.msra.mxu0 0.0
        %2818 = vmatprep.subr.mxu0 0.0
        %2819 = vmatpush1.msra.mxu0 %v2755
        %2820 = vmatprep.subr.mxu0 0.0
        %2821 = vmatpush2.msra.mxu0 0.0
        %2822 = vmatprep.subr.mxu0 0.0
        %2823 = vmatpush2.msra.mxu0 0.0
        %2824 = vmatprep.subr.mxu0 0.0
        %2825 = vmatpush2.msra.mxu0 0.0
        %2826 = vmatprep.subr.mxu0 0.0
        %2827 = vmatpush2.msra.mxu0 0.0
        %2828 = vmatprep.subr.mxu0 0.0
        %2829 = vmatpush2.msra.mxu0 0.0
        %2830 = vmatprep.subr.mxu0 0.0
        %2831 = vmatpush2.msra.mxu0 0.0
        %2832 = vmatprep.subr.mxu0 0.0
        %2833 = vmatpush2.msra.mxu0 0.0
        %2834 = vmatprep.subr.mxu0 0.0
        %2835 = vmatpush2.msra.mxu0 0.0
        %2836 = vmatprep.subr.mxu0 0.0
        %2837 = vmatpush2.msra.mxu0 0.0
        %2838 = vmatprep.subr.mxu0 0.0
        %2839 = vmatpush2.msra.mxu0 0.0
        %2840 = vmatprep.subr.mxu0 0.0
        %2841 = vmatpush2.msra.mxu0 0.0
        %2842 = vmatprep.subr.mxu0 0.0
        %2843 = vmatpush2.msra.mxu0 0.0
        %2844 = vmatprep.subr.mxu0 0.0
        %2845 = vmatpush2.msra.mxu0 0.0
        %2846 = vmatprep.subr.mxu0 0.0
        %2847 = vmatpush2.msra.mxu0 0.0
        %2848 = vmatprep.subr.mxu0 0.0
        %2849 = vmatpush2.msra.mxu0 0.0
        %2850 = vmatprep.subr.mxu0 0.0
        %2851 = vmatpush2.msra.mxu0 0.0
        %2852 = vmatprep.mubr.f32.mxu0 0.0
        %2853 = vmatmul.mubr.f32.gmra.mxu0 %v2777
        %v2854 = vpop.f32.mrf.mxu0
        %v2855 = vadd.f32 %v2759, %v2854
        %v2856 = vpop.f32.mrf.mxu0
        %2857 = vmatprep.mubr.f32.mxu0 0.0
        %2858 = vmatmul.mubr.f32.gmra.mxu0 %v2780
        %v2859 = vpop.f32.mrf.mxu0
        %v2860 = vadd.f32 %v2764, %v2859
        %v2861 = vpop.f32.mrf.mxu0
        %2862 = vmatprep.mubr.f32.mxu0 0.0
        %2863 = vmatmul.mubr.f32.gmra.mxu0 %v2783
        %v2864 = vpop.f32.mrf.mxu0
        %v2865 = vadd.f32 %v2769, %v2864
        %v2866 = vpop.f32.mrf.mxu0
        %2867 = vmatprep.mubr.f32.mxu0 0.0
        %2868 = vmatmul.mubr.f32.gmra.mxu0 %v2786
        %v2869 = vpop.f32.mrf.mxu0
        %v2870 = vadd.f32 %v2774, %v2869
        %v2871 = vpop.f32.mrf.mxu0
        %2872 = vdwg.mxu0
        %v2873 = vmul.f32 %v2855, 0.5
        %v2874 = vmul.f32 %v2860, 0.5
        %v2875 = vmul.f32 %v2865, 0.5
        %v2876 = vmul.f32 %v2870, 0.5
        %v2877 = vmul.f32 %v2855, 0.70710677
        %v2878 = vmul.f32 %v2860, 0.70710677
        %v2879 = vmul.f32 %v2865, 0.70710677
        %v2880 = vmul.f32 %v2870, 0.70710677
        %v2881 = vand.u32 2147483647, %v2877
        %v2882 = vand.u32 2147483647, %v2878
        %v2883 = vand.u32 2147483647, %v2879
        %v2884 = vand.u32 2147483647, %v2880
        %v2885 = vmul.f32 %v2881, 0.3275911
        %v2886 = vmul.f32 %v2882, 0.3275911
        %v2887 = vmul.f32 %v2883, 0.3275911
        %v2888 = vmul.f32 %v2884, 0.3275911
        %v2889 = vadd.f32 %v2885, 1.0
        %v2890 = vadd.f32 %v2886, 1.0
        %v2891 = vadd.f32 %v2887, 1.0
        %v2892 = vadd.f32 %v2888, 1.0
        %v2893 = vrcp.pop %v2889
        %v2894 = vmul.f32 1.0, %v2893
        %v2895 = vrcp.pop %v2890
        %v2896 = vmul.f32 1.0, %v2895
        %v2897 = vrcp.pop %v2891
        %v2898 = vmul.f32 1.0, %v2897
        %v2899 = vrcp.pop %v2892
        %v2900 = vmul.f32 1.0, %v2899
        %v2901 = vmul.f32 %v2894, 1.0614054
        %v2902 = vmul.f32 %v2896, 1.0614054
        %v2903 = vmul.f32 %v2898, 1.0614054
        %v2904 = vmul.f32 %v2900, 1.0614054
        %v2905 = vadd.f32 %v2901, -1.4531521
        %v2906 = vadd.f32 %v2902, -1.4531521
        %v2907 = vadd.f32 %v2903, -1.4531521
        %v2908 = vadd.f32 %v2904, -1.4531521
        %v2909 = vmul.f32 %v2905, %v2894
        %v2910 = vmul.f32 %v2906, %v2896
        %v2911 = vmul.f32 %v2907, %v2898
        %v2912 = vmul.f32 %v2908, %v2900
        %v2913 = vadd.f32 %v2909, 1.4214138
        %v2914 = vadd.f32 %v2910, 1.4214138
        %v2915 = vadd.f32 %v2911, 1.4214138
        %v2916 = vadd.f32 %v2912, 1.4214138
        %v2917 = vmul.f32 %v2913, %v2894
        %v2918 = vmul.f32 %v2914, %v2896
        %v2919 = vmul.f32 %v2915, %v2898
        %v2920 = vmul.f32 %v2916, %v2900
        %v2921 = vadd.f32 %v2917, -0.28449672
        %v2922 = vadd.f32 %v2918, -0.28449672
        %v2923 = vadd.f32 %v2919, -0.28449672
        %v2924 = vadd.f32 %v2920, -0.28449672
        %v2925 = vmul.f32 %v2921, %v2894
        %v2926 = vmul.f32 %v2922, %v2896
        %v2927 = vmul.f32 %v2923, %v2898
        %v2928 = vmul.f32 %v2924, %v2900
        %v2929 = vadd.f32 %v2925, 0.2548296
        %v2930 = vadd.f32 %v2926, 0.2548296
        %v2931 = vadd.f32 %v2927, 0.2548296
        %v2932 = vadd.f32 %v2928, 0.2548296
        %v2933 = vmul.f32 %v2929, %v2894
        %v2934 = vmul.f32 %v2930, %v2896
        %v2935 = vmul.f32 %v2931, %v2898
        %v2936 = vmul.f32 %v2932, %v2900
        %v2937 = vsub.f32 0.0, %v2881
        %v2938 = vsub.f32 0.0, %v2882
        %v2939 = vsub.f32 0.0, %v2883
        %v2940 = vsub.f32 0.0, %v2884
        %v2941 = vmul.f32 %v2937, %v2881
        %v2942 = vmul.f32 %v2938, %v2882
        %v2943 = vmul.f32 %v2939, %v2883
        %v2944 = vmul.f32 %v2940, %v2884
        %v2945 = vmul.f32 %v2941, 1.442695
        %v2946 = vpow.pop %v2945
        %v2947 = vmul.f32 %v2942, 1.442695
        %v2948 = vpow.pop %v2947
        %v2949 = vmul.f32 %v2943, 1.442695
        %v2950 = vpow.pop %v2949
        %v2951 = vmul.f32 %v2944, 1.442695
        %v2952 = vpow.pop %v2951
        %v2953 = vmul.f32 %v2933, %v2946
        %v2954 = vmul.f32 %v2934, %v2948
        %v2955 = vmul.f32 %v2935, %v2950
        %v2956 = vmul.f32 %v2936, %v2952
        %v2957 = vsub.f32 1.0, %v2953
        %v2958 = vsub.f32 1.0, %v2954
        %v2959 = vsub.f32 1.0, %v2955
        %v2960 = vsub.f32 1.0, %v2956
        %vm2961 = vcmp.ge.f32.partialorder %v2877, 0.0
        %vm2962 = vcmp.ge.f32.partialorder %v2878, 0.0
        %vm2963 = vcmp.ge.f32.partialorder %v2879, 0.0
        %vm2964 = vcmp.ge.f32.partialorder %v2880, 0.0
        %v2965 = vsub.f32 0.0, %v2957
        %v2966 = vsub.f32 0.0, %v2958
        %v2967 = vsub.f32 0.0, %v2959
        %v2968 = vsub.f32 0.0, %v2960
        %v2969 = vsel %vm2961, %v2957, %v2965
        %v2970 = vsel %vm2962, %v2958, %v2966
        %v2971 = vsel %vm2963, %v2959, %v2967
        %v2972 = vsel %vm2964, %v2960, %v2968
        %v2973 = vadd.f32 %v2969, 1.0
        %v2974 = vadd.f32 %v2970, 1.0
        %v2975 = vadd.f32 %v2971, 1.0
        %v2976 = vadd.f32 %v2972, 1.0
        %v2977 = vmul.f32 %v2873, %v2973
        %v2978 = vmul.f32 %v2874, %v2974
        %v2979 = vmul.f32 %v2875, %v2975
        %v2980 = vmul.f32 %v2876, %v2976
        %2982 = vset.pattern.permute.xlu0 0
        %2983 = vperm.xlu0 %2982, %v2426
        %v2984 = vpop.permute.xlu0 %2983
        %v2987 = vsel %vm2100, %v2425, 0
        %2989 = vmatprep.subr.mxu0 0.0
        %2990 = vmatpush1.msra.mxu0 0.0
        %2991 = vmatprep.subr.mxu0 0.0
        %2992 = vmatpush1.msra.mxu0 0.0
        %2993 = vmatprep.subr.mxu0 0.0
        %2994 = vmatpush1.msra.mxu0 0.0
        %2995 = vmatprep.subr.mxu0 0.0
        %2996 = vmatpush1.msra.mxu0 0.0
        %2997 = vmatprep.subr.mxu0 0.0
        %2998 = vmatpush1.msra.mxu0 0.0
        %2999 = vmatprep.subr.mxu0 0.0
        %3000 = vmatpush1.msra.mxu0 0.0
        %3001 = vmatprep.subr.mxu0 0.0
        %3002 = vmatpush1.msra.mxu0 0.0
        %3003 = vmatprep.subr.mxu0 0.0
        %3004 = vmatpush1.msra.mxu0 0.0
        %3005 = vmatprep.subr.mxu0 0.0
        %3006 = vmatpush1.msra.mxu0 0.0
        %3007 = vmatprep.subr.mxu0 0.0
        %3008 = vmatpush1.msra.mxu0 0.0
        %3009 = vmatprep.subr.mxu0 0.0
        %3010 = vmatpush1.msra.mxu0 0.0
        %3011 = vmatprep.subr.mxu0 0.0
        %3012 = vmatpush1.msra.mxu0 0.0
        %3013 = vmatprep.subr.mxu0 0.0
        %3014 = vmatpush1.msra.mxu0 %v2980
        %3015 = vmatprep.subr.mxu0 0.0
        %3016 = vmatpush1.msra.mxu0 %v2979
        %3017 = vmatprep.subr.mxu0 0.0
        %3018 = vmatpush1.msra.mxu0 %v2978
        %3019 = vmatprep.subr.mxu0 0.0
        %3020 = vmatpush1.msra.mxu0 %v2977
        %3021 = vmatprep.subr.mxu0 0.0
        %3022 = vmatpush2.msra.mxu0 0.0
        %3023 = vmatprep.subr.mxu0 0.0
        %3024 = vmatpush2.msra.mxu0 0.0
        %3025 = vmatprep.subr.mxu0 0.0
        %3026 = vmatpush2.msra.mxu0 0.0
        %3027 = vmatprep.subr.mxu0 0.0
        %3028 = vmatpush2.msra.mxu0 0.0
        %3029 = vmatprep.subr.mxu0 0.0
        %3030 = vmatpush2.msra.mxu0 0.0
        %3031 = vmatprep.subr.mxu0 0.0
        %3032 = vmatpush2.msra.mxu0 0.0
        %3033 = vmatprep.subr.mxu0 0.0
        %3034 = vmatpush2.msra.mxu0 0.0
        %3035 = vmatprep.subr.mxu0 0.0
        %3036 = vmatpush2.msra.mxu0 0.0
        %3037 = vmatprep.subr.mxu0 0.0
        %3038 = vmatpush2.msra.mxu0 0.0
        %3039 = vmatprep.subr.mxu0 0.0
        %3040 = vmatpush2.msra.mxu0 0.0
        %3041 = vmatprep.subr.mxu0 0.0
        %3042 = vmatpush2.msra.mxu0 0.0
        %3043 = vmatprep.subr.mxu0 0.0
        %3044 = vmatpush2.msra.mxu0 0.0
        %3045 = vmatprep.subr.mxu0 0.0
        %3046 = vmatpush2.msra.mxu0 0.0
        %3047 = vmatprep.subr.mxu0 0.0
        %3048 = vmatpush2.msra.mxu0 0.0
        %3049 = vmatprep.subr.mxu0 0.0
        %3050 = vmatpush2.msra.mxu0 0.0
        %3051 = vmatprep.subr.mxu0 0.0
        %3052 = vmatpush2.msra.mxu0 0.0
        %3053 = vmatprep.mubr.f32.mxu0 0.0
        %3054 = vmatmul.mubr.f32.gmra.mxu0 %v2987
        %v3055 = vpop.f32.mrf.mxu0
        %v3056 = vadd.f32 %v2984, %v3055
        %v3057 = vpop.f32.mrf.mxu0
        %3058 = vdwg.mxu0
        %vm3059 = vcmask 1048064
        %3060 = vrot.lane.b32.xlu0 %v1150, 64
        %v3061 = vpop.permute.xlu0 %3060
        %v3062 = vsel %vm3059, %v3061, %v1150
        %3063 = vrot.lane.b32.xlu0 %v3062, 64
        %v3064 = vpop.permute.xlu0 %3063
        %v3065 = vsel %vm3059, %v3064, %v1150
        %3067 = vrot.lane.b32.xlu0 %v3065, 127
        %v3068 = vpop.permute.xlu0 %3067
        %3070 = vrot.lane.b32.xlu0 %v3065, 126
        %v3071 = vpop.permute.xlu0 %3070
        %3073 = vrot.lane.b32.xlu0 %v3065, 120
        %v3074 = vpop.permute.xlu0 %3073
        %3076 = vrot.lane.b32.xlu0 %v1150, 55
        %v3077 = vpop.permute.xlu0 %3076
        %3079 = vrot.lane.b32.xlu0 %v3065, 54
        %v3080 = vpop.permute.xlu0 %3079
        %3082 = vrot.lane.b32.xlu0 %v3065, 48
        %v3083 = vpop.permute.xlu0 %3082
        %3085 = vrot.lane.b32.xlu0 %v3065, 47
        %v3086 = vpop.permute.xlu0 %3085
        %3088 = vrot.lane.b32.xlu0 %v3065, 46
        %v3089 = vpop.permute.xlu0 %3088
        %3100 = vrot.lane.b32.xlu0 %v2429, 55
        %v3101 = vpop.permute.xlu0 %3100
        %3102 = vrot.lane.b32.xlu0 %v2430, 55
        %v3103 = vpop.permute.xlu0 %3102
        %3104 = vrot.lane.b32.xlu0 %v2431, 55
        %v3105 = vpop.permute.xlu0 %3104
        %3106 = vrot.lane.b32.xlu0 %v2432, 55
        %v3107 = vpop.permute.xlu0 %3106
        %3108 = vrot.lane.b32.xlu0 %v2433, 55
        %v3109 = vpop.permute.xlu0 %3108
        %3110 = vrot.lane.b32.xlu0 %v2434, 55
        %v3111 = vpop.permute.xlu0 %3110
        %3112 = vrot.lane.b32.xlu0 %v2435, 55
        %v3113 = vpop.permute.xlu0 %3112
        %3114 = vrot.lane.b32.xlu0 %v2436, 55
        %v3115 = vpop.permute.xlu0 %3114
        %3116 = vrot.lane.b32.xlu0 %v2437, 55
        %v3117 = vpop.permute.xlu0 %3116
        %v3127 = vmul.f32 %v3065, %v3101
        %v3128 = vmul.f32 %v3068, %v3103
        %v3129 = vmul.f32 %v3071, %v3105
        %v3130 = vmul.f32 %v3074, %v3107
        %v3131 = vmul.f32 %v3077, %v3109
        %v3132 = vmul.f32 %v3080, %v3111
        %v3133 = vmul.f32 %v3083, %v3113
        %v3134 = vmul.f32 %v3086, %v3115
        %v3135 = vmul.f32 %v3089, %v3117
        %3137 = vset.pattern.permute.xlu0 0
        %3138 = vperm.xlu0 %3137, %v2428
        %v3139 = vpop.permute.xlu0 %3138
        %3150 = vrot.lane.b32.xlu0 %v3127, 73
        %v3151 = vpop.permute.xlu0 %3150
        %3152 = vrot.lane.b32.xlu0 %v3128, 73
        %v3153 = vpop.permute.xlu0 %3152
        %3154 = vrot.lane.b32.xlu0 %v3129, 73
        %v3155 = vpop.permute.xlu0 %3154
        %3156 = vrot.lane.b32.xlu0 %v3130, 73
        %v3157 = vpop.permute.xlu0 %3156
        %3158 = vrot.lane.b32.xlu0 %v3131, 73
        %v3159 = vpop.permute.xlu0 %3158
        %3160 = vrot.lane.b32.xlu0 %v3132, 73
        %v3161 = vpop.permute.xlu0 %3160
        %3162 = vrot.lane.b32.xlu0 %v3133, 73
        %v3163 = vpop.permute.xlu0 %3162
        %3164 = vrot.lane.b32.xlu0 %v3134, 73
        %v3165 = vpop.permute.xlu0 %3164
        %3166 = vrot.lane.b32.xlu0 %v3135, 73
        %v3167 = vpop.permute.xlu0 %3166
        %v3178 = vsel %vm2256, %v2427, 0
        %3180 = vmatprep.subr.mxu0 0.0
        %3181 = vmatpush1.msra.mxu0 0.0
        %3182 = vmatprep.subr.mxu0 0.0
        %3183 = vmatpush1.msra.mxu0 0.0
        %3184 = vmatprep.subr.mxu0 0.0
        %3185 = vmatpush1.msra.mxu0 0.0
        %3186 = vmatprep.subr.mxu0 0.0
        %3187 = vmatpush1.msra.mxu0 0.0
        %3188 = vmatprep.subr.mxu0 0.0
        %3189 = vmatpush1.msra.mxu0 0.0
        %3190 = vmatprep.subr.mxu0 0.0
        %3191 = vmatpush1.msra.mxu0 0.0
        %3192 = vmatprep.subr.mxu0 0.0
        %3193 = vmatpush1.msra.mxu0 0.0
        %3194 = vmatprep.subr.mxu0 0.0
        %3195 = vmatpush1.msra.mxu0 %v3167
        %3196 = vmatprep.subr.mxu0 0.0
        %3197 = vmatpush1.msra.mxu0 %v3165
        %3198 = vmatprep.subr.mxu0 0.0
        %3199 = vmatpush1.msra.mxu0 %v3163
        %3200 = vmatprep.subr.mxu0 0.0
        %3201 = vmatpush1.msra.mxu0 %v3161
        %3202 = vmatprep.subr.mxu0 0.0
        %3203 = vmatpush1.msra.mxu0 %v3159
        %3204 = vmatprep.subr.mxu0 0.0
        %3205 = vmatpush1.msra.mxu0 %v3157
        %3206 = vmatprep.subr.mxu0 0.0
        %3207 = vmatpush1.msra.mxu0 %v3155
        %3208 = vmatprep.subr.mxu0 0.0
        %3209 = vmatpush1.msra.mxu0 %v3153
        %3210 = vmatprep.subr.mxu0 0.0
        %3211 = vmatpush1.msra.mxu0 %v3151
        %3212 = vmatprep.subr.mxu0 0.0
        %3213 = vmatpush2.msra.mxu0 0.0
        %3214 = vmatprep.subr.mxu0 0.0
        %3215 = vmatpush2.msra.mxu0 0.0
        %3216 = vmatprep.subr.mxu0 0.0
        %3217 = vmatpush2.msra.mxu0 0.0
        %3218 = vmatprep.subr.mxu0 0.0
        %3219 = vmatpush2.msra.mxu0 0.0
        %3220 = vmatprep.subr.mxu0 0.0
        %3221 = vmatpush2.msra.mxu0 0.0
        %3222 = vmatprep.subr.mxu0 0.0
        %3223 = vmatpush2.msra.mxu0 0.0
        %3224 = vmatprep.subr.mxu0 0.0
        %3225 = vmatpush2.msra.mxu0 0.0
        %3226 = vmatprep.subr.mxu0 0.0
        %3227 = vmatpush2.msra.mxu0 0.0
        %3228 = vmatprep.subr.mxu0 0.0
        %3229 = vmatpush2.msra.mxu0 0.0
        %3230 = vmatprep.subr.mxu0 0.0
        %3231 = vmatpush2.msra.mxu0 0.0
        %3232 = vmatprep.subr.mxu0 0.0
        %3233 = vmatpush2.msra.mxu0 0.0
        %3234 = vmatprep.subr.mxu0 0.0
        %3235 = vmatpush2.msra.mxu0 0.0
        %3236 = vmatprep.subr.mxu0 0.0
        %3237 = vmatpush2.msra.mxu0 0.0
        %3238 = vmatprep.subr.mxu0 0.0
        %3239 = vmatpush2.msra.mxu0 0.0
        %3240 = vmatprep.subr.mxu0 0.0
        %3241 = vmatpush2.msra.mxu0 0.0
        %3242 = vmatprep.subr.mxu0 0.0
        %3243 = vmatpush2.msra.mxu0 0.0
        %3244 = vmatprep.mubr.f32.mxu0 0.0
        %3245 = vmatmul.mubr.f32.gmra.mxu0 %v3178
        %v3246 = vpop.f32.mrf.mxu0
        %v3247 = vadd.f32 %v3139, %v3246
        %v3248 = vpop.f32.mrf.mxu0
        %3249 = vdwg.mxu0
        %v3250 = vadd.f32 %v3247, %v3056
        %v3251 = vsel %vm1088, %v3250, 0.0
        %v3252 = vrot.slane %v3251, 4
        %v3253 = vadd.f32 %v3251, %v3252
        %v3254 = vrot.slane %v3253, 2
        %v3255 = vadd.f32 %v3253, %v3254
        %v3256 = vrot.slane %v3255, 1
        %v3257 = vadd.f32 %v3255, %v3256
        %v3258 = vmul.f32 %v3257, %v1096
        %v3259 = vsub.f32 %v3250, %v3258
        %v3260 = vmul.f32 %v3259, %v3259
        %v3261 = vsel %vm1088, %v3260, 0.0
        %v3262 = vrot.slane %v3261, 4
        %v3263 = vadd.f32 %v3261, %v3262
        %v3264 = vrot.slane %v3263, 2
        %v3265 = vadd.f32 %v3263, %v3264
        %v3266 = vrot.slane %v3265, 1
        %v3267 = vadd.f32 %v3265, %v3266
        %v3268 = vmul.f32 %v3267, %v1096
        %v3269 = vadd.f32 %v3268, 1e-05
        %v3270 = vrsqrt.pop %v3269
        %v3271 = vmul.f32 %v3259, %v3270
        %3273 = vset.pattern.permute.xlu0 0
        %3274 = vperm.xlu0 %3273, %v2415
        %v3275 = vpop.permute.xlu0 %3274
        %v3277 = vmul.f32 %v3271, %v3275
        %3279 = vset.pattern.permute.xlu0 0
        %3280 = vperm.xlu0 %3279, %v2416
        %v3281 = vpop.permute.xlu0 %3280
        %v3283 = vadd.f32 %v3277, %v3281
        %v3284 = vmax.f32 %v3283, 0.0
        %3287 = vrot.lane.b32.xlu0 %v2385, 64
        %v3288 = vpop.permute.xlu0 %3287
        %3289 = vrot.lane.b32.xlu0 %v2386, 64
        %v3290 = vpop.permute.xlu0 %3289
        %v3291 = vsel %vm1088, %v3288, %v3290
        %v3295 = vsel %vm1088, %v3284, %v3288
        %3296 = vst [vmem:[%s1063] sm:$0xff] %v3295
        %3297 = vst [vmem:[%s1063 + $0x8] sm:$0xff] %v3291
        %3298 = vst.msk [vmem:[%s1063 + $0x10] sm:$0xff] %vm1088, %v3290
        %s3299 = sand.u32 %s833, 1
        %s3300 = scalar_lea.sflag [#allocation3], %s3299
        %s3301 = sand.u32 %s833, 1
        %s3302 = smul.addr %s3301, 24
        %s3303 = scalar_lea.vmem [#allocation2], %s3302
        // Predicated region
        $region161: #{tpu_custom_call.1} parent=159 // pred_check
          %p3304 = pneg %p843
        $region162: #{tpu_custom_call.1} parent=159 // pred_check_branch
          %3306 = sbr.rel (%p3304) target = $region164
        $region163: #{tpu_custom_call.1} parent=159 // pred_region
          %s3308 = ssub.s32 384, 384
          %3309 = vsyncadd %s3300, %s3308
          %s3310 = smul.addr %s85, 3
          %s3311 = smul.addr %s3310, 128
          %s3312 = scalar_lea.hbm %s71, %s3311
          %s3314 = sshll.u32 %s3303, 4
          %s3315 = int_to_ptr.vmem [resolvable:$true] %s3314
          %3317 = dma.vmem_to_hbm [thread:$0]  %s3315, 384, %s3312, %s3300
        $region164: #{tpu_custom_call.1} parent=159 // pred_fallthru
          _
      $region160: #{tpu_custom_call.1} parent=5 // pred_fallthru
        _
      %p3318 = scmp.le.s32.totalorder 2, %s80
      // Predicated region
      $region165: #{tpu_custom_call.1} parent=5 // pred_check
        %p3319 = pneg %p3318
      $region166: #{tpu_custom_call.1} parent=5 // pred_check_branch
        %3321 = sbr.rel (%p3319) target = $region168
      $region167: #{tpu_custom_call.1} parent=5 // pred_region
        %s3322 = ssub.s32 %s80, 2
        // Predicated region
        $region169: #{tpu_custom_call.1} parent=167 // pred_check
          %p3323 = pneg %p849
        $region170: #{tpu_custom_call.1} parent=167 // pred_check_branch
          %3325 = sbr.rel (%p3323) target = $region172
        $region171: #{tpu_custom_call.1} parent=167 // pred_region
          %s3326 = sand.u32 %s834, 1
          %s3327 = scalar_lea.sflag [#allocation3], %s3326
          %s3328 = sand.u32 %s834, 1
          %s3329 = smul.addr %s3328, 24
          %s3330 = scalar_lea.vmem [#allocation2], %s3329
          %3331 = dma.done %s3327, 384
        $region172: #{tpu_custom_call.1} parent=167 // pred_fallthru
          _
      $region168: #{tpu_custom_call.1} parent=5 // pred_fallthru
        _
    $region6: #{tpu_custom_call.1} parent=1 // loop_footer
      %s84 = sadd.s32 1, %s80
    $region7: #{tpu_custom_call.1} parent=1 // loop_footer_branch
      %79 = sbr.rel target = $region3
    $region8: #{tpu_custom_call.1} parent=1 // loop_exit
      _
    %3332 = vsyncpa [#allocation3], 1
    %s3333 = scalar_lea.sflag [#allocation3], 1
    %3334 = vsyncpa %s3333, 1

</llo_original>
